<compile_context>
chip_gen: v7x
topology: tpu7x:2x2x1
jax: 0.10.0
libtpu: 0.0.40
codegen_flags: <defaults>
</compile_context>

<pallas_src>
import functools

import jax
import jax.numpy as jnp
from jax import lax
from jax.experimental import pallas as pl
from jax.experimental.pallas import tpu as pltpu

BN_EPS = 1e-5
LANE = 128


def _round_up(v, m):
    return (v + m - 1) // m * m


# --------------------------- fused Pallas kernel ---------------------------
def fused_encoder_kernel(adj_ref, x_ref, eps_ref,
                         w1_ref, g1_ref, be1_ref,
                         w2_ref, g2_ref, be2_ref,
                         pool_ref,
                         node_out_ref, graph_out_ref,
                         h_ref,
                         *, n_valid):
    l = pl.program_id(0)

    # Layer 0: seed the carried node features from the (padded) input.
    @pl.when(l == 0)
    def _():
        h_ref[...] = x_ref[...]

    x = h_ref[...]                                   # (Np, Hp) f32, carried in VMEM
    np_rows = x.shape[0]
    inv_n = jnp.float32(1.0 / n_valid)
    # valid-row mask so BN statistics ignore the zero-padded node rows
    valid = (lax.broadcasted_iota(jnp.int32, (np_rows, 1), 0)
             < n_valid).astype(jnp.float32)

    # GINLayer aggregation: (1 + eps_l) * x + A @ x
    #   adj stays bf16 (exact 0/1); x is cast to bf16 -> native single-pass MXU,
    #   f32 accumulation.
    eps = eps_ref[l]                                 # scalar read from SMEM
    agg = (1.0 + eps) * x + jnp.dot(adj_ref[...], x.astype(jnp.bfloat16),
                                    preferred_element_type=jnp.float32)

    def bn_relu(h, gamma, beta):
        # Masked two-pass batch stats on VPU/XLU (keeps the MXU free for the
        # big dots), then a single fused scale/shift pass.
        mean = jnp.sum(h * valid, axis=0, keepdims=True) * inv_n
        d = h - mean
        var = jnp.sum((d * d) * valid, axis=0, keepdims=True) * inv_n
        scale = gamma * lax.rsqrt(var + BN_EPS)      # rsqrt -> EUP (free slot)
        return jnp.maximum(d * scale + beta, 0.0)

    # MLP: Linear -> BatchNorm -> ReLU -> Linear
    # (the Linear biases are dropped: they cancel exactly inside training-mode BN)
    h1 = bn_relu(jnp.dot(agg, w1_ref[0], preferred_element_type=jnp.float32),
                 g1_ref[0], be1_ref[0])
    h2 = jnp.dot(h1, w2_ref[0], preferred_element_type=jnp.float32)

    # outer BatchNorm1d + ReLU
    h = bn_relu(h2, g2_ref[0], be2_ref[0])

    h_ref[...] = h                                   # carry to next layer
    node_out_ref[...] = h                            # lane-dense 128-wide store
    # batch_sum_pooling == one-hot(Gp, Np) @ h ; pool stays bf16 (exact 0/1)
    graph_out_ref[...] = jnp.dot(pool_ref[...], h.astype(jnp.bfloat16),
                                 preferred_element_type=jnp.float32)


# ------------------------------- wrapper -----------------------------------
def encoder_forward(adj, x, batch, all_params, num_graphs, single_buffer=True):
    """Pallas-backed Encoder forward (all GIN layers fused). Returns
    (graph_rep, node_rep), matching the PyTorch module."""
    N, f_in = x.shape
    L = len(all_params)
    H = all_params[0][5].shape[1]                    # w2 is (H, H)

    width = max(f_in, H)
    lane_mult = 256 if width > 128 else LANE         # 256x256 MXU on v6e/v7x
    Hp = _round_up(width, lane_mult)                 # lane-dense hidden width
    Np = _round_up(N, LANE)                          # lane/contraction-aligned nodes
    Gp = _round_up(max(num_graphs, 16), 16)          # bf16 sublane tile is (16,128)

    # 0/1 adjacency & pooling matrices: bf16 is lossless and halves their DMA.
    adj_p = jnp.zeros((Np, Np), jnp.bfloat16).at[:N, :N].set(adj.astype(jnp.bfloat16))
    pool = jnp.zeros((Gp, Np), jnp.bfloat16).at[:, :N].set(
        (jnp.arange(Gp)[:, None] == batch[None, :]).astype(jnp.bfloat16))

    x_pad = jnp.zeros((Np, Hp), jnp.float32).at[:N, :f_in].set(x.astype(jnp.float32))

    def pad_mat(w):                                  # (r, c) -> (Hp, Hp), zero-padded
        r, c = w.shape
        return jnp.zeros((Hp, Hp), jnp.float32).at[:r, :c].set(w)

    def pad_row(v):                                  # (1, c) -> (1, Hp), zero-padded
        return jnp.zeros((1, Hp), jnp.float32).at[:, :v.shape[1]].set(v)

    # Stack per-layer parameters: (L, ...) so one pallas_call covers all layers.
    # Pre-BN biases (p[2], p[6]) are intentionally NOT passed: BN cancels them.
    eps_arr = jnp.stack([p[0].reshape(()) for p in all_params]).astype(jnp.float32)
    w1s = jnp.stack([pad_mat(p[1]) for p in all_params])
    g1s = jnp.stack([pad_row(p[3]) for p in all_params])    # padded gamma = 0
    be1s = jnp.stack([pad_row(p[4]) for p in all_params])
    w2s = jnp.stack([pad_mat(p[5]) for p in all_params])
    g2s = jnp.stack([pad_row(p[7]) for p in all_params])
    be2s = jnp.stack([pad_row(p[8]) for p in all_params])

    def const2d(shape):
        # Constant block index across the layer grid -> one DMA; single-buffer
        # (the second pipeline buffer would be pure VMEM waste).
        if single_buffer:
            return pl.BlockSpec(shape, lambda l: (0, 0),
                                pipeline_mode=pl.Buffered(1))
        return pl.BlockSpec(shape, lambda l: (0, 0))

    def per_layer(shape):
        return pl.BlockSpec((1,) + shape, lambda l: (l, 0, 0))

    # Explicit scoped-VMEM budget (defaults: 16 MiB v5e / 32 MiB v6e,v7x).
    vmem_bytes = (
        2 * Np * Np                               # adj (bf16)
        + 2 * Gp * Np                             # pool (bf16)
        + 4 * Np * Hp                             # x (f32)
        + 4 * Np * Hp                             # carried-h scratch
        + 2 * 4 * (Np + Gp) * Hp                  # double-buffered output blocks
        + 2 * (2 * 4 * Hp * Hp + 4 * 4 * Hp)      # double-buffered per-layer params
        + 5 * 4 * Np * Hp                         # live temporaries headroom
    )
    if not single_buffer:
        vmem_bytes += 2 * Np * Np + 2 * Gp * Np + 4 * Np * Hp
    vmem_limit = min(max(vmem_bytes + (8 << 20), 32 << 20), 64 << 20)

    cost = pl.CostEstimate(
        flops=L * (2 * Np * Np * Hp + 4 * Np * Hp * Hp + 2 * Gp * Np * Hp
                   + 10 * Np * Hp),
        transcendentals=L * 2 * Hp,
        bytes_accessed=(2 * Np * Np + 2 * Gp * Np + 4 * Np * Hp
                        + L * (2 * 4 * Hp * Hp + 4 * 4 * Hp)
                        + 4 * Np * L * Hp + 4 * Gp * L * Hp),
    )

    kernel = functools.partial(fused_encoder_kernel, n_valid=N)

    node_pad, graph_pad = pl.pallas_call(
        kernel,
        grid=(L,),
        in_specs=[
            const2d((Np, Np)),                                   # adj (bf16)
            const2d((Np, Hp)),                                   # x (padded f32)
            pl.BlockSpec(memory_space=pltpu.MemorySpace.SMEM),   # eps (L,) scalars
            per_layer((Hp, Hp)),                                 # w1
            per_layer((1, Hp)),                                  # gamma1
            per_layer((1, Hp)),                                  # beta1
            per_layer((Hp, Hp)),                                 # w2
            per_layer((1, Hp)),                                  # gamma2 (outer BN)
            per_layer((1, Hp)),                                  # beta2  (outer BN)
            const2d((Gp, Np)),                                   # pool (bf16)
        ],
        out_specs=[
            pl.BlockSpec((Np, Hp), lambda l: (0, l)),            # node slab
            pl.BlockSpec((Gp, Hp), lambda l: (0, l)),            # graph slab
        ],
        out_shape=(
            jax.ShapeDtypeStruct((Np, L * Hp), jnp.float32),
            jax.ShapeDtypeStruct((Gp, L * Hp), jnp.float32),
        ),
        scratch_shapes=[pltpu.VMEM((Np, Hp), jnp.float32)],      # carried h
        compiler_params=pltpu.CompilerParams(
            dimension_semantics=("arbitrary",),                  # layers are sequential
            vmem_limit_bytes=int(vmem_limit),
        ),
        cost_estimate=cost,
    )(adj_p, x_pad, eps_arr, w1s, g1s, be1s, w2s, g2s, be2s, pool)

    # Strip padding and assemble the concatenated representations.
    if Hp == H:
        node_rep = node_pad[:N, :L * Hp]
        graph_rep = graph_pad[:num_graphs, :L * Hp]
    else:
        node_rep = jnp.concatenate(
            [node_pad[:N, l * Hp:l * Hp + H] for l in range(L)], axis=1)
        graph_rep = jnp.concatenate(
            [graph_pad[:num_graphs, l * Hp:l * Hp + H] for l in range(L)], axis=1)
    return graph_rep, node_rep


# ---------------- pure-JAX reference (same math, no Pallas) ----------------
def _bn_train_ref(h, gamma, beta):
    mean = jnp.mean(h, axis=0, keepdims=True)
    var = jnp.mean((h - mean) ** 2, axis=0, keepdims=True)
    return gamma * (h - mean) * lax.rsqrt(var + BN_EPS) + beta


def encoder_forward_ref(adj, x, batch, all_params, num_graphs):
    pool = (jnp.arange(num_graphs)[:, None] == batch[None, :]).astype(jnp.float32)
    layer_rep, pooled_rep = [], []
    h = x
    for (eps, w1, b1, g1, be1, w2, b2, g2, be2) in all_params:
        agg = (1.0 + eps[0, 0]) * h + adj @ h
        t = jnp.maximum(_bn_train_ref(agg @ w1 + b1, g1, be1), 0.0)
        t = t @ w2 + b2
        h = jnp.maximum(_bn_train_ref(t, g2, be2), 0.0)
        layer_rep.append(h)
        pooled_rep.append(pool @ h)
    return jnp.concatenate(pooled_rep, axis=1), jnp.concatenate(layer_rep, axis=1)


def init_layer_params(key, fin, hidden):
    k0, k1, k2, k3 = jax.random.split(key, 4)
    w1 = (jax.random.normal(k0, (fin, hidden)) * 0.1).astype(jnp.float32)
    b1 = (jax.random.normal(k1, (1, hidden)) * 0.01).astype(jnp.float32)
    w2 = (jax.random.normal(k2, (hidden, hidden)) * 0.1).astype(jnp.float32)
    b2 = (jax.random.normal(k3, (1, hidden)) * 0.01).astype(jnp.float32)
    g1 = jnp.ones((1, hidden), jnp.float32)
    be1 = jnp.zeros((1, hidden), jnp.float32)
    g2 = jnp.ones((1, hidden), jnp.float32)
    be2 = jnp.zeros((1, hidden), jnp.float32)
    eps = jnp.zeros((1, 1), jnp.float32)  # GINLayer eps init = 0 (train_eps=True)
    return (eps, w1, b1, g1, be1, w2, b2, g2, be2)


if __name__ == "__main__":
    N, IN_FEATS, HIDDEN, NUM_GRAPHS, NUM_LAYERS = 16, 8, 32, 2, 3

    key = jax.random.PRNGKey(0)
    k_adj, k_x, k_p = jax.random.split(key, 3)

    # random undirected graph, no self loops, unit edge weights
    a = (jax.random.uniform(k_adj, (N, N)) < 0.3).astype(jnp.float32)
    adj = jnp.maximum(a, a.T) * (1.0 - jnp.eye(N, dtype=jnp.float32))

    # node features (module also supports x=None -> ones(N,1); we pass features)
    x = jax.random.normal(k_x, (N, IN_FEATS), dtype=jnp.float32)

    # graph assignment: first half graph 0, second half graph 1
    batch = jnp.concatenate([jnp.zeros(N // 2, jnp.int32), jnp.ones(N // 2, jnp.int32)])

    keys = jax.random.split(k_p, NUM_LAYERS)
    all_params = [
        init_layer_params(keys[i], IN_FEATS if i == 0 else HIDDEN, HIDDEN)
        for i in range(NUM_LAYERS)
    ]

    fwd = jax.jit(encoder_forward, static_argnums=(4, 5))
    try:
        graph_rep, node_rep = fwd(adj, x, batch, all_params, NUM_GRAPHS, True)
        jax.block_until_ready((graph_rep, node_rep))
    except Exception:
        # Fallback if this JAX build rejects single-buffered (Buffered(1)) specs.
        graph_rep, node_rep = fwd(adj, x, batch, all_params, NUM_GRAPHS, False)
        jax.block_until_ready((graph_rep, node_rep))

    graph_ref, node_ref = encoder_forward_ref(adj, x, batch, all_params, NUM_GRAPHS)
    assert graph_rep.shape == (NUM_GRAPHS, NUM_LAYERS * HIDDEN)
    assert node_rep.shape == (N, NUM_LAYERS * HIDDEN)
    # bf16 operands are used only for the exact 0/1 adj/pool matrices; the cast
    # of activations to bf16 for those dots keeps errors well inside 2e-2.
    assert jnp.allclose(graph_rep, graph_ref, rtol=2e-2, atol=2e-2)
    assert jnp.allclose(node_rep, node_ref, rtol=2e-2, atol=2e-2)

    print("KERNEL_OK")
</pallas_src>

<mosaic_0001>
module attributes {stable_mosaic.version = 11 : i64} {
  func.func @fused_encoder_kernel(%arg0: i32, %arg1: memref<128x128xbf16, #tpu.memory_space<vmem>>, %arg2: memref<128x128xf32, #tpu.memory_space<vmem>>, %arg3: memref<3xf32, #tpu.memory_space<smem>>, %arg4: memref<1x128x128xf32, #tpu.memory_space<vmem>>, %arg5: memref<1x1x128xf32, #tpu.memory_space<vmem>>, %arg6: memref<1x1x128xf32, #tpu.memory_space<vmem>>, %arg7: memref<1x128x128xf32, #tpu.memory_space<vmem>>, %arg8: memref<1x1x128xf32, #tpu.memory_space<vmem>>, %arg9: memref<1x1x128xf32, #tpu.memory_space<vmem>>, %arg10: memref<16x128xbf16, #tpu.memory_space<vmem>>, %arg11: memref<128x128xf32, #tpu.memory_space<vmem>>, %arg12: memref<16x128xf32, #tpu.memory_space<vmem>>, %arg13: memref<128x128xf32, #tpu.memory_space<vmem>>) attributes {dimension_semantics = [#tpu.dimension_semantics<arbitrary>], iteration_bounds = array<i64: 3>, scalar_prefetch = 0 : i64, scratch_operands = 1 : i64, tpu.core_type = #tpu.core_type<tc>, window_params = [{pipeline_mode = #tpu.pipeline_mode<synchronous>, transform_indices = @transform_0, window_bounds = array<i64: 128, 128>}, {pipeline_mode = #tpu.pipeline_mode<synchronous>, transform_indices = @transform_1, window_bounds = array<i64: 128, 128>}, {transform_indices = @transform_2, window_bounds = array<i64: 3>}, {transform_indices = @transform_3, window_bounds = array<i64: 1, 128, 128>}, {transform_indices = @transform_4, window_bounds = array<i64: 1, 1, 128>}, {transform_indices = @transform_5, window_bounds = array<i64: 1, 1, 128>}, {transform_indices = @transform_6, window_bounds = array<i64: 1, 128, 128>}, {transform_indices = @transform_7, window_bounds = array<i64: 1, 1, 128>}, {transform_indices = @transform_8, window_bounds = array<i64: 1, 1, 128>}, {pipeline_mode = #tpu.pipeline_mode<synchronous>, transform_indices = @transform_9, window_bounds = array<i64: 16, 128>}, {transform_indices = @transform_10, window_bounds = array<i64: 128, 128>}, {transform_indices = @transform_11, window_bounds = array<i64: 16, 128>}]} {
    %c0_i32 = arith.constant 0 : i32
    %0 = arith.cmpi eq, %arg0, %c0_i32 : i32
    %1 = arith.extui %0 : i1 to i32
    %c0_i32_0 = arith.constant 0 : i32
    %2 = arith.cmpi ne, %1, %c0_i32_0 : i32
    scf.if %2 {
      %c0_46 = arith.constant 0 : index
      %c0_47 = arith.constant 0 : index
      %88 = vector.load %arg2[%c0_46, %c0_47] : memref<128x128xf32, #tpu.memory_space<vmem>>, vector<128x128xf32>
      %c0_48 = arith.constant 0 : index
      %c0_49 = arith.constant 0 : index
      %89 = vector.load %arg13[%c0_48, %c0_49] : memref<128x128xf32, #tpu.memory_space<vmem>>, vector<128x128xf32>
      tpu.vector_store %arg13[%c0_48, %c0_49], %88 {strides = array<i32>} : memref<128x128xf32, #tpu.memory_space<vmem>>, vector<128x128xf32>,
    } else {
    }
    %c0 = arith.constant 0 : index
    %c0_1 = arith.constant 0 : index
    %3 = vector.load %arg13[%c0, %c0_1] : memref<128x128xf32, #tpu.memory_space<vmem>>, vector<128x128xf32>
    %4 = tpu.iota {dimensions = array<i32: 0>} : vector<128x1xi32>
    %c16_i32 = arith.constant 16 : i32
    %5 = vector.broadcast %c16_i32 : i32 to vector<128x1xi32>
    %6 = arith.cmpi slt, %4, %5 : vector<128x1xi32>
    %7 = arith.extui %6 : vector<128x1xi1> to vector<128x1xi32>
    %8 = arith.sitofp %7 : vector<128x1xi32> to vector<128x1xf32>
    %9 = arith.index_cast %arg0 : i32 to index
    %10 = memref.load %arg3[%9] : memref<3xf32, #tpu.memory_space<smem>>
    %cst = arith.constant 1.000000e+00 : f32
    %11 = arith.addf %cst, %10 : f32
    %12 = vector.broadcast %11 : f32 to vector<128x128xf32>
    %13 = arith.mulf %12, %3 : vector<128x128xf32>
    %c0_2 = arith.constant 0 : index
    %c0_3 = arith.constant 0 : index
    %14 = vector.load %arg1[%c0_2, %c0_3] : memref<128x128xbf16, #tpu.memory_space<vmem>>, vector<128x128xbf16>
    %15 = arith.truncf %3 : vector<128x128xf32> to vector<128x128xbf16>
    %cst_4 = arith.constant dense<0.000000e+00> : vector<128x128xf32>
    %16 = tpu.matmul %14, %15, %cst_4 {dimension_numbers = #tpu.dot_dimension_numbers<[1], [0], [0], [1], [0, 0, 1, 1], [], []>} : vector<128x128xbf16>, vector<128x128xbf16>, vector<128x128xf32> -> vector<128x128xf32>
    %17 = arith.addf %13, %16 : vector<128x128xf32>
    %c0_5 = arith.constant 0 : index
    %c0_6 = arith.constant 0 : index
    %c0_7 = arith.constant 0 : index
    %18 = vector.load %arg4[%c0_5, %c0_6, %c0_7] : memref<1x128x128xf32, #tpu.memory_space<vmem>>, vector<1x128x128xf32>
    %19 = vector.shape_cast %18 : vector<1x128x128xf32> to vector<128x128xf32>
    %cst_8 = arith.constant dense<0.000000e+00> : vector<128x128xf32>
    %20 = tpu.matmul %17, %19, %cst_8 {dimension_numbers = #tpu.dot_dimension_numbers<[1], [0], [0], [1], [0, 0, 1, 1], [], []>} : vector<128x128xf32>, vector<128x128xf32>, vector<128x128xf32> -> vector<128x128xf32>
    %c0_9 = arith.constant 0 : index
    %c0_10 = arith.constant 0 : index
    %c0_11 = arith.constant 0 : index
    %21 = vector.load %arg5[%c0_9, %c0_10, %c0_11] : memref<1x1x128xf32, #tpu.memory_space<vmem>>, vector<1x1x128xf32>
    %22 = vector.shape_cast %21 : vector<1x1x128xf32> to vector<1x128xf32>
    %c0_12 = arith.constant 0 : index
    %c0_13 = arith.constant 0 : index
    %c0_14 = arith.constant 0 : index
    %23 = vector.load %arg6[%c0_12, %c0_13, %c0_14] : memref<1x1x128xf32, #tpu.memory_space<vmem>>, vector<1x1x128xf32>
    %24 = vector.shape_cast %23 : vector<1x1x128xf32> to vector<1x128xf32>
    %25 = vector.broadcast %8 : vector<128x1xf32> to vector<128x128xf32>
    %26 = arith.mulf %20, %25 : vector<128x128xf32>
    %cst_15 = arith.constant dense<0.000000e+00> : vector<128xf32>
    %27 = vector.multi_reduction <add>, %26, %cst_15 [0] : vector<128x128xf32> to vector<128xf32>
    %28 = vector.shape_cast %27 : vector<128xf32> to vector<1x128xf32>
    %cst_16 = arith.constant 6.250000e-02 : f32
    %29 = vector.broadcast %cst_16 : f32 to vector<1x128xf32>
    %30 = arith.mulf %28, %29 : vector<1x128xf32>
    %31 = vector.broadcast %30 : vector<1x128xf32> to vector<128x128xf32>
    %32 = arith.subf %20, %31 : vector<128x128xf32>
    %33 = arith.mulf %32, %32 : vector<128x128xf32>
    %34 = vector.broadcast %8 : vector<128x1xf32> to vector<128x128xf32>
    %35 = arith.mulf %33, %34 : vector<128x128xf32>
    %cst_17 = arith.constant dense<0.000000e+00> : vector<128xf32>
    %36 = vector.multi_reduction <add>, %35, %cst_17 [0] : vector<128x128xf32> to vector<128xf32>
    %37 = vector.shape_cast %36 : vector<128xf32> to vector<1x128xf32>
    %cst_18 = arith.constant 6.250000e-02 : f32
    %38 = vector.broadcast %cst_18 : f32 to vector<1x128xf32>
    %39 = arith.mulf %37, %38 : vector<1x128xf32>
    %cst_19 = arith.constant 9.99999974E-6 : f32
    %40 = vector.broadcast %cst_19 : f32 to vector<1x128xf32>
    %41 = arith.addf %39, %40 : vector<1x128xf32>
    %42 = math.rsqrt %41 : vector<1x128xf32>
    %43 = arith.mulf %22, %42 : vector<1x128xf32>
    %44 = vector.broadcast %43 : vector<1x128xf32> to vector<128x128xf32>
    %45 = arith.mulf %32, %44 : vector<128x128xf32>
    %46 = vector.broadcast %24 : vector<1x128xf32> to vector<128x128xf32>
    %47 = arith.addf %45, %46 : vector<128x128xf32>
    %cst_20 = arith.constant 0.000000e+00 : f32
    %48 = vector.broadcast %cst_20 : f32 to vector<128x128xf32>
    %49 = arith.maximumf %47, %48 : vector<128x128xf32>
    %c0_21 = arith.constant 0 : index
    %c0_22 = arith.constant 0 : index
    %c0_23 = arith.constant 0 : index
    %50 = vector.load %arg7[%c0_21, %c0_22, %c0_23] : memref<1x128x128xf32, #tpu.memory_space<vmem>>, vector<1x128x128xf32>
    %51 = vector.shape_cast %50 : vector<1x128x128xf32> to vector<128x128xf32>
    %cst_24 = arith.constant dense<0.000000e+00> : vector<128x128xf32>
    %52 = tpu.matmul %49, %51, %cst_24 {dimension_numbers = #tpu.dot_dimension_numbers<[1], [0], [0], [1], [0, 0, 1, 1], [], []>} : vector<128x128xf32>, vector<128x128xf32>, vector<128x128xf32> -> vector<128x128xf32>
    %c0_25 = arith.constant 0 : index
    %c0_26 = arith.constant 0 : index
    %c0_27 = arith.constant 0 : index
    %53 = vector.load %arg8[%c0_25, %c0_26, %c0_27] : memref<1x1x128xf32, #tpu.memory_space<vmem>>, vector<1x1x128xf32>
    %54 = vector.shape_cast %53 : vector<1x1x128xf32> to vector<1x128xf32>
    %c0_28 = arith.constant 0 : index
    %c0_29 = arith.constant 0 : index
    %c0_30 = arith.constant 0 : index
    %55 = vector.load %arg9[%c0_28, %c0_29, %c0_30] : memref<1x1x128xf32, #tpu.memory_space<vmem>>, vector<1x1x128xf32>
    %56 = vector.shape_cast %55 : vector<1x1x128xf32> to vector<1x128xf32>
    %57 = vector.broadcast %8 : vector<128x1xf32> to vector<128x128xf32>
    %58 = arith.mulf %52, %57 : vector<128x128xf32>
    %cst_31 = arith.constant dense<0.000000e+00> : vector<128xf32>
    %59 = vector.multi_reduction <add>, %58, %cst_31 [0] : vector<128x128xf32> to vector<128xf32>
    %60 = vector.shape_cast %59 : vector<128xf32> to vector<1x128xf32>
    %cst_32 = arith.constant 6.250000e-02 : f32
    %61 = vector.broadcast %cst_32 : f32 to vector<1x128xf32>
    %62 = arith.mulf %60, %61 : vector<1x128xf32>
    %63 = vector.broadcast %62 : vector<1x128xf32> to vector<128x128xf32>
    %64 = arith.subf %52, %63 : vector<128x128xf32>
    %65 = arith.mulf %64, %64 : vector<128x128xf32>
    %66 = vector.broadcast %8 : vector<128x1xf32> to vector<128x128xf32>
    %67 = arith.mulf %65, %66 : vector<128x128xf32>
    %cst_33 = arith.constant dense<0.000000e+00> : vector<128xf32>
    %68 = vector.multi_reduction <add>, %67, %cst_33 [0] : vector<128x128xf32> to vector<128xf32>
    %69 = vector.shape_cast %68 : vector<128xf32> to vector<1x128xf32>
    %cst_34 = arith.constant 6.250000e-02 : f32
    %70 = vector.broadcast %cst_34 : f32 to vector<1x128xf32>
    %71 = arith.mulf %69, %70 : vector<1x128xf32>
    %cst_35 = arith.constant 9.99999974E-6 : f32
    %72 = vector.broadcast %cst_35 : f32 to vector<1x128xf32>
    %73 = arith.addf %71, %72 : vector<1x128xf32>
    %74 = math.rsqrt %73 : vector<1x128xf32>
    %75 = arith.mulf %54, %74 : vector<1x128xf32>
    %76 = vector.broadcast %75 : vector<1x128xf32> to vector<128x128xf32>
    %77 = arith.mulf %64, %76 : vector<128x128xf32>
    %78 = vector.broadcast %56 : vector<1x128xf32> to vector<128x128xf32>
    %79 = arith.addf %77, %78 : vector<128x128xf32>
    %cst_36 = arith.constant 0.000000e+00 : f32
    %80 = vector.broadcast %cst_36 : f32 to vector<128x128xf32>
    %81 = arith.maximumf %79, %80 : vector<128x128xf32>
    %c0_37 = arith.constant 0 : index
    %c0_38 = arith.constant 0 : index
    %82 = vector.load %arg13[%c0_37, %c0_38] : memref<128x128xf32, #tpu.memory_space<vmem>>, vector<128x128xf32>
    tpu.vector_store %arg13[%c0_37, %c0_38], %81 {strides = array<i32>} : memref<128x128xf32, #tpu.memory_space<vmem>>, vector<128x128xf32>,
    %c0_39 = arith.constant 0 : index
    %c0_40 = arith.constant 0 : index
    %83 = vector.load %arg11[%c0_39, %c0_40] : memref<128x128xf32, #tpu.memory_space<vmem>>, vector<128x128xf32>
    tpu.vector_store %arg11[%c0_39, %c0_40], %81 {strides = array<i32>} : memref<128x128xf32, #tpu.memory_space<vmem>>, vector<128x128xf32>,
    %c0_41 = arith.constant 0 : index
    %c0_42 = arith.constant 0 : index
    %84 = vector.load %arg10[%c0_41, %c0_42] : memref<16x128xbf16, #tpu.memory_space<vmem>>, vector<16x128xbf16>
    %85 = arith.truncf %81 : vector<128x128xf32> to vector<128x128xbf16>
    %cst_43 = arith.constant dense<0.000000e+00> : vector<16x128xf32>
    %86 = tpu.matmul %84, %85, %cst_43 {dimension_numbers = #tpu.dot_dimension_numbers<[1], [0], [0], [1], [0, 0, 1, 1], [], []>} : vector<16x128xbf16>, vector<128x128xbf16>, vector<16x128xf32> -> vector<16x128xf32>
    %c0_44 = arith.constant 0 : index
    %c0_45 = arith.constant 0 : index
    %87 = vector.load %arg12[%c0_44, %c0_45] : memref<16x128xf32, #tpu.memory_space<vmem>>, vector<16x128xf32>
    tpu.vector_store %arg12[%c0_44, %c0_45], %86 {strides = array<i32>} : memref<16x128xf32, #tpu.memory_space<vmem>>, vector<16x128xf32>,
    return
  }
  func.func @transform_0(%arg0: i32) -> (i32, i32) {
    %c0_i32 = arith.constant 0 : i32
    %c0_i32_0 = arith.constant 0 : i32
    %c0_i32_1 = arith.constant 0 : i32
    return %c0_i32, %c0_i32_0 : i32, i32
  }
  func.func @transform_1(%arg0: i32) -> (i32, i32) {
    %c0_i32 = arith.constant 0 : i32
    %c0_i32_0 = arith.constant 0 : i32
    %c0_i32_1 = arith.constant 0 : i32
    return %c0_i32, %c0_i32_0 : i32, i32
  }
  func.func @transform_2(%arg0: i32) -> i32 {
    %c0_i32 = arith.constant 0 : i32
    %c0_i32_0 = arith.constant 0 : i32
    return %c0_i32 : i32
  }
  func.func @transform_3(%arg0: i32) -> (i32, i32, i32) {
    %c0_i32 = arith.constant 0 : i32
    %c0_i32_0 = arith.constant 0 : i32
    %c0_i32_1 = arith.constant 0 : i32
    return %arg0, %c0_i32, %c0_i32_0 : i32, i32, i32
  }
  func.func @transform_4(%arg0: i32) -> (i32, i32, i32) {
    %c0_i32 = arith.constant 0 : i32
    %c0_i32_0 = arith.constant 0 : i32
    %c0_i32_1 = arith.constant 0 : i32
    return %arg0, %c0_i32, %c0_i32_0 : i32, i32, i32
  }
  func.func @transform_5(%arg0: i32) -> (i32, i32, i32) {
    %c0_i32 = arith.constant 0 : i32
    %c0_i32_0 = arith.constant 0 : i32
    %c0_i32_1 = arith.constant 0 : i32
    return %arg0, %c0_i32, %c0_i32_0 : i32, i32, i32
  }
  func.func @transform_6(%arg0: i32) -> (i32, i32, i32) {
    %c0_i32 = arith.constant 0 : i32
    %c0_i32_0 = arith.constant 0 : i32
    %c0_i32_1 = arith.constant 0 : i32
    return %arg0, %c0_i32, %c0_i32_0 : i32, i32, i32
  }
  func.func @transform_7(%arg0: i32) -> (i32, i32, i32) {
    %c0_i32 = arith.constant 0 : i32
    %c0_i32_0 = arith.constant 0 : i32
    %c0_i32_1 = arith.constant 0 : i32
    return %arg0, %c0_i32, %c0_i32_0 : i32, i32, i32
  }
  func.func @transform_8(%arg0: i32) -> (i32, i32, i32) {
    %c0_i32 = arith.constant 0 : i32
    %c0_i32_0 = arith.constant 0 : i32
    %c0_i32_1 = arith.constant 0 : i32
    return %arg0, %c0_i32, %c0_i32_0 : i32, i32, i32
  }
  func.func @transform_9(%arg0: i32) -> (i32, i32) {
    %c0_i32 = arith.constant 0 : i32
    %c0_i32_0 = arith.constant 0 : i32
    %c0_i32_1 = arith.constant 0 : i32
    return %c0_i32, %c0_i32_0 : i32, i32
  }
  func.func @transform_10(%arg0: i32) -> (i32, i32) {
    %c0_i32 = arith.constant 0 : i32
    %c0_i32_0 = arith.constant 0 : i32
    return %c0_i32, %arg0 : i32, i32
  }
  func.func @transform_11(%arg0: i32) -> (i32, i32) {
    %c0_i32 = arith.constant 0 : i32
    %c0_i32_0 = arith.constant 0 : i32
    return %c0_i32, %arg0 : i32, i32
  }
}

module attributes {stable_mosaic.version = 11 : i64} {
  func.func @fused_encoder_kernel(%arg0: i32, %arg1: memref<128x128xbf16, #tpu.memory_space<vmem>>, %arg2: memref<128x128xf32, #tpu.memory_space<vmem>>, %arg3: memref<3xf32, #tpu.memory_space<smem>>, %arg4: memref<1x128x128xf32, #tpu.memory_space<vmem>>, %arg5: memref<1x1x128xf32, #tpu.memory_space<vmem>>, %arg6: memref<1x1x128xf32, #tpu.memory_space<vmem>>, %arg7: memref<1x128x128xf32, #tpu.memory_space<vmem>>, %arg8: memref<1x1x128xf32, #tpu.memory_space<vmem>>, %arg9: memref<1x1x128xf32, #tpu.memory_space<vmem>>, %arg10: memref<16x128xbf16, #tpu.memory_space<vmem>>, %arg11: memref<128x128xf32, #tpu.memory_space<vmem>>, %arg12: memref<16x128xf32, #tpu.memory_space<vmem>>, %arg13: memref<128x128xf32, #tpu.memory_space<vmem>>) attributes {dimension_semantics = [#tpu.dimension_semantics<arbitrary>], iteration_bounds = array<i64: 3>, scalar_prefetch = 0 : i64, scratch_operands = 1 : i64, tpu.core_type = #tpu.core_type<tc>, window_params = [{pipeline_mode = #tpu.pipeline_mode<synchronous>, transform_indices = @transform_0, window_bounds = array<i64: 128, 128>}, {pipeline_mode = #tpu.pipeline_mode<synchronous>, transform_indices = @transform_1, window_bounds = array<i64: 128, 128>}, {transform_indices = @transform_2, window_bounds = array<i64: 3>}, {transform_indices = @transform_3, window_bounds = array<i64: 1, 128, 128>}, {transform_indices = @transform_4, window_bounds = array<i64: 1, 1, 128>}, {transform_indices = @transform_5, window_bounds = array<i64: 1, 1, 128>}, {transform_indices = @transform_6, window_bounds = array<i64: 1, 128, 128>}, {transform_indices = @transform_7, window_bounds = array<i64: 1, 1, 128>}, {transform_indices = @transform_8, window_bounds = array<i64: 1, 1, 128>}, {pipeline_mode = #tpu.pipeline_mode<synchronous>, transform_indices = @transform_9, window_bounds = array<i64: 16, 128>}, {transform_indices = @transform_10, window_bounds = array<i64: 128, 128>}, {transform_indices = @transform_11, window_bounds = array<i64: 16, 128>}]} {
    %c0_i32 = arith.constant 0 : i32
    %0 = arith.cmpi eq, %arg0, %c0_i32 : i32
    %1 = arith.extui %0 : i1 to i32
    %c0_i32_0 = arith.constant 0 : i32
    %2 = arith.cmpi ne, %1, %c0_i32_0 : i32
    scf.if %2 {
      %c0_46 = arith.constant 0 : index
      %c0_47 = arith.constant 0 : index
      %88 = vector.load %arg2[%c0_46, %c0_47] : memref<128x128xf32, #tpu.memory_space<vmem>>, vector<128x128xf32>
      %c0_48 = arith.constant 0 : index
      %c0_49 = arith.constant 0 : index
      %89 = vector.load %arg13[%c0_48, %c0_49] : memref<128x128xf32, #tpu.memory_space<vmem>>, vector<128x128xf32>
      tpu.vector_store %arg13[%c0_48, %c0_49], %88 {strides = array<i32>} : memref<128x128xf32, #tpu.memory_space<vmem>>, vector<128x128xf32>,
    } else {
    }
    %c0 = arith.constant 0 : index
    %c0_1 = arith.constant 0 : index
    %3 = vector.load %arg13[%c0, %c0_1] : memref<128x128xf32, #tpu.memory_space<vmem>>, vector<128x128xf32>
    %4 = tpu.iota {dimensions = array<i32: 0>} : vector<128x1xi32>
    %c16_i32 = arith.constant 16 : i32
    %5 = vector.broadcast %c16_i32 : i32 to vector<128x1xi32>
    %6 = arith.cmpi slt, %4, %5 : vector<128x1xi32>
    %7 = arith.extui %6 : vector<128x1xi1> to vector<128x1xi32>
    %8 = arith.sitofp %7 : vector<128x1xi32> to vector<128x1xf32>
    %9 = arith.index_cast %arg0 : i32 to index
    %10 = memref.load %arg3[%9] : memref<3xf32, #tpu.memory_space<smem>>
    %cst = arith.constant 1.000000e+00 : f32
    %11 = arith.addf %cst, %10 : f32
    %12 = vector.broadcast %11 : f32 to vector<128x128xf32>
    %13 = arith.mulf %12, %3 : vector<128x128xf32>
    %c0_2 = arith.constant 0 : index
    %c0_3 = arith.constant 0 : index
    %14 = vector.load %arg1[%c0_2, %c0_3] : memref<128x128xbf16, #tpu.memory_space<vmem>>, vector<128x128xbf16>
    %15 = arith.truncf %3 : vector<128x128xf32> to vector<128x128xbf16>
    %cst_4 = arith.constant dense<0.000000e+00> : vector<128x128xf32>
    %16 = tpu.matmul %14, %15, %cst_4 {dimension_numbers = #tpu.dot_dimension_numbers<[1], [0], [0], [1], [0, 0, 1, 1], [], []>} : vector<128x128xbf16>, vector<128x128xbf16>, vector<128x128xf32> -> vector<128x128xf32>
    %17 = arith.addf %13, %16 : vector<128x128xf32>
    %c0_5 = arith.constant 0 : index
    %c0_6 = arith.constant 0 : index
    %c0_7 = arith.constant 0 : index
    %18 = vector.load %arg4[%c0_5, %c0_6, %c0_7] : memref<1x128x128xf32, #tpu.memory_space<vmem>>, vector<1x128x128xf32>
    %19 = vector.shape_cast %18 : vector<1x128x128xf32> to vector<128x128xf32>
    %cst_8 = arith.constant dense<0.000000e+00> : vector<128x128xf32>
    %20 = tpu.matmul %17, %19, %cst_8 {dimension_numbers = #tpu.dot_dimension_numbers<[1], [0], [0], [1], [0, 0, 1, 1], [], []>} : vector<128x128xf32>, vector<128x128xf32>, vector<128x128xf32> -> vector<128x128xf32>
    %c0_9 = arith.constant 0 : index
    %c0_10 = arith.constant 0 : index
    %c0_11 = arith.constant 0 : index
    %21 = vector.load %arg5[%c0_9, %c0_10, %c0_11] : memref<1x1x128xf32, #tpu.memory_space<vmem>>, vector<1x1x128xf32>
    %22 = vector.shape_cast %21 : vector<1x1x128xf32> to vector<1x128xf32>
    %c0_12 = arith.constant 0 : index
    %c0_13 = arith.constant 0 : index
    %c0_14 = arith.constant 0 : index
    %23 = vector.load %arg6[%c0_12, %c0_13, %c0_14] : memref<1x1x128xf32, #tpu.memory_space<vmem>>, vector<1x1x128xf32>
    %24 = vector.shape_cast %23 : vector<1x1x128xf32> to vector<1x128xf32>
    %25 = vector.broadcast %8 : vector<128x1xf32> to vector<128x128xf32>
    %26 = arith.mulf %20, %25 : vector<128x128xf32>
    %cst_15 = arith.constant dense<0.000000e+00> : vector<128xf32>
    %27 = vector.multi_reduction <add>, %26, %cst_15 [0] : vector<128x128xf32> to vector<128xf32>
    %28 = vector.shape_cast %27 : vector<128xf32> to vector<1x128xf32>
    %cst_16 = arith.constant 6.250000e-02 : f32
    %29 = vector.broadcast %cst_16 : f32 to vector<1x128xf32>
    %30 = arith.mulf %28, %29 : vector<1x128xf32>
    %31 = vector.broadcast %30 : vector<1x128xf32> to vector<128x128xf32>
    %32 = arith.subf %20, %31 : vector<128x128xf32>
    %33 = arith.mulf %32, %32 : vector<128x128xf32>
    %34 = vector.broadcast %8 : vector<128x1xf32> to vector<128x128xf32>
    %35 = arith.mulf %33, %34 : vector<128x128xf32>
    %cst_17 = arith.constant dense<0.000000e+00> : vector<128xf32>
    %36 = vector.multi_reduction <add>, %35, %cst_17 [0] : vector<128x128xf32> to vector<128xf32>
    %37 = vector.shape_cast %36 : vector<128xf32> to vector<1x128xf32>
    %cst_18 = arith.constant 6.250000e-02 : f32
    %38 = vector.broadcast %cst_18 : f32 to vector<1x128xf32>
    %39 = arith.mulf %37, %38 : vector<1x128xf32>
    %cst_19 = arith.constant 9.99999974E-6 : f32
    %40 = vector.broadcast %cst_19 : f32 to vector<1x128xf32>
    %41 = arith.addf %39, %40 : vector<1x128xf32>
    %42 = math.rsqrt %41 : vector<1x128xf32>
    %43 = arith.mulf %22, %42 : vector<1x128xf32>
    %44 = vector.broadcast %43 : vector<1x128xf32> to vector<128x128xf32>
    %45 = arith.mulf %32, %44 : vector<128x128xf32>
    %46 = vector.broadcast %24 : vector<1x128xf32> to vector<128x128xf32>
    %47 = arith.addf %45, %46 : vector<128x128xf32>
    %cst_20 = arith.constant 0.000000e+00 : f32
    %48 = vector.broadcast %cst_20 : f32 to vector<128x128xf32>
    %49 = arith.maximumf %47, %48 : vector<128x128xf32>
    %c0_21 = arith.constant 0 : index
    %c0_22 = arith.constant 0 : index
    %c0_23 = arith.constant 0 : index
    %50 = vector.load %arg7[%c0_21, %c0_22, %c0_23] : memref<1x128x128xf32, #tpu.memory_space<vmem>>, vector<1x128x128xf32>
    %51 = vector.shape_cast %50 : vector<1x128x128xf32> to vector<128x128xf32>
    %cst_24 = arith.constant dense<0.000000e+00> : vector<128x128xf32>
    %52 = tpu.matmul %49, %51, %cst_24 {dimension_numbers = #tpu.dot_dimension_numbers<[1], [0], [0], [1], [0, 0, 1, 1], [], []>} : vector<128x128xf32>, vector<128x128xf32>, vector<128x128xf32> -> vector<128x128xf32>
    %c0_25 = arith.constant 0 : index
    %c0_26 = arith.constant 0 : index
    %c0_27 = arith.constant 0 : index
    %53 = vector.load %arg8[%c0_25, %c0_26, %c0_27] : memref<1x1x128xf32, #tpu.memory_space<vmem>>, vector<1x1x128xf32>
    %54 = vector.shape_cast %53 : vector<1x1x128xf32> to vector<1x128xf32>
    %c0_28 = arith.constant 0 : index
    %c0_29 = arith.constant 0 : index
    %c0_30 = arith.constant 0 : index
    %55 = vector.load %arg9[%c0_28, %c0_29, %c0_30] : memref<1x1x128xf32, #tpu.memory_space<vmem>>, vector<1x1x128xf32>
    %56 = vector.shape_cast %55 : vector<1x1x128xf32> to vector<1x128xf32>
    %57 = vector.broadcast %8 : vector<128x1xf32> to vector<128x128xf32>
    %58 = arith.mulf %52, %57 : vector<128x128xf32>
    %cst_31 = arith.constant dense<0.000000e+00> : vector<128xf32>
    %59 = vector.multi_reduction <add>, %58, %cst_31 [0] : vector<128x128xf32> to vector<128xf32>
    %60 = vector.shape_cast %59 : vector<128xf32> to vector<1x128xf32>
    %cst_32 = arith.constant 6.250000e-02 : f32
    %61 = vector.broadcast %cst_32 : f32 to vector<1x128xf32>
    %62 = arith.mulf %60, %61 : vector<1x128xf32>
    %63 = vector.broadcast %62 : vector<1x128xf32> to vector<128x128xf32>
    %64 = arith.subf %52, %63 : vector<128x128xf32>
    %65 = arith.mulf %64, %64 : vector<128x128xf32>
    %66 = vector.broadcast %8 : vector<128x1xf32> to vector<128x128xf32>
    %67 = arith.mulf %65, %66 : vector<128x128xf32>
    %cst_33 = arith.constant dense<0.000000e+00> : vector<128xf32>
    %68 = vector.multi_reduction <add>, %67, %cst_33 [0] : vector<128x128xf32> to vector<128xf32>
    %69 = vector.shape_cast %68 : vector<128xf32> to vector<1x128xf32>
    %cst_34 = arith.constant 6.250000e-02 : f32
    %70 = vector.broadcast %cst_34 : f32 to vector<1x128xf32>
    %71 = arith.mulf %69, %70 : vector<1x128xf32>
    %cst_35 = arith.constant 9.99999974E-6 : f32
    %72 = vector.broadcast %cst_35 : f32 to vector<1x128xf32>
    %73 = arith.addf %71, %72 : vector<1x128xf32>
    %74 = math.rsqrt %73 : vector<1x128xf32>
    %75 = arith.mulf %54, %74 : vector<1x128xf32>
    %76 = vector.broadcast %75 : vector<1x128xf32> to vector<128x128xf32>
    %77 = arith.mulf %64, %76 : vector<128x128xf32>
    %78 = vector.broadcast %56 : vector<1x128xf32> to vector<128x128xf32>
    %79 = arith.addf %77, %78 : vector<128x128xf32>
    %cst_36 = arith.constant 0.000000e+00 : f32
    %80 = vector.broadcast %cst_36 : f32 to vector<128x128xf32>
    %81 = arith.maximumf %79, %80 : vector<128x128xf32>
    %c0_37 = arith.constant 0 : index
    %c0_38 = arith.constant 0 : index
    %82 = vector.load %arg13[%c0_37, %c0_38] : memref<128x128xf32, #tpu.memory_space<vmem>>, vector<128x128xf32>
    tpu.vector_store %arg13[%c0_37, %c0_38], %81 {strides = array<i32>} : memref<128x128xf32, #tpu.memory_space<vmem>>, vector<128x128xf32>,
    %c0_39 = arith.constant 0 : index
    %c0_40 = arith.constant 0 : index
    %83 = vector.load %arg11[%c0_39, %c0_40] : memref<128x128xf32, #tpu.memory_space<vmem>>, vector<128x128xf32>
    tpu.vector_store %arg11[%c0_39, %c0_40], %81 {strides = array<i32>} : memref<128x128xf32, #tpu.memory_space<vmem>>, vector<128x128xf32>,
    %c0_41 = arith.constant 0 : index
    %c0_42 = arith.constant 0 : index
    %84 = vector.load %arg10[%c0_41, %c0_42] : memref<16x128xbf16, #tpu.memory_space<vmem>>, vector<16x128xbf16>
    %85 = arith.truncf %81 : vector<128x128xf32> to vector<128x128xbf16>
    %cst_43 = arith.constant dense<0.000000e+00> : vector<16x128xf32>
    %86 = tpu.matmul %84, %85, %cst_43 {dimension_numbers = #tpu.dot_dimension_numbers<[1], [0], [0], [1], [0, 0, 1, 1], [], []>} : vector<16x128xbf16>, vector<128x128xbf16>, vector<16x128xf32> -> vector<16x128xf32>
    %c0_44 = arith.constant 0 : index
    %c0_45 = arith.constant 0 : index
    %87 = vector.load %arg12[%c0_44, %c0_45] : memref<16x128xf32, #tpu.memory_space<vmem>>, vector<16x128xf32>
    tpu.vector_store %arg12[%c0_44, %c0_45], %86 {strides = array<i32>} : memref<16x128xf32, #tpu.memory_space<vmem>>, vector<16x128xf32>,
    return
  }
  func.func @transform_0(%arg0: i32) -> (i32, i32) {
    %c0_i32 = arith.constant 0 : i32
    %c0_i32_0 = arith.constant 0 : i32
    %c0_i32_1 = arith.constant 0 : i32
    return %c0_i32, %c0_i32_0 : i32, i32
  }
  func.func @transform_1(%arg0: i32) -> (i32, i32) {
    %c0_i32 = arith.constant 0 : i32
    %c0_i32_0 = arith.constant 0 : i32
    %c0_i32_1 = arith.constant 0 : i32
    return %c0_i32, %c0_i32_0 : i32, i32
  }
  func.func @transform_2(%arg0: i32) -> i32 {
    %c0_i32 = arith.constant 0 : i32
    %c0_i32_0 = arith.constant 0 : i32
    return %c0_i32 : i32
  }
  func.func @transform_3(%arg0: i32) -> (i32, i32, i32) {
    %c0_i32 = arith.constant 0 : i32
    %c0_i32_0 = arith.constant 0 : i32
    %c0_i32_1 = arith.constant 0 : i32
    return %arg0, %c0_i32, %c0_i32_0 : i32, i32, i32
  }
  func.func @transform_4(%arg0: i32) -> (i32, i32, i32) {
    %c0_i32 = arith.constant 0 : i32
    %c0_i32_0 = arith.constant 0 : i32
    %c0_i32_1 = arith.constant 0 : i32
    return %arg0, %c0_i32, %c0_i32_0 : i32, i32, i32
  }
  func.func @transform_5(%arg0: i32) -> (i32, i32, i32) {
    %c0_i32 = arith.constant 0 : i32
    %c0_i32_0 = arith.constant 0 : i32
    %c0_i32_1 = arith.constant 0 : i32
    return %arg0, %c0_i32, %c0_i32_0 : i32, i32, i32
  }
  func.func @transform_6(%arg0: i32) -> (i32, i32, i32) {
    %c0_i32 = arith.constant 0 : i32
    %c0_i32_0 = arith.constant 0 : i32
    %c0_i32_1 = arith.constant 0 : i32
    return %arg0, %c0_i32, %c0_i32_0 : i32, i32, i32
  }
  func.func @transform_7(%arg0: i32) -> (i32, i32, i32) {
    %c0_i32 = arith.constant 0 : i32
    %c0_i32_0 = arith.constant 0 : i32
    %c0_i32_1 = arith.constant 0 : i32
    return %arg0, %c0_i32, %c0_i32_0 : i32, i32, i32
  }
  func.func @transform_8(%arg0: i32) -> (i32, i32, i32) {
    %c0_i32 = arith.constant 0 : i32
    %c0_i32_0 = arith.constant 0 : i32
    %c0_i32_1 = arith.constant 0 : i32
    return %arg0, %c0_i32, %c0_i32_0 : i32, i32, i32
  }
  func.func @transform_9(%arg0: i32) -> (i32, i32) {
    %c0_i32 = arith.constant 0 : i32
    %c0_i32_0 = arith.constant 0 : i32
    %c0_i32_1 = arith.constant 0 : i32
    return %c0_i32, %c0_i32_0 : i32, i32
  }
  func.func @transform_10(%arg0: i32) -> (i32, i32) {
    %c0_i32 = arith.constant 0 : i32
    %c0_i32_0 = arith.constant 0 : i32
    return %c0_i32, %arg0 : i32, i32
  }
  func.func @transform_11(%arg0: i32) -> (i32, i32) {
    %c0_i32 = arith.constant 0 : i32
    %c0_i32_0 = arith.constant 0 : i32
    return %c0_i32, %arg0 : i32, i32
  }
}

</mosaic_0001>

<llo_original>
// kernel: encoder_forward.1
$region0: #{encoder_forward.1}
  #allocation0 [shape = 'u32[]', space=smem, size = 0x4, offset = 0x4, fixed_abs, tag = 'smem constant byte address 0x4 - core index']
  #allocation1 [shape = 'u32[144,128]{1,0:T(1,128)}', space=vmem, size = 0x12000, scoped, tag = 'internal scratch']
  #allocation2 [shape = 'f32[128,128]{1,0:T(8,128)}', space=vmem, size = 0x10000, scoped, tag = 'scratch operand']
  %s0 = inlined_call_operand.vmem [shape: bf16[128,128], index: 0, kind: input, shape index: {}]
  %s1 = inlined_call_operand.vmem [shape: f32[128,128], index: 1, kind: input, shape index: {}]
  %s2 = inlined_call_operand.vmem [shape: f32[3], index: 2, kind: input, shape index: {}]
  %s3 = inlined_call_operand.vmem [shape: f32[3,128,128], index: 3, kind: input, shape index: {}]
  %s4 = inlined_call_operand.vmem [shape: f32[3,1,128], index: 4, kind: input, shape index: {}]
  %s5 = inlined_call_operand.vmem [shape: f32[3,1,128], index: 5, kind: input, shape index: {}]
  %s6 = inlined_call_operand.vmem [shape: f32[3,128,128], index: 6, kind: input, shape index: {}]
  %s7 = inlined_call_operand.vmem [shape: f32[3,1,128], index: 7, kind: input, shape index: {}]
  %s8 = inlined_call_operand.vmem [shape: f32[3,1,128], index: 8, kind: input, shape index: {}]
  %s9 = inlined_call_operand.vmem [shape: bf16[16,128], index: 9, kind: input, shape index: {}]
  %s10 = inlined_call_operand.vmem [shape: f32[128,384], index: 10, kind: output, shape index: {0}]
  %s11 = inlined_call_operand.vmem [shape: f32[16,384], index: 11, kind: output, shape index: {1}]
  %12 = xla_tuple %s10, %s11
  %s13 = sld [smem:[#allocation0]]
  $region157: #{encoder_forward.1} parent=0
    _
  %s15 = ssub.s32 1, %s13
  %s16 = scalar_select 0, %s15, %s13
  $region1: #{encoder_forward.1} parent=0
    #allocation3 [shape = 'u8[512]{0}', space=smem, size = 0x200, scoped, tag = 'input window, operand 2, single buffered']
    #allocation4 [shape = 's32[2]{0}', space=sflag, size = 0x8, scoped, tag = 'scoped memory for encoder_forward.1']
    #allocation5 [shape = 'u8[131072]{0}', space=vmem, size = 0x20000, scoped, tag = 'output window, operand 0']
    #allocation6 [shape = 'u8[16384]{0}', space=vmem, size = 0x4000, scoped, tag = 'output window, operand 1']
    %17 = vsyncpa [#allocation4], 0
    loop: start=0, step=1, limit=5
    $region2: #{encoder_forward.1} parent=1 // loop_pre_header
      _
    $region3: #{encoder_forward.1} parent=1 // loop_header
      %s19 = sphi 0, %s23
      %p20 = scmp.ge.s32.totalorder %s19, 5
      %s27 = sphi 0, %s27
      %s29 = sphi 0, %s27
      %s30 = sphi 0, %s29
      %s44 = sphi 0, %s30
      %s48 = sphi 0, %s48
      %s50 = sphi 0, %s48
      %s51 = sphi 0, %s50
      %s65 = sphi 0, %s51
      %s69 = sphi 0, %s69
      %s71 = sphi 0, %s69
      %s72 = sphi 0, %s71
      %s86 = sphi 0, %s72
      %s92 = sphi 0, %s94
      %s95 = sphi 0, %s92
      %s96 = sphi 0, %s95
      %s112 = sphi 0, %s96
      %s118 = sphi 0, %s120
      %s121 = sphi 0, %s118
      %s122 = sphi 0, %s121
      %s138 = sphi 0, %s122
      %s144 = sphi 0, %s146
      %s147 = sphi 0, %s144
      %s148 = sphi 0, %s147
      %s164 = sphi 0, %s148
      %s170 = sphi 0, %s172
      %s173 = sphi 0, %s170
      %s174 = sphi 0, %s173
      %s190 = sphi 0, %s174
      %s196 = sphi 0, %s198
      %s199 = sphi 0, %s196
      %s200 = sphi 0, %s199
      %s216 = sphi 0, %s200
      %s222 = sphi 0, %s224
      %s225 = sphi 0, %s222
      %s226 = sphi 0, %s225
      %s242 = sphi 0, %s226
      %s246 = sphi 0, %s246
      %s248 = sphi 0, %s246
      %s249 = sphi 0, %s248
      %s263 = sphi 0, %s249
      %s269 = sphi 0, %s271
      %s272 = sphi 0, %s269
      %s273 = sphi 0, %s272
      %s289 = sphi 0, %s273
      %s295 = sphi 0, %s297
      %s298 = sphi 0, %s295
      %s299 = sphi 0, %s298
      %s315 = sphi 0, %s299
    $region4: #{encoder_forward.1} parent=1 // loop_header_branch
      %22 = sbr.rel (%p20) target = $region8
    $region5: #{encoder_forward.1} parent=1 // loop_body
      %s24 = ssub.s32 %s19, 1
      %s25 = ssub.s32 %s19, 2
      %s26 = sadd.s32 %s19, 1
      %s28 = sadd.s32 %s27, 1
      %p31 = scmp.eq.s32.totalorder %s19, 2
      %p32 = scmp.ne.s32.totalorder %s27, %s29
      %p33 = scmp.eq.s32.totalorder %s19, 0
      %p34 = por %p32, %p33
      %p35 = scmp.ne.s32.totalorder %s27, %s29
      %p36 = scmp.eq.s32.totalorder %s24, 2
      %p37 = por %p35, %p36
      %p38 = scmp.ne.s32.totalorder %s29, %s30
      %p39 = scmp.eq.s32.totalorder %s24, 0
      %p40 = por %p38, %p39
      %p41 = scmp.ne.s32.totalorder %s29, %s30
      %p42 = scmp.eq.s32.totalorder %s25, 2
      %p43 = por %p41, %p42
      %p45 = scmp.ne.s32.totalorder %s30, %s44
      %p46 = scmp.eq.s32.totalorder %s25, 0
      %p47 = por %p45, %p46
      %s49 = sadd.s32 %s48, 1
      %p52 = scmp.eq.s32.totalorder %s19, 2
      %p53 = scmp.ne.s32.totalorder %s48, %s50
      %p54 = scmp.eq.s32.totalorder %s19, 0
      %p55 = por %p53, %p54
      %p56 = scmp.ne.s32.totalorder %s48, %s50
      %p57 = scmp.eq.s32.totalorder %s24, 2
      %p58 = por %p56, %p57
      %p59 = scmp.ne.s32.totalorder %s50, %s51
      %p60 = scmp.eq.s32.totalorder %s24, 0
      %p61 = por %p59, %p60
      %p62 = scmp.ne.s32.totalorder %s50, %s51
      %p63 = scmp.eq.s32.totalorder %s25, 2
      %p64 = por %p62, %p63
      %p66 = scmp.ne.s32.totalorder %s51, %s65
      %p67 = scmp.eq.s32.totalorder %s25, 0
      %p68 = por %p66, %p67
      %s70 = sadd.s32 %s69, 1
      %p73 = scmp.eq.s32.totalorder %s19, 2
      %p74 = scmp.ne.s32.totalorder %s69, %s71
      %p75 = scmp.eq.s32.totalorder %s19, 0
      %p76 = por %p74, %p75
      %p77 = scmp.ne.s32.totalorder %s69, %s71
      %p78 = scmp.eq.s32.totalorder %s24, 2
      %p79 = por %p77, %p78
      %p80 = scmp.ne.s32.totalorder %s71, %s72
      %p81 = scmp.eq.s32.totalorder %s24, 0
      %p82 = por %p80, %p81
      %p83 = scmp.ne.s32.totalorder %s71, %s72
      %p84 = scmp.eq.s32.totalorder %s25, 2
      %p85 = por %p83, %p84
      %p87 = scmp.ne.s32.totalorder %s72, %s86
      %p88 = scmp.eq.s32.totalorder %s25, 0
      %p89 = por %p87, %p88
      %s90 = ssub.s32 %s19, %s26
      %p91 = scmp.eq.s32.totalorder %s90, 0
      %s93 = sadd.s32 %s92, 1
      %s94 = scalar_select %p91, %s92, %s93
      %p97 = pneg %p91
      %p98 = scmp.eq.s32.totalorder %s19, 2
      %p99 = por %p97, %p98
      %p100 = scmp.ne.s32.totalorder %s92, %s95
      %p101 = scmp.eq.s32.totalorder %s19, 0
      %p102 = por %p100, %p101
      %p103 = scmp.ne.s32.totalorder %s92, %s95
      %p104 = scmp.eq.s32.totalorder %s24, 2
      %p105 = por %p103, %p104
      %p106 = scmp.ne.s32.totalorder %s95, %s96
      %p107 = scmp.eq.s32.totalorder %s24, 0
      %p108 = por %p106, %p107
      %p109 = scmp.ne.s32.totalorder %s95, %s96
      %p110 = scmp.eq.s32.totalorder %s25, 2
      %p111 = por %p109, %p110
      %p113 = scmp.ne.s32.totalorder %s96, %s112
      %p114 = scmp.eq.s32.totalorder %s25, 0
      %p115 = por %p113, %p114
      %s116 = ssub.s32 %s19, %s26
      %p117 = scmp.eq.s32.totalorder %s116, 0
      %s119 = sadd.s32 %s118, 1
      %s120 = scalar_select %p117, %s118, %s119
      %p123 = pneg %p117
      %p124 = scmp.eq.s32.totalorder %s19, 2
      %p125 = por %p123, %p124
      %p126 = scmp.ne.s32.totalorder %s118, %s121
      %p127 = scmp.eq.s32.totalorder %s19, 0
      %p128 = por %p126, %p127
      %p129 = scmp.ne.s32.totalorder %s118, %s121
      %p130 = scmp.eq.s32.totalorder %s24, 2
      %p131 = por %p129, %p130
      %p132 = scmp.ne.s32.totalorder %s121, %s122
      %p133 = scmp.eq.s32.totalorder %s24, 0
      %p134 = por %p132, %p133
      %p135 = scmp.ne.s32.totalorder %s121, %s122
      %p136 = scmp.eq.s32.totalorder %s25, 2
      %p137 = por %p135, %p136
      %p139 = scmp.ne.s32.totalorder %s122, %s138
      %p140 = scmp.eq.s32.totalorder %s25, 0
      %p141 = por %p139, %p140
      %s142 = ssub.s32 %s19, %s26
      %p143 = scmp.eq.s32.totalorder %s142, 0
      %s145 = sadd.s32 %s144, 1
      %s146 = scalar_select %p143, %s144, %s145
      %p149 = pneg %p143
      %p150 = scmp.eq.s32.totalorder %s19, 2
      %p151 = por %p149, %p150
      %p152 = scmp.ne.s32.totalorder %s144, %s147
      %p153 = scmp.eq.s32.totalorder %s19, 0
      %p154 = por %p152, %p153
      %p155 = scmp.ne.s32.totalorder %s144, %s147
      %p156 = scmp.eq.s32.totalorder %s24, 2
      %p157 = por %p155, %p156
      %p158 = scmp.ne.s32.totalorder %s147, %s148
      %p159 = scmp.eq.s32.totalorder %s24, 0
      %p160 = por %p158, %p159
      %p161 = scmp.ne.s32.totalorder %s147, %s148
      %p162 = scmp.eq.s32.totalorder %s25, 2
      %p163 = por %p161, %p162
      %p165 = scmp.ne.s32.totalorder %s148, %s164
      %p166 = scmp.eq.s32.totalorder %s25, 0
      %p167 = por %p165, %p166
      %s168 = ssub.s32 %s19, %s26
      %p169 = scmp.eq.s32.totalorder %s168, 0
      %s171 = sadd.s32 %s170, 1
      %s172 = scalar_select %p169, %s170, %s171
      %p175 = pneg %p169
      %p176 = scmp.eq.s32.totalorder %s19, 2
      %p177 = por %p175, %p176
      %p178 = scmp.ne.s32.totalorder %s170, %s173
      %p179 = scmp.eq.s32.totalorder %s19, 0
      %p180 = por %p178, %p179
      %p181 = scmp.ne.s32.totalorder %s170, %s173
      %p182 = scmp.eq.s32.totalorder %s24, 2
      %p183 = por %p181, %p182
      %p184 = scmp.ne.s32.totalorder %s173, %s174
      %p185 = scmp.eq.s32.totalorder %s24, 0
      %p186 = por %p184, %p185
      %p187 = scmp.ne.s32.totalorder %s173, %s174
      %p188 = scmp.eq.s32.totalorder %s25, 2
      %p189 = por %p187, %p188
      %p191 = scmp.ne.s32.totalorder %s174, %s190
      %p192 = scmp.eq.s32.totalorder %s25, 0
      %p193 = por %p191, %p192
      %s194 = ssub.s32 %s19, %s26
      %p195 = scmp.eq.s32.totalorder %s194, 0
      %s197 = sadd.s32 %s196, 1
      %s198 = scalar_select %p195, %s196, %s197
      %p201 = pneg %p195
      %p202 = scmp.eq.s32.totalorder %s19, 2
      %p203 = por %p201, %p202
      %p204 = scmp.ne.s32.totalorder %s196, %s199
      %p205 = scmp.eq.s32.totalorder %s19, 0
      %p206 = por %p204, %p205
      %p207 = scmp.ne.s32.totalorder %s196, %s199
      %p208 = scmp.eq.s32.totalorder %s24, 2
      %p209 = por %p207, %p208
      %p210 = scmp.ne.s32.totalorder %s199, %s200
      %p211 = scmp.eq.s32.totalorder %s24, 0
      %p212 = por %p210, %p211
      %p213 = scmp.ne.s32.totalorder %s199, %s200
      %p214 = scmp.eq.s32.totalorder %s25, 2
      %p215 = por %p213, %p214
      %p217 = scmp.ne.s32.totalorder %s200, %s216
      %p218 = scmp.eq.s32.totalorder %s25, 0
      %p219 = por %p217, %p218
      %s220 = ssub.s32 %s19, %s26
      %p221 = scmp.eq.s32.totalorder %s220, 0
      %s223 = sadd.s32 %s222, 1
      %s224 = scalar_select %p221, %s222, %s223
      %p227 = pneg %p221
      %p228 = scmp.eq.s32.totalorder %s19, 2
      %p229 = por %p227, %p228
      %p230 = scmp.ne.s32.totalorder %s222, %s225
      %p231 = scmp.eq.s32.totalorder %s19, 0
      %p232 = por %p230, %p231
      %p233 = scmp.ne.s32.totalorder %s222, %s225
      %p234 = scmp.eq.s32.totalorder %s24, 2
      %p235 = por %p233, %p234
      %p236 = scmp.ne.s32.totalorder %s225, %s226
      %p237 = scmp.eq.s32.totalorder %s24, 0
      %p238 = por %p236, %p237
      %p239 = scmp.ne.s32.totalorder %s225, %s226
      %p240 = scmp.eq.s32.totalorder %s25, 2
      %p241 = por %p239, %p240
      %p243 = scmp.ne.s32.totalorder %s226, %s242
      %p244 = scmp.eq.s32.totalorder %s25, 0
      %p245 = por %p243, %p244
      %s247 = sadd.s32 %s246, 1
      %p250 = scmp.eq.s32.totalorder %s19, 2
      %p251 = scmp.ne.s32.totalorder %s246, %s248
      %p252 = scmp.eq.s32.totalorder %s19, 0
      %p253 = por %p251, %p252
      %p254 = scmp.ne.s32.totalorder %s246, %s248
      %p255 = scmp.eq.s32.totalorder %s24, 2
      %p256 = por %p254, %p255
      %p257 = scmp.ne.s32.totalorder %s248, %s249
      %p258 = scmp.eq.s32.totalorder %s24, 0
      %p259 = por %p257, %p258
      %p260 = scmp.ne.s32.totalorder %s248, %s249
      %p261 = scmp.eq.s32.totalorder %s25, 2
      %p262 = por %p260, %p261
      %p264 = scmp.ne.s32.totalorder %s249, %s263
      %p265 = scmp.eq.s32.totalorder %s25, 0
      %p266 = por %p264, %p265
      %s267 = ssub.s32 %s19, %s26
      %p268 = scmp.eq.s32.totalorder %s267, 0
      %s270 = sadd.s32 %s269, 1
      %s271 = scalar_select %p268, %s269, %s270
      %p274 = pneg %p268
      %p275 = scmp.eq.s32.totalorder %s19, 2
      %p276 = por %p274, %p275
      %p277 = scmp.ne.s32.totalorder %s269, %s272
      %p278 = scmp.eq.s32.totalorder %s19, 0
      %p279 = por %p277, %p278
      %p280 = scmp.ne.s32.totalorder %s269, %s272
      %p281 = scmp.eq.s32.totalorder %s24, 2
      %p282 = por %p280, %p281
      %p283 = scmp.ne.s32.totalorder %s272, %s273
      %p284 = scmp.eq.s32.totalorder %s24, 0
      %p285 = por %p283, %p284
      %p286 = scmp.ne.s32.totalorder %s272, %s273
      %p287 = scmp.eq.s32.totalorder %s25, 2
      %p288 = por %p286, %p287
      %p290 = scmp.ne.s32.totalorder %s273, %s289
      %p291 = scmp.eq.s32.totalorder %s25, 0
      %p292 = por %p290, %p291
      %s293 = ssub.s32 %s19, %s26
      %p294 = scmp.eq.s32.totalorder %s293, 0
      %s296 = sadd.s32 %s295, 1
      %s297 = scalar_select %p294, %s295, %s296
      %p300 = pneg %p294
      %p301 = scmp.eq.s32.totalorder %s19, 2
      %p302 = por %p300, %p301
      %p303 = scmp.ne.s32.totalorder %s295, %s298
      %p304 = scmp.eq.s32.totalorder %s19, 0
      %p305 = por %p303, %p304
      %p306 = scmp.ne.s32.totalorder %s295, %s298
      %p307 = scmp.eq.s32.totalorder %s24, 2
      %p308 = por %p306, %p307
      %p309 = scmp.ne.s32.totalorder %s298, %s299
      %p310 = scmp.eq.s32.totalorder %s24, 0
      %p311 = por %p309, %p310
      %p312 = scmp.ne.s32.totalorder %s298, %s299
      %p313 = scmp.eq.s32.totalorder %s25, 2
      %p314 = por %p312, %p313
      %p316 = scmp.ne.s32.totalorder %s299, %s315
      %p317 = scmp.eq.s32.totalorder %s25, 0
      %p318 = por %p316, %p317
      %p319 = scmp.le.s32.totalorder 1, %s19
      %p320 = scmp.lt.s32.totalorder %s19, 4
      %p321 = pnand %p319, %p320
      %p322 = pneg %p321
      // Predicated region
      $region9: #{encoder_forward.1} parent=5 // pred_check
        _
      $region10: #{encoder_forward.1} parent=5 // pred_check_branch
        %324 = sbr.rel (%p321) target = $region12
      $region11: #{encoder_forward.1} parent=5 // pred_region
        %s325 = ssub.s32 %s19, 1
        // Predicated region
        $region13: #{encoder_forward.1} parent=11 // pred_check
          %p326 = pneg %p40
        $region14: #{encoder_forward.1} parent=11 // pred_check_branch
          %328 = sbr.rel (%p326) target = $region16
        $region15: #{encoder_forward.1} parent=11 // pred_region
          _
        $region16: #{encoder_forward.1} parent=11 // pred_fallthru
          _
        // Predicated region
        $region17: #{encoder_forward.1} parent=11 // pred_check
          %p329 = pneg %p61
        $region18: #{encoder_forward.1} parent=11 // pred_check_branch
          %331 = sbr.rel (%p329) target = $region20
        $region19: #{encoder_forward.1} parent=11 // pred_region
          _
        $region20: #{encoder_forward.1} parent=11 // pred_fallthru
          _
        // Predicated region
        $region21: #{encoder_forward.1} parent=11 // pred_check
          %p332 = pneg %p82
        $region22: #{encoder_forward.1} parent=11 // pred_check_branch
          %334 = sbr.rel (%p332) target = $region24
        $region23: #{encoder_forward.1} parent=11 // pred_region
          %s336 = ssub.s32 16, 16
          %337 = vsyncadd [#allocation4], %s336
          %s339 = sshll.u32 %s2, 4
          %s340 = int_to_ptr.vmem [resolvable:$true] %s339
          %342 = dma.vmem_to_smem %s340, 16, [#allocation3], [#allocation4]
        $region24: #{encoder_forward.1} parent=11 // pred_fallthru
          _
        // Predicated region
        $region25: #{encoder_forward.1} parent=11 // pred_check
          %p343 = pneg %p259
        $region26: #{encoder_forward.1} parent=11 // pred_check_branch
          %345 = sbr.rel (%p343) target = $region28
        $region27: #{encoder_forward.1} parent=11 // pred_region
          _
        $region28: #{encoder_forward.1} parent=11 // pred_fallthru
          _
      $region12: #{encoder_forward.1} parent=5 // pred_fallthru
        _
      %p346 = scmp.lt.s32.totalorder %s19, 3
      // Predicated region
      $region29: #{encoder_forward.1} parent=5 // pred_check
        %p347 = pneg %p346
      $region30: #{encoder_forward.1} parent=5 // pred_check_branch
        %349 = sbr.rel (%p347) target = $region32
      $region31: #{encoder_forward.1} parent=5 // pred_region
        // Predicated region
        $region33: #{encoder_forward.1} parent=31 // pred_check
          %p350 = pneg %p102
        $region34: #{encoder_forward.1} parent=31 // pred_check_branch
          %352 = sbr.rel (%p350) target = $region36
        $region35: #{encoder_forward.1} parent=31 // pred_region
          %p353 = scmp.lt.s32.totalorder %s19, 2
          %s354 = scalar_select %p353, %s19, 2
          %s355 = smul.addr %s354, 16
          %s356 = smul.addr %s355, 8
          %s357 = scalar_lea.vmem %s3, %s356
        $region36: #{encoder_forward.1} parent=31 // pred_fallthru
          _
        // Predicated region
        $region37: #{encoder_forward.1} parent=31 // pred_check
          %p358 = pneg %p128
        $region38: #{encoder_forward.1} parent=31 // pred_check_branch
          %360 = sbr.rel (%p358) target = $region40
        $region39: #{encoder_forward.1} parent=31 // pred_region
          %p361 = scmp.lt.s32.totalorder %s19, 2
          %s362 = scalar_select %p361, %s19, 2
          %s363 = scalar_lea.vmem %s4, %s362
        $region40: #{encoder_forward.1} parent=31 // pred_fallthru
          _
        // Predicated region
        $region41: #{encoder_forward.1} parent=31 // pred_check
          %p364 = pneg %p154
        $region42: #{encoder_forward.1} parent=31 // pred_check_branch
          %366 = sbr.rel (%p364) target = $region44
        $region43: #{encoder_forward.1} parent=31 // pred_region
          %p367 = scmp.lt.s32.totalorder %s19, 2
          %s368 = scalar_select %p367, %s19, 2
          %s369 = scalar_lea.vmem %s5, %s368
        $region44: #{encoder_forward.1} parent=31 // pred_fallthru
          _
        // Predicated region
        $region45: #{encoder_forward.1} parent=31 // pred_check
          %p370 = pneg %p180
        $region46: #{encoder_forward.1} parent=31 // pred_check_branch
          %372 = sbr.rel (%p370) target = $region48
        $region47: #{encoder_forward.1} parent=31 // pred_region
          %p373 = scmp.lt.s32.totalorder %s19, 2
          %s374 = scalar_select %p373, %s19, 2
          %s375 = smul.addr %s374, 16
          %s376 = smul.addr %s375, 8
          %s377 = scalar_lea.vmem %s6, %s376
        $region48: #{encoder_forward.1} parent=31 // pred_fallthru
          _
        // Predicated region
        $region49: #{encoder_forward.1} parent=31 // pred_check
          %p378 = pneg %p206
        $region50: #{encoder_forward.1} parent=31 // pred_check_branch
          %380 = sbr.rel (%p378) target = $region52
        $region51: #{encoder_forward.1} parent=31 // pred_region
          %p381 = scmp.lt.s32.totalorder %s19, 2
          %s382 = scalar_select %p381, %s19, 2
          %s383 = scalar_lea.vmem %s7, %s382
        $region52: #{encoder_forward.1} parent=31 // pred_fallthru
          _
        // Predicated region
        $region53: #{encoder_forward.1} parent=31 // pred_check
          %p384 = pneg %p232
        $region54: #{encoder_forward.1} parent=31 // pred_check_branch
          %386 = sbr.rel (%p384) target = $region56
        $region55: #{encoder_forward.1} parent=31 // pred_region
          %p387 = scmp.lt.s32.totalorder %s19, 2
          %s388 = scalar_select %p387, %s19, 2
          %s389 = scalar_lea.vmem %s8, %s388
        $region56: #{encoder_forward.1} parent=31 // pred_fallthru
          _
      $region32: #{encoder_forward.1} parent=5 // pred_fallthru
        _
      %p390 = scmp.le.s32.totalorder 1, %s19
      %p391 = scmp.lt.s32.totalorder %s19, 4
      %p392 = pnand %p390, %p391
      %p393 = pneg %p392
      // Predicated region
      $region57: #{encoder_forward.1} parent=5 // pred_check
        _
      $region58: #{encoder_forward.1} parent=5 // pred_check_branch
        %395 = sbr.rel (%p392) target = $region60
      $region59: #{encoder_forward.1} parent=5 // pred_region
        %s396 = ssub.s32 %s19, 1
        // Predicated region
        $region61: #{encoder_forward.1} parent=59 // pred_check
          %p397 = pneg %p82
        $region62: #{encoder_forward.1} parent=59 // pred_check_branch
          %399 = sbr.rel (%p397) target = $region64
        $region63: #{encoder_forward.1} parent=59 // pred_region
          %400 = dma.done [#allocation4], 16
        $region64: #{encoder_forward.1} parent=59 // pred_fallthru
          _
        %401 = sfence
        %p402 = pneg %p40
        %p403 = pneg %p37
        %p404 = pneg %p61
        %p405 = pneg %p58
        %p406 = pneg %p82
        %p407 = pneg %p79
        %p408 = scmp.lt.s32.totalorder %s24, 2
        %s409 = scalar_select %p408, %s24, 2
        %s410 = smul.addr %s409, 16
        %s411 = smul.addr %s410, 8
        %s412 = scalar_lea.vmem %s3, %s411
        %p413 = pneg %p108
        %p414 = pneg %p105
        %p415 = scmp.lt.s32.totalorder %s24, 2
        %s416 = scalar_select %p415, %s24, 2
        %s417 = scalar_lea.vmem %s4, %s416
        %p418 = pneg %p134
        %p419 = pneg %p131
        %p420 = scmp.lt.s32.totalorder %s24, 2
        %s421 = scalar_select %p420, %s24, 2
        %s422 = scalar_lea.vmem %s5, %s421
        %p423 = pneg %p160
        %p424 = pneg %p157
        %p425 = scmp.lt.s32.totalorder %s24, 2
        %s426 = scalar_select %p425, %s24, 2
        %s427 = smul.addr %s426, 16
        %s428 = smul.addr %s427, 8
        %s429 = scalar_lea.vmem %s6, %s428
        %p430 = pneg %p186
        %p431 = pneg %p183
        %p432 = scmp.lt.s32.totalorder %s24, 2
        %s433 = scalar_select %p432, %s24, 2
        %s434 = scalar_lea.vmem %s7, %s433
        %p435 = pneg %p212
        %p436 = pneg %p209
        %p437 = scmp.lt.s32.totalorder %s24, 2
        %s438 = scalar_select %p437, %s24, 2
        %s439 = scalar_lea.vmem %s8, %s438
        %p440 = pneg %p238
        %p441 = pneg %p235
        %p442 = pneg %p259
        %p443 = pneg %p256
        %p444 = pneg %p285
        %p445 = pneg %p282
        %s446 = sand.u32 %s272, 1
        %s447 = sand.u32 %s272, 1
        %s448 = smul.addr %s447, 128
        %s449 = scalar_lea.vmem [#allocation5], %s448
        %p450 = pneg %p311
        %p451 = pneg %p308
        %s452 = sand.u32 %s298, 1
        %s453 = sand.u32 %s298, 1
        %s454 = smul.addr %s453, 16
        %s455 = scalar_lea.vmem [#allocation6], %s454
        %p456 = scmp.lt.s32.totalorder %s24, 2
        %s457 = scalar_select %p456, %s24, 2
        %s458 = smul.addr %s457, 16
        %s459 = smul.addr %s458, 8
        %s460 = scalar_lea.vmem %s3, %s459
        %p461 = scmp.lt.s32.totalorder %s24, 2
        %s462 = scalar_select %p461, %s24, 2
        %s463 = scalar_lea.vmem %s4, %s462
        %p464 = scmp.lt.s32.totalorder %s24, 2
        %s465 = scalar_select %p464, %s24, 2
        %s466 = scalar_lea.vmem %s5, %s465
        %p467 = scmp.lt.s32.totalorder %s24, 2
        %s468 = scalar_select %p467, %s24, 2
        %s469 = smul.addr %s468, 16
        %s470 = smul.addr %s469, 8
        %s471 = scalar_lea.vmem %s6, %s470
        %p472 = scmp.lt.s32.totalorder %s24, 2
        %s473 = scalar_select %p472, %s24, 2
        %s474 = scalar_lea.vmem %s7, %s473
        %p475 = scmp.lt.s32.totalorder %s24, 2
        %s476 = scalar_select %p475, %s24, 2
        %s477 = scalar_lea.vmem %s8, %s476
        %p479 = scmp.eq.s32.totalorder %s24, 0
        // Predicated region
        $region65: #{encoder_forward.1} parent=59 // pred_check
          %p480 = pneg %p479
        $region66: #{encoder_forward.1} parent=59 // pred_check_branch
          %482 = sbr.rel (%p480) target = $region68
        $region67: #{encoder_forward.1} parent=59 // pred_region
          %v483 = vld [vmem:[%s1] sm:$0xff]
          %v484 = vld [vmem:[%s1 + $0x8] sm:$0xff]
          %v485 = vld [vmem:[%s1 + $0x10] sm:$0xff]
          %v486 = vld [vmem:[%s1 + $0x18] sm:$0xff]
          %v487 = vld [vmem:[%s1 + $0x20] sm:$0xff]
          %v488 = vld [vmem:[%s1 + $0x28] sm:$0xff]
          %v489 = vld [vmem:[%s1 + $0x30] sm:$0xff]
          %v490 = vld [vmem:[%s1 + $0x38] sm:$0xff]
          %v491 = vld [vmem:[%s1 + $0x40] sm:$0xff]
          %v492 = vld [vmem:[%s1 + $0x48] sm:$0xff]
          %v493 = vld [vmem:[%s1 + $0x50] sm:$0xff]
          %v494 = vld [vmem:[%s1 + $0x58] sm:$0xff]
          %v495 = vld [vmem:[%s1 + $0x60] sm:$0xff]
          %v496 = vld [vmem:[%s1 + $0x68] sm:$0xff]
          %v497 = vld [vmem:[%s1 + $0x70] sm:$0xff]
          %v498 = vld [vmem:[%s1 + $0x78] sm:$0xff]
          %499 = vst [vmem:[#allocation2] sm:$0xff] %v483
          %500 = vst [vmem:[#allocation2 + $0x8] sm:$0xff] %v484
          %501 = vst [vmem:[#allocation2 + $0x10] sm:$0xff] %v485
          %502 = vst [vmem:[#allocation2 + $0x18] sm:$0xff] %v486
          %503 = vst [vmem:[#allocation2 + $0x20] sm:$0xff] %v487
          %504 = vst [vmem:[#allocation2 + $0x28] sm:$0xff] %v488
          %505 = vst [vmem:[#allocation2 + $0x30] sm:$0xff] %v489
          %506 = vst [vmem:[#allocation2 + $0x38] sm:$0xff] %v490
          %507 = vst [vmem:[#allocation2 + $0x40] sm:$0xff] %v491
          %508 = vst [vmem:[#allocation2 + $0x48] sm:$0xff] %v492
          %509 = vst [vmem:[#allocation2 + $0x50] sm:$0xff] %v493
          %510 = vst [vmem:[#allocation2 + $0x58] sm:$0xff] %v494
          %511 = vst [vmem:[#allocation2 + $0x60] sm:$0xff] %v495
          %512 = vst [vmem:[#allocation2 + $0x68] sm:$0xff] %v496
          %513 = vst [vmem:[#allocation2 + $0x70] sm:$0xff] %v497
          %514 = vst [vmem:[#allocation2 + $0x78] sm:$0xff] %v498
        $region68: #{encoder_forward.1} parent=59 // pred_fallthru
          _
        %v515 = vld [vmem:[#allocation2] sm:$0xff]
        %v516 = vld [vmem:[#allocation2 + $0x8] sm:$0xff]
        %v517 = vld [vmem:[#allocation2 + $0x10] sm:$0xff]
        %v518 = vld [vmem:[#allocation2 + $0x18] sm:$0xff]
        %v519 = vld [vmem:[#allocation2 + $0x20] sm:$0xff]
        %v520 = vld [vmem:[#allocation2 + $0x28] sm:$0xff]
        %v521 = vld [vmem:[#allocation2 + $0x30] sm:$0xff]
        %v522 = vld [vmem:[#allocation2 + $0x38] sm:$0xff]
        %v523 = vld [vmem:[#allocation2 + $0x40] sm:$0xff]
        %v524 = vld [vmem:[#allocation2 + $0x48] sm:$0xff]
        %v525 = vld [vmem:[#allocation2 + $0x50] sm:$0xff]
        %v526 = vld [vmem:[#allocation2 + $0x58] sm:$0xff]
        %v527 = vld [vmem:[#allocation2 + $0x60] sm:$0xff]
        %v528 = vld [vmem:[#allocation2 + $0x68] sm:$0xff]
        %v529 = vld [vmem:[#allocation2 + $0x70] sm:$0xff]
        %v530 = vld [vmem:[#allocation2 + $0x78] sm:$0xff]
        %v531 = vlaneseq
        %v532 = vshrl.u32 %v531, 7
        %v533 = vadd.s32 %v532, 8
        %v534 = vadd.s32 %v532, 16
        %v535 = vadd.s32 %v532, 24
        %v536 = vadd.s32 %v532, 32
        %v537 = vadd.s32 %v532, 40
        %v538 = vadd.s32 %v532, 48
        %v539 = vadd.s32 %v532, 56
        %v540 = vadd.s32 %v532, 64
        %v541 = vadd.s32 %v532, 72
        %v542 = vadd.s32 %v532, 80
        %v543 = vadd.s32 %v532, 88
        %v544 = vadd.s32 %v532, 96
        %v545 = vadd.s32 %v532, 104
        %v546 = vadd.s32 %v532, 112
        %v547 = vadd.s32 %v532, 120
        %vm548 = vcmp.lt.s32.totalorder %v532, 16
        %vm549 = vcmp.lt.s32.totalorder %v533, 16
        %vm550 = vcmp.lt.s32.totalorder %v534, 16
        %vm551 = vcmp.lt.s32.totalorder %v535, 16
        %vm552 = vcmp.lt.s32.totalorder %v536, 16
        %vm553 = vcmp.lt.s32.totalorder %v537, 16
        %vm554 = vcmp.lt.s32.totalorder %v538, 16
        %vm555 = vcmp.lt.s32.totalorder %v539, 16
        %vm556 = vcmp.lt.s32.totalorder %v540, 16
        %vm557 = vcmp.lt.s32.totalorder %v541, 16
        %vm558 = vcmp.lt.s32.totalorder %v542, 16
        %vm559 = vcmp.lt.s32.totalorder %v543, 16
        %vm560 = vcmp.lt.s32.totalorder %v544, 16
        %vm561 = vcmp.lt.s32.totalorder %v545, 16
        %vm562 = vcmp.lt.s32.totalorder %v546, 16
        %vm563 = vcmp.lt.s32.totalorder %v547, 16
        %v564 = vsel %vm548, 1, 0
        %v565 = vsel %vm549, 1, 0
        %v566 = vsel %vm550, 1, 0
        %v567 = vsel %vm551, 1, 0
        %v568 = vsel %vm552, 1, 0
        %v569 = vsel %vm553, 1, 0
        %v570 = vsel %vm554, 1, 0
        %v571 = vsel %vm555, 1, 0
        %v572 = vsel %vm556, 1, 0
        %v573 = vsel %vm557, 1, 0
        %v574 = vsel %vm558, 1, 0
        %v575 = vsel %vm559, 1, 0
        %v576 = vsel %vm560, 1, 0
        %v577 = vsel %vm561, 1, 0
        %v578 = vsel %vm562, 1, 0
        %v579 = vsel %vm563, 1, 0
        %v580 = vcvt.s32.f32 %v564
        %v581 = vcvt.s32.f32 %v565
        %v582 = vcvt.s32.f32 %v566
        %v583 = vcvt.s32.f32 %v567
        %v584 = vcvt.s32.f32 %v568
        %v585 = vcvt.s32.f32 %v569
        %v586 = vcvt.s32.f32 %v570
        %v587 = vcvt.s32.f32 %v571
        %v588 = vcvt.s32.f32 %v572
        %v589 = vcvt.s32.f32 %v573
        %v590 = vcvt.s32.f32 %v574
        %v591 = vcvt.s32.f32 %v575
        %v592 = vcvt.s32.f32 %v576
        %v593 = vcvt.s32.f32 %v577
        %v594 = vcvt.s32.f32 %v578
        %v595 = vcvt.s32.f32 %v579
        %s596 = sld [smem:[#allocation3 + %s24]]
        %s597 = sadd.f32 %s596, 1.0
        %v598 = vstv %s597
        %v599 = vmul.f32 %v598, %v515
        %v600 = vmul.f32 %v598, %v516
        %v601 = vmul.f32 %v598, %v517
        %v602 = vmul.f32 %v598, %v518
        %v603 = vmul.f32 %v598, %v519
        %v604 = vmul.f32 %v598, %v520
        %v605 = vmul.f32 %v598, %v521
        %v606 = vmul.f32 %v598, %v522
        %v607 = vmul.f32 %v598, %v523
        %v608 = vmul.f32 %v598, %v524
        %v609 = vmul.f32 %v598, %v525
        %v610 = vmul.f32 %v598, %v526
        %v611 = vmul.f32 %v598, %v527
        %v612 = vmul.f32 %v598, %v528
        %v613 = vmul.f32 %v598, %v529
        %v614 = vmul.f32 %v598, %v530
        %v615 = vld [vmem:[%s0] sm:$0xf]
        %v616 = vld [vmem:[%s0 + $0x4] sm:$0xf]
        %v617 = vld [vmem:[%s0 + $0x8] sm:$0xf]
        %v618 = vld [vmem:[%s0 + $0xc] sm:$0xf]
        %v619 = vld [vmem:[%s0 + $0x10] sm:$0xf]
        %v620 = vld [vmem:[%s0 + $0x14] sm:$0xf]
        %v621 = vld [vmem:[%s0 + $0x18] sm:$0xf]
        %v622 = vld [vmem:[%s0 + $0x1c] sm:$0xf]
        %v623 = vld [vmem:[%s0 + $0x20] sm:$0xf]
        %v624 = vld [vmem:[%s0 + $0x24] sm:$0xf]
        %v625 = vld [vmem:[%s0 + $0x28] sm:$0xf]
        %v626 = vld [vmem:[%s0 + $0x2c] sm:$0xf]
        %v627 = vld [vmem:[%s0 + $0x30] sm:$0xf]
        %v628 = vld [vmem:[%s0 + $0x34] sm:$0xf]
        %v629 = vld [vmem:[%s0 + $0x38] sm:$0xf]
        %v630 = vld [vmem:[%s0 + $0x3c] sm:$0xf]
        %v631 = vpack.c.bf16 %v516, %v515
        %v632 = vpack.c.bf16 %v518, %v517
        %v633 = vpack.c.bf16 %v520, %v519
        %v634 = vpack.c.bf16 %v522, %v521
        %v635 = vpack.c.bf16 %v524, %v523
        %v636 = vpack.c.bf16 %v526, %v525
        %v637 = vpack.c.bf16 %v528, %v527
        %v638 = vpack.c.bf16 %v530, %v529
        %v655 = vunpack.c.l.b16 %v615
        %v656 = vunpack.c.l.b16 %v616
        %v657 = vunpack.c.l.b16 %v617
        %v658 = vunpack.c.l.b16 %v618
        %v659 = vunpack.c.l.b16 %v619
        %v660 = vunpack.c.l.b16 %v620
        %v661 = vunpack.c.l.b16 %v621
        %v662 = vunpack.c.l.b16 %v622
        %v663 = vunpack.c.l.b16 %v623
        %v664 = vunpack.c.l.b16 %v624
        %v665 = vunpack.c.l.b16 %v625
        %v666 = vunpack.c.l.b16 %v626
        %v667 = vunpack.c.l.b16 %v627
        %v668 = vunpack.c.l.b16 %v628
        %v669 = vunpack.c.l.b16 %v629
        %v670 = vunpack.c.l.b16 %v630
        %v671 = vpack.c.b16 %v656, %v655
        %v672 = vpack.c.b16 %v658, %v657
        %v673 = vpack.c.b16 %v660, %v659
        %v674 = vpack.c.b16 %v662, %v661
        %v675 = vpack.c.b16 %v664, %v663
        %v676 = vpack.c.b16 %v666, %v665
        %v677 = vpack.c.b16 %v668, %v667
        %v678 = vpack.c.b16 %v670, %v669
        %687 = vmatprep.subr.bf16.mxu0 0
        %688 = vmatpush1.bf16.msra.mxu0 %v631
        %689 = vmatprep.subr.bf16.mxu0 0
        %690 = vmatpush1.bf16.msra.mxu0 %v632
        %691 = vmatprep.subr.bf16.mxu0 0
        %692 = vmatpush1.bf16.msra.mxu0 %v633
        %693 = vmatprep.subr.bf16.mxu0 0
        %694 = vmatpush1.bf16.msra.mxu0 %v634
        %695 = vmatprep.subr.bf16.mxu0 0
        %696 = vmatpush1.bf16.msra.mxu0 %v635
        %697 = vmatprep.subr.bf16.mxu0 0
        %698 = vmatpush1.bf16.msra.mxu0 %v636
        %699 = vmatprep.subr.bf16.mxu0 0
        %700 = vmatpush1.bf16.msra.mxu0 %v637
        %701 = vmatprep.subr.bf16.mxu0 0
        %702 = vmatpush1.bf16.msra.mxu0 %v638
        %703 = vmatprep.subr.bf16.mxu0 0
        %704 = vmatpush1.bf16.msra.mxu0 0
        %705 = vmatprep.subr.bf16.mxu0 0
        %706 = vmatpush1.bf16.msra.mxu0 0
        %707 = vmatprep.subr.bf16.mxu0 0
        %708 = vmatpush1.bf16.msra.mxu0 0
        %709 = vmatprep.subr.bf16.mxu0 0
        %710 = vmatpush1.bf16.msra.mxu0 0
        %711 = vmatprep.subr.bf16.mxu0 0
        %712 = vmatpush1.bf16.msra.mxu0 0
        %713 = vmatprep.subr.bf16.mxu0 0
        %714 = vmatpush1.bf16.msra.mxu0 0
        %715 = vmatprep.subr.bf16.mxu0 0
        %716 = vmatpush1.bf16.msra.mxu0 0
        %717 = vmatprep.subr.bf16.mxu0 0
        %718 = vmatpush1.bf16.msra.mxu0 0
        %719 = vmatprep.mubr.bf16.mxu0 0
        %720 = vmatmul.mubr.bf16.gmra.mrb[0].mxu0 %v671
        %v721 = vpop.f32.mrb[0].mxu0
        %v722 = vadd.f32 0.0, %v721
        %v723 = vpop.f32.mrb[0].mxu0
        %v724 = vpop.f32.mrb[0].mxu0
        %v725 = vadd.f32 0.0, %v724
        %v726 = vpop.f32.mrb[0].mxu0
        %727 = vmatprep.mubr.bf16.mxu0 0
        %728 = vmatmul.mubr.bf16.gmra.mrb[0].mxu0 %v672
        %v729 = vpop.f32.mrb[0].mxu0
        %v730 = vadd.f32 0.0, %v729
        %v731 = vpop.f32.mrb[0].mxu0
        %v732 = vpop.f32.mrb[0].mxu0
        %v733 = vadd.f32 0.0, %v732
        %v734 = vpop.f32.mrb[0].mxu0
        %735 = vmatprep.mubr.bf16.mxu0 0
        %736 = vmatmul.mubr.bf16.gmra.mrb[0].mxu0 %v673
        %v737 = vpop.f32.mrb[0].mxu0
        %v738 = vadd.f32 0.0, %v737
        %v739 = vpop.f32.mrb[0].mxu0
        %v740 = vpop.f32.mrb[0].mxu0
        %v741 = vadd.f32 0.0, %v740
        %v742 = vpop.f32.mrb[0].mxu0
        %743 = vmatprep.mubr.bf16.mxu0 0
        %744 = vmatmul.mubr.bf16.gmra.mrb[0].mxu0 %v674
        %v745 = vpop.f32.mrb[0].mxu0
        %v746 = vadd.f32 0.0, %v745
        %v747 = vpop.f32.mrb[0].mxu0
        %v748 = vpop.f32.mrb[0].mxu0
        %v749 = vadd.f32 0.0, %v748
        %v750 = vpop.f32.mrb[0].mxu0
        %751 = vmatprep.mubr.bf16.mxu0 0
        %752 = vmatmul.mubr.bf16.gmra.mrb[0].mxu0 %v675
        %v753 = vpop.f32.mrb[0].mxu0
        %v754 = vadd.f32 0.0, %v753
        %v755 = vpop.f32.mrb[0].mxu0
        %v756 = vpop.f32.mrb[0].mxu0
        %v757 = vadd.f32 0.0, %v756
        %v758 = vpop.f32.mrb[0].mxu0
        %759 = vmatprep.mubr.bf16.mxu0 0
        %760 = vmatmul.mubr.bf16.gmra.mrb[0].mxu0 %v676
        %v761 = vpop.f32.mrb[0].mxu0
        %v762 = vadd.f32 0.0, %v761
        %v763 = vpop.f32.mrb[0].mxu0
        %v764 = vpop.f32.mrb[0].mxu0
        %v765 = vadd.f32 0.0, %v764
        %v766 = vpop.f32.mrb[0].mxu0
        %767 = vmatprep.mubr.bf16.mxu0 0
        %768 = vmatmul.mubr.bf16.gmra.mrb[0].mxu0 %v677
        %v769 = vpop.f32.mrb[0].mxu0
        %v770 = vadd.f32 0.0, %v769
        %v771 = vpop.f32.mrb[0].mxu0
        %v772 = vpop.f32.mrb[0].mxu0
        %v773 = vadd.f32 0.0, %v772
        %v774 = vpop.f32.mrb[0].mxu0
        %775 = vmatprep.mubr.bf16.mxu0 0
        %776 = vmatmul.mubr.bf16.gmra.mrb[0].mxu0 %v678
        %v777 = vpop.f32.mrb[0].mxu0
        %v778 = vadd.f32 0.0, %v777
        %v779 = vpop.f32.mrb[0].mxu0
        %v780 = vpop.f32.mrb[0].mxu0
        %v781 = vadd.f32 0.0, %v780
        %v782 = vpop.f32.mrb[0].mxu0
        %783 = vdwg.mxu0
        %v784 = vadd.f32 %v599, %v722
        %v785 = vadd.f32 %v600, %v725
        %v786 = vadd.f32 %v601, %v730
        %v787 = vadd.f32 %v602, %v733
        %v788 = vadd.f32 %v603, %v738
        %v789 = vadd.f32 %v604, %v741
        %v790 = vadd.f32 %v605, %v746
        %v791 = vadd.f32 %v606, %v749
        %v792 = vadd.f32 %v607, %v754
        %v793 = vadd.f32 %v608, %v757
        %v794 = vadd.f32 %v609, %v762
        %v795 = vadd.f32 %v610, %v765
        %v796 = vadd.f32 %v611, %v770
        %v797 = vadd.f32 %v612, %v773
        %v798 = vadd.f32 %v613, %v778
        %v799 = vadd.f32 %v614, %v781
        %v800 = vld [vmem:[%s460] sm:$0xff]
        %v801 = vld [vmem:[%s460 + $0x8] sm:$0xff]
        %v802 = vld [vmem:[%s460 + $0x10] sm:$0xff]
        %v803 = vld [vmem:[%s460 + $0x18] sm:$0xff]
        %v804 = vld [vmem:[%s460 + $0x20] sm:$0xff]
        %v805 = vld [vmem:[%s460 + $0x28] sm:$0xff]
        %v806 = vld [vmem:[%s460 + $0x30] sm:$0xff]
        %v807 = vld [vmem:[%s460 + $0x38] sm:$0xff]
        %v808 = vld [vmem:[%s460 + $0x40] sm:$0xff]
        %v809 = vld [vmem:[%s460 + $0x48] sm:$0xff]
        %v810 = vld [vmem:[%s460 + $0x50] sm:$0xff]
        %v811 = vld [vmem:[%s460 + $0x58] sm:$0xff]
        %v812 = vld [vmem:[%s460 + $0x60] sm:$0xff]
        %v813 = vld [vmem:[%s460 + $0x68] sm:$0xff]
        %v814 = vld [vmem:[%s460 + $0x70] sm:$0xff]
        %v815 = vld [vmem:[%s460 + $0x78] sm:$0xff]
        %816 = vmatprep.subr.mxu0 0.0
        %817 = vmatpush1.msra.mxu0 %v800
        %818 = vmatprep.subr.mxu0 0.0
        %819 = vmatpush1.msra.mxu0 %v801
        %820 = vmatprep.subr.mxu0 0.0
        %821 = vmatpush1.msra.mxu0 %v802
        %822 = vmatprep.subr.mxu0 0.0
        %823 = vmatpush1.msra.mxu0 %v803
        %824 = vmatprep.subr.mxu0 0.0
        %825 = vmatpush1.msra.mxu0 %v804
        %826 = vmatprep.subr.mxu0 0.0
        %827 = vmatpush1.msra.mxu0 %v805
        %828 = vmatprep.subr.mxu0 0.0
        %829 = vmatpush1.msra.mxu0 %v806
        %830 = vmatprep.subr.mxu0 0.0
        %831 = vmatpush1.msra.mxu0 %v807
        %832 = vmatprep.subr.mxu0 0.0
        %833 = vmatpush1.msra.mxu0 %v808
        %834 = vmatprep.subr.mxu0 0.0
        %835 = vmatpush1.msra.mxu0 %v809
        %836 = vmatprep.subr.mxu0 0.0
        %837 = vmatpush1.msra.mxu0 %v810
        %838 = vmatprep.subr.mxu0 0.0
        %839 = vmatpush1.msra.mxu0 %v811
        %840 = vmatprep.subr.mxu0 0.0
        %841 = vmatpush1.msra.mxu0 %v812
        %842 = vmatprep.subr.mxu0 0.0
        %843 = vmatpush1.msra.mxu0 %v813
        %844 = vmatprep.subr.mxu0 0.0
        %845 = vmatpush1.msra.mxu0 %v814
        %846 = vmatprep.subr.mxu0 0.0
        %847 = vmatpush1.msra.mxu0 %v815
        %848 = vmatprep.subr.mxu0 0.0
        %849 = vmatpush1.msra.mxu0 0.0
        %850 = vmatprep.subr.mxu0 0.0
        %851 = vmatpush1.msra.mxu0 0.0
        %852 = vmatprep.subr.mxu0 0.0
        %853 = vmatpush1.msra.mxu0 0.0
        %854 = vmatprep.subr.mxu0 0.0
        %855 = vmatpush1.msra.mxu0 0.0
        %856 = vmatprep.subr.mxu0 0.0
        %857 = vmatpush1.msra.mxu0 0.0
        %858 = vmatprep.subr.mxu0 0.0
        %859 = vmatpush1.msra.mxu0 0.0
        %860 = vmatprep.subr.mxu0 0.0
        %861 = vmatpush1.msra.mxu0 0.0
        %862 = vmatprep.subr.mxu0 0.0
        %863 = vmatpush1.msra.mxu0 0.0
        %864 = vmatprep.subr.mxu0 0.0
        %865 = vmatpush1.msra.mxu0 0.0
        %866 = vmatprep.subr.mxu0 0.0
        %867 = vmatpush1.msra.mxu0 0.0
        %868 = vmatprep.subr.mxu0 0.0
        %869 = vmatpush1.msra.mxu0 0.0
        %870 = vmatprep.subr.mxu0 0.0
        %871 = vmatpush1.msra.mxu0 0.0
        %872 = vmatprep.subr.mxu0 0.0
        %873 = vmatpush1.msra.mxu0 0.0
        %874 = vmatprep.subr.mxu0 0.0
        %875 = vmatpush1.msra.mxu0 0.0
        %876 = vmatprep.subr.mxu0 0.0
        %877 = vmatpush1.msra.mxu0 0.0
        %878 = vmatprep.subr.mxu0 0.0
        %879 = vmatpush1.msra.mxu0 0.0
        %880 = vmatprep.mubr.f32.mxu0 0.0
        %881 = vmatmul.mubr.f32.gmra.mrb[0].mxu0 %v784
        %v882 = vpop.f32.mrb[0].mxu0
        %v883 = vadd.f32 0.0, %v882
        %v884 = vpop.f32.mrb[0].mxu0
        %885 = vmatprep.mubr.f32.mxu0 0.0
        %886 = vmatmul.mubr.f32.gmra.mrb[0].mxu0 %v785
        %v887 = vpop.f32.mrb[0].mxu0
        %v888 = vadd.f32 0.0, %v887
        %v889 = vpop.f32.mrb[0].mxu0
        %890 = vmatprep.mubr.f32.mxu0 0.0
        %891 = vmatmul.mubr.f32.gmra.mrb[0].mxu0 %v786
        %v892 = vpop.f32.mrb[0].mxu0
        %v893 = vadd.f32 0.0, %v892
        %v894 = vpop.f32.mrb[0].mxu0
        %895 = vmatprep.mubr.f32.mxu0 0.0
        %896 = vmatmul.mubr.f32.gmra.mrb[0].mxu0 %v787
        %v897 = vpop.f32.mrb[0].mxu0
        %v898 = vadd.f32 0.0, %v897
        %v899 = vpop.f32.mrb[0].mxu0
        %900 = vmatprep.mubr.f32.mxu0 0.0
        %901 = vmatmul.mubr.f32.gmra.mrb[0].mxu0 %v788
        %v902 = vpop.f32.mrb[0].mxu0
        %v903 = vadd.f32 0.0, %v902
        %v904 = vpop.f32.mrb[0].mxu0
        %905 = vmatprep.mubr.f32.mxu0 0.0
        %906 = vmatmul.mubr.f32.gmra.mrb[0].mxu0 %v789
        %v907 = vpop.f32.mrb[0].mxu0
        %v908 = vadd.f32 0.0, %v907
        %v909 = vpop.f32.mrb[0].mxu0
        %910 = vmatprep.mubr.f32.mxu0 0.0
        %911 = vmatmul.mubr.f32.gmra.mrb[0].mxu0 %v790
        %v912 = vpop.f32.mrb[0].mxu0
        %v913 = vadd.f32 0.0, %v912
        %v914 = vpop.f32.mrb[0].mxu0
        %915 = vmatprep.mubr.f32.mxu0 0.0
        %916 = vmatmul.mubr.f32.gmra.mrb[0].mxu0 %v791
        %v917 = vpop.f32.mrb[0].mxu0
        %v918 = vadd.f32 0.0, %v917
        %v919 = vpop.f32.mrb[0].mxu0
        %920 = vmatprep.mubr.f32.mxu0 0.0
        %921 = vmatmul.mubr.f32.gmra.mrb[0].mxu0 %v792
        %v922 = vpop.f32.mrb[0].mxu0
        %v923 = vadd.f32 0.0, %v922
        %v924 = vpop.f32.mrb[0].mxu0
        %925 = vmatprep.mubr.f32.mxu0 0.0
        %926 = vmatmul.mubr.f32.gmra.mrb[0].mxu0 %v793
        %v927 = vpop.f32.mrb[0].mxu0
        %v928 = vadd.f32 0.0, %v927
        %v929 = vpop.f32.mrb[0].mxu0
        %930 = vmatprep.mubr.f32.mxu0 0.0
        %931 = vmatmul.mubr.f32.gmra.mrb[0].mxu0 %v794
        %v932 = vpop.f32.mrb[0].mxu0
        %v933 = vadd.f32 0.0, %v932
        %v934 = vpop.f32.mrb[0].mxu0
        %935 = vmatprep.mubr.f32.mxu0 0.0
        %936 = vmatmul.mubr.f32.gmra.mrb[0].mxu0 %v795
        %v937 = vpop.f32.mrb[0].mxu0
        %v938 = vadd.f32 0.0, %v937
        %v939 = vpop.f32.mrb[0].mxu0
        %940 = vmatprep.mubr.f32.mxu0 0.0
        %941 = vmatmul.mubr.f32.gmra.mrb[0].mxu0 %v796
        %v942 = vpop.f32.mrb[0].mxu0
        %v943 = vadd.f32 0.0, %v942
        %v944 = vpop.f32.mrb[0].mxu0
        %945 = vmatprep.mubr.f32.mxu0 0.0
        %946 = vmatmul.mubr.f32.gmra.mrb[0].mxu0 %v797
        %v947 = vpop.f32.mrb[0].mxu0
        %v948 = vadd.f32 0.0, %v947
        %v949 = vpop.f32.mrb[0].mxu0
        %950 = vmatprep.mubr.f32.mxu0 0.0
        %951 = vmatmul.mubr.f32.gmra.mrb[0].mxu0 %v798
        %v952 = vpop.f32.mrb[0].mxu0
        %v953 = vadd.f32 0.0, %v952
        %v954 = vpop.f32.mrb[0].mxu0
        %955 = vmatprep.mubr.f32.mxu0 0.0
        %956 = vmatmul.mubr.f32.gmra.mrb[0].mxu0 %v799
        %v957 = vpop.f32.mrb[0].mxu0
        %v958 = vadd.f32 0.0, %v957
        %v959 = vpop.f32.mrb[0].mxu0
        %960 = vdwg.mxu0
        %v961 = vld [vmem:[%s463] sm:$0x1]
        %v962 = vld [vmem:[%s466] sm:$0x1]
        %v963 = vmul.f32 %v883, %v580
        %v964 = vmul.f32 %v888, %v581
        %v965 = vmul.f32 %v893, %v582
        %v966 = vmul.f32 %v898, %v583
        %v967 = vmul.f32 %v903, %v584
        %v968 = vmul.f32 %v908, %v585
        %v969 = vmul.f32 %v913, %v586
        %v970 = vmul.f32 %v918, %v587
        %v971 = vmul.f32 %v923, %v588
        %v972 = vmul.f32 %v928, %v589
        %v973 = vmul.f32 %v933, %v590
        %v974 = vmul.f32 %v938, %v591
        %v975 = vmul.f32 %v943, %v592
        %v976 = vmul.f32 %v948, %v593
        %v977 = vmul.f32 %v953, %v594
        %v978 = vmul.f32 %v958, %v595
        %v979 = vadd.f32 %v963, %v964
        %v980 = vadd.f32 %v979, %v965
        %v981 = vadd.f32 %v980, %v966
        %v982 = vadd.f32 %v981, %v967
        %v983 = vadd.f32 %v982, %v968
        %v984 = vadd.f32 %v983, %v969
        %v985 = vadd.f32 %v984, %v970
        %v986 = vadd.f32 %v985, %v971
        %v987 = vadd.f32 %v986, %v972
        %v988 = vadd.f32 %v987, %v973
        %v989 = vadd.f32 %v988, %v974
        %v990 = vadd.f32 %v989, %v975
        %v991 = vadd.f32 %v990, %v976
        %v992 = vadd.f32 %v991, %v977
        %v993 = vadd.f32 %v992, %v978
        %v994 = vrot.slane %v993, 4
        %v995 = vadd.f32 %v993, %v994
        %v996 = vrot.slane %v995, 2
        %v997 = vadd.f32 %v995, %v996
        %v998 = vrot.slane %v997, 1
        %v999 = vadd.f32 %v997, %v998
        %v1000 = vmul.f32 %v999, 0.0625
        %v1001 = vsub.f32 %v883, %v1000
        %v1002 = vsub.f32 %v888, %v1000
        %v1003 = vsub.f32 %v893, %v1000
        %v1004 = vsub.f32 %v898, %v1000
        %v1005 = vsub.f32 %v903, %v1000
        %v1006 = vsub.f32 %v908, %v1000
        %v1007 = vsub.f32 %v913, %v1000
        %v1008 = vsub.f32 %v918, %v1000
        %v1009 = vsub.f32 %v923, %v1000
        %v1010 = vsub.f32 %v928, %v1000
        %v1011 = vsub.f32 %v933, %v1000
        %v1012 = vsub.f32 %v938, %v1000
        %v1013 = vsub.f32 %v943, %v1000
        %v1014 = vsub.f32 %v948, %v1000
        %v1015 = vsub.f32 %v953, %v1000
        %v1016 = vsub.f32 %v958, %v1000
        %v1017 = vmul.f32 %v1001, %v1001
        %v1018 = vmul.f32 %v1002, %v1002
        %v1019 = vmul.f32 %v1003, %v1003
        %v1020 = vmul.f32 %v1004, %v1004
        %v1021 = vmul.f32 %v1005, %v1005
        %v1022 = vmul.f32 %v1006, %v1006
        %v1023 = vmul.f32 %v1007, %v1007
        %v1024 = vmul.f32 %v1008, %v1008
        %v1025 = vmul.f32 %v1009, %v1009
        %v1026 = vmul.f32 %v1010, %v1010
        %v1027 = vmul.f32 %v1011, %v1011
        %v1028 = vmul.f32 %v1012, %v1012
        %v1029 = vmul.f32 %v1013, %v1013
        %v1030 = vmul.f32 %v1014, %v1014
        %v1031 = vmul.f32 %v1015, %v1015
        %v1032 = vmul.f32 %v1016, %v1016
        %v1033 = vmul.f32 %v1017, %v580
        %v1034 = vmul.f32 %v1018, %v581
        %v1035 = vmul.f32 %v1019, %v582
        %v1036 = vmul.f32 %v1020, %v583
        %v1037 = vmul.f32 %v1021, %v584
        %v1038 = vmul.f32 %v1022, %v585
        %v1039 = vmul.f32 %v1023, %v586
        %v1040 = vmul.f32 %v1024, %v587
        %v1041 = vmul.f32 %v1025, %v588
        %v1042 = vmul.f32 %v1026, %v589
        %v1043 = vmul.f32 %v1027, %v590
        %v1044 = vmul.f32 %v1028, %v591
        %v1045 = vmul.f32 %v1029, %v592
        %v1046 = vmul.f32 %v1030, %v593
        %v1047 = vmul.f32 %v1031, %v594
        %v1048 = vmul.f32 %v1032, %v595
        %v1049 = vadd.f32 %v1033, %v1034
        %v1050 = vadd.f32 %v1049, %v1035
        %v1051 = vadd.f32 %v1050, %v1036
        %v1052 = vadd.f32 %v1051, %v1037
        %v1053 = vadd.f32 %v1052, %v1038
        %v1054 = vadd.f32 %v1053, %v1039
        %v1055 = vadd.f32 %v1054, %v1040
        %v1056 = vadd.f32 %v1055, %v1041
        %v1057 = vadd.f32 %v1056, %v1042
        %v1058 = vadd.f32 %v1057, %v1043
        %v1059 = vadd.f32 %v1058, %v1044
        %v1060 = vadd.f32 %v1059, %v1045
        %v1061 = vadd.f32 %v1060, %v1046
        %v1062 = vadd.f32 %v1061, %v1047
        %v1063 = vadd.f32 %v1062, %v1048
        %v1064 = vrot.slane %v1063, 4
        %v1065 = vadd.f32 %v1063, %v1064
        %v1066 = vrot.slane %v1065, 2
        %v1067 = vadd.f32 %v1065, %v1066
        %v1068 = vrot.slane %v1067, 1
        %v1069 = vadd.f32 %v1067, %v1068
        %v1070 = vmul.f32 %v1069, 0.0625
        %v1071 = vadd.f32 %v1070, 1e-05
        %v1072 = vrsqrt.pop %v1071
        %v1073 = vmul.f32 %v961, %v1072
        %v1075 = vlaneseq
        %v1076 = vshrl.u32 %v1075, 7
        %v1077 = vsub.s32 0, %v1076
        %v1078 = vrot.slane %v1073, %v1077
        %v1080 = vmul.f32 %v1001, %v1078
        %v1081 = vmul.f32 %v1002, %v1078
        %v1082 = vmul.f32 %v1003, %v1078
        %v1083 = vmul.f32 %v1004, %v1078
        %v1084 = vmul.f32 %v1005, %v1078
        %v1085 = vmul.f32 %v1006, %v1078
        %v1086 = vmul.f32 %v1007, %v1078
        %v1087 = vmul.f32 %v1008, %v1078
        %v1088 = vmul.f32 %v1009, %v1078
        %v1089 = vmul.f32 %v1010, %v1078
        %v1090 = vmul.f32 %v1011, %v1078
        %v1091 = vmul.f32 %v1012, %v1078
        %v1092 = vmul.f32 %v1013, %v1078
        %v1093 = vmul.f32 %v1014, %v1078
        %v1094 = vmul.f32 %v1015, %v1078
        %v1095 = vmul.f32 %v1016, %v1078
        %v1097 = vlaneseq
        %v1098 = vshrl.u32 %v1097, 7
        %v1099 = vsub.s32 0, %v1098
        %v1100 = vrot.slane %v962, %v1099
        %v1102 = vadd.f32 %v1080, %v1100
        %v1103 = vadd.f32 %v1081, %v1100
        %v1104 = vadd.f32 %v1082, %v1100
        %v1105 = vadd.f32 %v1083, %v1100
        %v1106 = vadd.f32 %v1084, %v1100
        %v1107 = vadd.f32 %v1085, %v1100
        %v1108 = vadd.f32 %v1086, %v1100
        %v1109 = vadd.f32 %v1087, %v1100
        %v1110 = vadd.f32 %v1088, %v1100
        %v1111 = vadd.f32 %v1089, %v1100
        %v1112 = vadd.f32 %v1090, %v1100
        %v1113 = vadd.f32 %v1091, %v1100
        %v1114 = vadd.f32 %v1092, %v1100
        %v1115 = vadd.f32 %v1093, %v1100
        %v1116 = vadd.f32 %v1094, %v1100
        %v1117 = vadd.f32 %v1095, %v1100
        %v1118 = vmax.f32 %v1102, 0.0
        %v1119 = vmax.f32 %v1103, 0.0
        %v1120 = vmax.f32 %v1104, 0.0
        %v1121 = vmax.f32 %v1105, 0.0
        %v1122 = vmax.f32 %v1106, 0.0
        %v1123 = vmax.f32 %v1107, 0.0
        %v1124 = vmax.f32 %v1108, 0.0
        %v1125 = vmax.f32 %v1109, 0.0
        %v1126 = vmax.f32 %v1110, 0.0
        %v1127 = vmax.f32 %v1111, 0.0
        %v1128 = vmax.f32 %v1112, 0.0
        %v1129 = vmax.f32 %v1113, 0.0
        %v1130 = vmax.f32 %v1114, 0.0
        %v1131 = vmax.f32 %v1115, 0.0
        %v1132 = vmax.f32 %v1116, 0.0
        %v1133 = vmax.f32 %v1117, 0.0
        %v1134 = vld [vmem:[%s471] sm:$0xff]
        %v1135 = vld [vmem:[%s471 + $0x8] sm:$0xff]
        %v1136 = vld [vmem:[%s471 + $0x10] sm:$0xff]
        %v1137 = vld [vmem:[%s471 + $0x18] sm:$0xff]
        %v1138 = vld [vmem:[%s471 + $0x20] sm:$0xff]
        %v1139 = vld [vmem:[%s471 + $0x28] sm:$0xff]
        %v1140 = vld [vmem:[%s471 + $0x30] sm:$0xff]
        %v1141 = vld [vmem:[%s471 + $0x38] sm:$0xff]
        %v1142 = vld [vmem:[%s471 + $0x40] sm:$0xff]
        %v1143 = vld [vmem:[%s471 + $0x48] sm:$0xff]
        %v1144 = vld [vmem:[%s471 + $0x50] sm:$0xff]
        %v1145 = vld [vmem:[%s471 + $0x58] sm:$0xff]
        %v1146 = vld [vmem:[%s471 + $0x60] sm:$0xff]
        %v1147 = vld [vmem:[%s471 + $0x68] sm:$0xff]
        %v1148 = vld [vmem:[%s471 + $0x70] sm:$0xff]
        %v1149 = vld [vmem:[%s471 + $0x78] sm:$0xff]
        %1150 = vmatprep.subr.mxu0 0.0
        %1151 = vmatpush1.msra.mxu0 %v1134
        %1152 = vmatprep.subr.mxu0 0.0
        %1153 = vmatpush1.msra.mxu0 %v1135
        %1154 = vmatprep.subr.mxu0 0.0
        %1155 = vmatpush1.msra.mxu0 %v1136
        %1156 = vmatprep.subr.mxu0 0.0
        %1157 = vmatpush1.msra.mxu0 %v1137
        %1158 = vmatprep.subr.mxu0 0.0
        %1159 = vmatpush1.msra.mxu0 %v1138
        %1160 = vmatprep.subr.mxu0 0.0
        %1161 = vmatpush1.msra.mxu0 %v1139
        %1162 = vmatprep.subr.mxu0 0.0
        %1163 = vmatpush1.msra.mxu0 %v1140
        %1164 = vmatprep.subr.mxu0 0.0
        %1165 = vmatpush1.msra.mxu0 %v1141
        %1166 = vmatprep.subr.mxu0 0.0
        %1167 = vmatpush1.msra.mxu0 %v1142
        %1168 = vmatprep.subr.mxu0 0.0
        %1169 = vmatpush1.msra.mxu0 %v1143
        %1170 = vmatprep.subr.mxu0 0.0
        %1171 = vmatpush1.msra.mxu0 %v1144
        %1172 = vmatprep.subr.mxu0 0.0
        %1173 = vmatpush1.msra.mxu0 %v1145
        %1174 = vmatprep.subr.mxu0 0.0
        %1175 = vmatpush1.msra.mxu0 %v1146
        %1176 = vmatprep.subr.mxu0 0.0
        %1177 = vmatpush1.msra.mxu0 %v1147
        %1178 = vmatprep.subr.mxu0 0.0
        %1179 = vmatpush1.msra.mxu0 %v1148
        %1180 = vmatprep.subr.mxu0 0.0
        %1181 = vmatpush1.msra.mxu0 %v1149
        %1182 = vmatprep.subr.mxu0 0.0
        %1183 = vmatpush1.msra.mxu0 0.0
        %1184 = vmatprep.subr.mxu0 0.0
        %1185 = vmatpush1.msra.mxu0 0.0
        %1186 = vmatprep.subr.mxu0 0.0
        %1187 = vmatpush1.msra.mxu0 0.0
        %1188 = vmatprep.subr.mxu0 0.0
        %1189 = vmatpush1.msra.mxu0 0.0
        %1190 = vmatprep.subr.mxu0 0.0
        %1191 = vmatpush1.msra.mxu0 0.0
        %1192 = vmatprep.subr.mxu0 0.0
        %1193 = vmatpush1.msra.mxu0 0.0
        %1194 = vmatprep.subr.mxu0 0.0
        %1195 = vmatpush1.msra.mxu0 0.0
        %1196 = vmatprep.subr.mxu0 0.0
        %1197 = vmatpush1.msra.mxu0 0.0
        %1198 = vmatprep.subr.mxu0 0.0
        %1199 = vmatpush1.msra.mxu0 0.0
        %1200 = vmatprep.subr.mxu0 0.0
        %1201 = vmatpush1.msra.mxu0 0.0
        %1202 = vmatprep.subr.mxu0 0.0
        %1203 = vmatpush1.msra.mxu0 0.0
        %1204 = vmatprep.subr.mxu0 0.0
        %1205 = vmatpush1.msra.mxu0 0.0
        %1206 = vmatprep.subr.mxu0 0.0
        %1207 = vmatpush1.msra.mxu0 0.0
        %1208 = vmatprep.subr.mxu0 0.0
        %1209 = vmatpush1.msra.mxu0 0.0
        %1210 = vmatprep.subr.mxu0 0.0
        %1211 = vmatpush1.msra.mxu0 0.0
        %1212 = vmatprep.subr.mxu0 0.0
        %1213 = vmatpush1.msra.mxu0 0.0
        %1214 = vmatprep.mubr.f32.mxu0 0.0
        %1215 = vmatmul.mubr.f32.gmra.mrb[0].mxu0 %v1118
        %v1216 = vpop.f32.mrb[0].mxu0
        %v1217 = vadd.f32 0.0, %v1216
        %v1218 = vpop.f32.mrb[0].mxu0
        %1219 = vmatprep.mubr.f32.mxu0 0.0
        %1220 = vmatmul.mubr.f32.gmra.mrb[0].mxu0 %v1119
        %v1221 = vpop.f32.mrb[0].mxu0
        %v1222 = vadd.f32 0.0, %v1221
        %v1223 = vpop.f32.mrb[0].mxu0
        %1224 = vmatprep.mubr.f32.mxu0 0.0
        %1225 = vmatmul.mubr.f32.gmra.mrb[0].mxu0 %v1120
        %v1226 = vpop.f32.mrb[0].mxu0
        %v1227 = vadd.f32 0.0, %v1226
        %v1228 = vpop.f32.mrb[0].mxu0
        %1229 = vmatprep.mubr.f32.mxu0 0.0
        %1230 = vmatmul.mubr.f32.gmra.mrb[0].mxu0 %v1121
        %v1231 = vpop.f32.mrb[0].mxu0
        %v1232 = vadd.f32 0.0, %v1231
        %v1233 = vpop.f32.mrb[0].mxu0
        %1234 = vmatprep.mubr.f32.mxu0 0.0
        %1235 = vmatmul.mubr.f32.gmra.mrb[0].mxu0 %v1122
        %v1236 = vpop.f32.mrb[0].mxu0
        %v1237 = vadd.f32 0.0, %v1236
        %v1238 = vpop.f32.mrb[0].mxu0
        %1239 = vmatprep.mubr.f32.mxu0 0.0
        %1240 = vmatmul.mubr.f32.gmra.mrb[0].mxu0 %v1123
        %v1241 = vpop.f32.mrb[0].mxu0
        %v1242 = vadd.f32 0.0, %v1241
        %v1243 = vpop.f32.mrb[0].mxu0
        %1244 = vmatprep.mubr.f32.mxu0 0.0
        %1245 = vmatmul.mubr.f32.gmra.mrb[0].mxu0 %v1124
        %v1246 = vpop.f32.mrb[0].mxu0
        %v1247 = vadd.f32 0.0, %v1246
        %v1248 = vpop.f32.mrb[0].mxu0
        %1249 = vmatprep.mubr.f32.mxu0 0.0
        %1250 = vmatmul.mubr.f32.gmra.mrb[0].mxu0 %v1125
        %v1251 = vpop.f32.mrb[0].mxu0
        %v1252 = vadd.f32 0.0, %v1251
        %v1253 = vpop.f32.mrb[0].mxu0
        %1254 = vmatprep.mubr.f32.mxu0 0.0
        %1255 = vmatmul.mubr.f32.gmra.mrb[0].mxu0 %v1126
        %v1256 = vpop.f32.mrb[0].mxu0
        %v1257 = vadd.f32 0.0, %v1256
        %v1258 = vpop.f32.mrb[0].mxu0
        %1259 = vmatprep.mubr.f32.mxu0 0.0
        %1260 = vmatmul.mubr.f32.gmra.mrb[0].mxu0 %v1127
        %v1261 = vpop.f32.mrb[0].mxu0
        %v1262 = vadd.f32 0.0, %v1261
        %v1263 = vpop.f32.mrb[0].mxu0
        %1264 = vmatprep.mubr.f32.mxu0 0.0
        %1265 = vmatmul.mubr.f32.gmra.mrb[0].mxu0 %v1128
        %v1266 = vpop.f32.mrb[0].mxu0
        %v1267 = vadd.f32 0.0, %v1266
        %v1268 = vpop.f32.mrb[0].mxu0
        %1269 = vmatprep.mubr.f32.mxu0 0.0
        %1270 = vmatmul.mubr.f32.gmra.mrb[0].mxu0 %v1129
        %v1271 = vpop.f32.mrb[0].mxu0
        %v1272 = vadd.f32 0.0, %v1271
        %v1273 = vpop.f32.mrb[0].mxu0
        %1274 = vmatprep.mubr.f32.mxu0 0.0
        %1275 = vmatmul.mubr.f32.gmra.mrb[0].mxu0 %v1130
        %v1276 = vpop.f32.mrb[0].mxu0
        %v1277 = vadd.f32 0.0, %v1276
        %v1278 = vpop.f32.mrb[0].mxu0
        %1279 = vmatprep.mubr.f32.mxu0 0.0
        %1280 = vmatmul.mubr.f32.gmra.mrb[0].mxu0 %v1131
        %v1281 = vpop.f32.mrb[0].mxu0
        %v1282 = vadd.f32 0.0, %v1281
        %v1283 = vpop.f32.mrb[0].mxu0
        %1284 = vmatprep.mubr.f32.mxu0 0.0
        %1285 = vmatmul.mubr.f32.gmra.mrb[0].mxu0 %v1132
        %v1286 = vpop.f32.mrb[0].mxu0
        %v1287 = vadd.f32 0.0, %v1286
        %v1288 = vpop.f32.mrb[0].mxu0
        %1289 = vmatprep.mubr.f32.mxu0 0.0
        %1290 = vmatmul.mubr.f32.gmra.mrb[0].mxu0 %v1133
        %v1291 = vpop.f32.mrb[0].mxu0
        %v1292 = vadd.f32 0.0, %v1291
        %v1293 = vpop.f32.mrb[0].mxu0
        %1294 = vdwg.mxu0
        %v1295 = vld [vmem:[%s474] sm:$0x1]
        %v1296 = vld [vmem:[%s477] sm:$0x1]
        %v1297 = vmul.f32 %v1217, %v580
        %v1298 = vmul.f32 %v1222, %v581
        %v1299 = vmul.f32 %v1227, %v582
        %v1300 = vmul.f32 %v1232, %v583
        %v1301 = vmul.f32 %v1237, %v584
        %v1302 = vmul.f32 %v1242, %v585
        %v1303 = vmul.f32 %v1247, %v586
        %v1304 = vmul.f32 %v1252, %v587
        %v1305 = vmul.f32 %v1257, %v588
        %v1306 = vmul.f32 %v1262, %v589
        %v1307 = vmul.f32 %v1267, %v590
        %v1308 = vmul.f32 %v1272, %v591
        %v1309 = vmul.f32 %v1277, %v592
        %v1310 = vmul.f32 %v1282, %v593
        %v1311 = vmul.f32 %v1287, %v594
        %v1312 = vmul.f32 %v1292, %v595
        %v1313 = vadd.f32 %v1297, %v1298
        %v1314 = vadd.f32 %v1313, %v1299
        %v1315 = vadd.f32 %v1314, %v1300
        %v1316 = vadd.f32 %v1315, %v1301
        %v1317 = vadd.f32 %v1316, %v1302
        %v1318 = vadd.f32 %v1317, %v1303
        %v1319 = vadd.f32 %v1318, %v1304
        %v1320 = vadd.f32 %v1319, %v1305
        %v1321 = vadd.f32 %v1320, %v1306
        %v1322 = vadd.f32 %v1321, %v1307
        %v1323 = vadd.f32 %v1322, %v1308
        %v1324 = vadd.f32 %v1323, %v1309
        %v1325 = vadd.f32 %v1324, %v1310
        %v1326 = vadd.f32 %v1325, %v1311
        %v1327 = vadd.f32 %v1326, %v1312
        %v1328 = vrot.slane %v1327, 4
        %v1329 = vadd.f32 %v1327, %v1328
        %v1330 = vrot.slane %v1329, 2
        %v1331 = vadd.f32 %v1329, %v1330
        %v1332 = vrot.slane %v1331, 1
        %v1333 = vadd.f32 %v1331, %v1332
        %v1334 = vmul.f32 %v1333, 0.0625
        %v1335 = vsub.f32 %v1217, %v1334
        %v1336 = vsub.f32 %v1222, %v1334
        %v1337 = vsub.f32 %v1227, %v1334
        %v1338 = vsub.f32 %v1232, %v1334
        %v1339 = vsub.f32 %v1237, %v1334
        %v1340 = vsub.f32 %v1242, %v1334
        %v1341 = vsub.f32 %v1247, %v1334
        %v1342 = vsub.f32 %v1252, %v1334
        %v1343 = vsub.f32 %v1257, %v1334
        %v1344 = vsub.f32 %v1262, %v1334
        %v1345 = vsub.f32 %v1267, %v1334
        %v1346 = vsub.f32 %v1272, %v1334
        %v1347 = vsub.f32 %v1277, %v1334
        %v1348 = vsub.f32 %v1282, %v1334
        %v1349 = vsub.f32 %v1287, %v1334
        %v1350 = vsub.f32 %v1292, %v1334
        %v1351 = vmul.f32 %v1335, %v1335
        %v1352 = vmul.f32 %v1336, %v1336
        %v1353 = vmul.f32 %v1337, %v1337
        %v1354 = vmul.f32 %v1338, %v1338
        %v1355 = vmul.f32 %v1339, %v1339
        %v1356 = vmul.f32 %v1340, %v1340
        %v1357 = vmul.f32 %v1341, %v1341
        %v1358 = vmul.f32 %v1342, %v1342
        %v1359 = vmul.f32 %v1343, %v1343
        %v1360 = vmul.f32 %v1344, %v1344
        %v1361 = vmul.f32 %v1345, %v1345
        %v1362 = vmul.f32 %v1346, %v1346
        %v1363 = vmul.f32 %v1347, %v1347
        %v1364 = vmul.f32 %v1348, %v1348
        %v1365 = vmul.f32 %v1349, %v1349
        %v1366 = vmul.f32 %v1350, %v1350
        %v1367 = vmul.f32 %v1351, %v580
        %v1368 = vmul.f32 %v1352, %v581
        %v1369 = vmul.f32 %v1353, %v582
        %v1370 = vmul.f32 %v1354, %v583
        %v1371 = vmul.f32 %v1355, %v584
        %v1372 = vmul.f32 %v1356, %v585
        %v1373 = vmul.f32 %v1357, %v586
        %v1374 = vmul.f32 %v1358, %v587
        %v1375 = vmul.f32 %v1359, %v588
        %v1376 = vmul.f32 %v1360, %v589
        %v1377 = vmul.f32 %v1361, %v590
        %v1378 = vmul.f32 %v1362, %v591
        %v1379 = vmul.f32 %v1363, %v592
        %v1380 = vmul.f32 %v1364, %v593
        %v1381 = vmul.f32 %v1365, %v594
        %v1382 = vmul.f32 %v1366, %v595
        %v1383 = vadd.f32 %v1367, %v1368
        %v1384 = vadd.f32 %v1383, %v1369
        %v1385 = vadd.f32 %v1384, %v1370
        %v1386 = vadd.f32 %v1385, %v1371
        %v1387 = vadd.f32 %v1386, %v1372
        %v1388 = vadd.f32 %v1387, %v1373
        %v1389 = vadd.f32 %v1388, %v1374
        %v1390 = vadd.f32 %v1389, %v1375
        %v1391 = vadd.f32 %v1390, %v1376
        %v1392 = vadd.f32 %v1391, %v1377
        %v1393 = vadd.f32 %v1392, %v1378
        %v1394 = vadd.f32 %v1393, %v1379
        %v1395 = vadd.f32 %v1394, %v1380
        %v1396 = vadd.f32 %v1395, %v1381
        %v1397 = vadd.f32 %v1396, %v1382
        %v1398 = vrot.slane %v1397, 4
        %v1399 = vadd.f32 %v1397, %v1398
        %v1400 = vrot.slane %v1399, 2
        %v1401 = vadd.f32 %v1399, %v1400
        %v1402 = vrot.slane %v1401, 1
        %v1403 = vadd.f32 %v1401, %v1402
        %v1404 = vmul.f32 %v1403, 0.0625
        %v1405 = vadd.f32 %v1404, 1e-05
        %v1406 = vrsqrt.pop %v1405
        %v1407 = vmul.f32 %v1295, %v1406
        %v1409 = vlaneseq
        %v1410 = vshrl.u32 %v1409, 7
        %v1411 = vsub.s32 0, %v1410
        %v1412 = vrot.slane %v1407, %v1411
        %v1414 = vmul.f32 %v1335, %v1412
        %v1415 = vmul.f32 %v1336, %v1412
        %v1416 = vmul.f32 %v1337, %v1412
        %v1417 = vmul.f32 %v1338, %v1412
        %v1418 = vmul.f32 %v1339, %v1412
        %v1419 = vmul.f32 %v1340, %v1412
        %v1420 = vmul.f32 %v1341, %v1412
        %v1421 = vmul.f32 %v1342, %v1412
        %v1422 = vmul.f32 %v1343, %v1412
        %v1423 = vmul.f32 %v1344, %v1412
        %v1424 = vmul.f32 %v1345, %v1412
        %v1425 = vmul.f32 %v1346, %v1412
        %v1426 = vmul.f32 %v1347, %v1412
        %v1427 = vmul.f32 %v1348, %v1412
        %v1428 = vmul.f32 %v1349, %v1412
        %v1429 = vmul.f32 %v1350, %v1412
        %v1431 = vlaneseq
        %v1432 = vshrl.u32 %v1431, 7
        %v1433 = vsub.s32 0, %v1432
        %v1434 = vrot.slane %v1296, %v1433
        %v1436 = vadd.f32 %v1414, %v1434
        %v1437 = vadd.f32 %v1415, %v1434
        %v1438 = vadd.f32 %v1416, %v1434
        %v1439 = vadd.f32 %v1417, %v1434
        %v1440 = vadd.f32 %v1418, %v1434
        %v1441 = vadd.f32 %v1419, %v1434
        %v1442 = vadd.f32 %v1420, %v1434
        %v1443 = vadd.f32 %v1421, %v1434
        %v1444 = vadd.f32 %v1422, %v1434
        %v1445 = vadd.f32 %v1423, %v1434
        %v1446 = vadd.f32 %v1424, %v1434
        %v1447 = vadd.f32 %v1425, %v1434
        %v1448 = vadd.f32 %v1426, %v1434
        %v1449 = vadd.f32 %v1427, %v1434
        %v1450 = vadd.f32 %v1428, %v1434
        %v1451 = vadd.f32 %v1429, %v1434
        %v1452 = vmax.f32 %v1436, 0.0
        %v1453 = vmax.f32 %v1437, 0.0
        %v1454 = vmax.f32 %v1438, 0.0
        %v1455 = vmax.f32 %v1439, 0.0
        %v1456 = vmax.f32 %v1440, 0.0
        %v1457 = vmax.f32 %v1441, 0.0
        %v1458 = vmax.f32 %v1442, 0.0
        %v1459 = vmax.f32 %v1443, 0.0
        %v1460 = vmax.f32 %v1444, 0.0
        %v1461 = vmax.f32 %v1445, 0.0
        %v1462 = vmax.f32 %v1446, 0.0
        %v1463 = vmax.f32 %v1447, 0.0
        %v1464 = vmax.f32 %v1448, 0.0
        %v1465 = vmax.f32 %v1449, 0.0
        %v1466 = vmax.f32 %v1450, 0.0
        %v1467 = vmax.f32 %v1451, 0.0
        %1468 = vst [vmem:[#allocation2] sm:$0xff] %v1452
        %1469 = vst [vmem:[#allocation2 + $0x8] sm:$0xff] %v1453
        %1470 = vst [vmem:[#allocation2 + $0x10] sm:$0xff] %v1454
        %1471 = vst [vmem:[#allocation2 + $0x18] sm:$0xff] %v1455
        %1472 = vst [vmem:[#allocation2 + $0x20] sm:$0xff] %v1456
        %1473 = vst [vmem:[#allocation2 + $0x28] sm:$0xff] %v1457
        %1474 = vst [vmem:[#allocation2 + $0x30] sm:$0xff] %v1458
        %1475 = vst [vmem:[#allocation2 + $0x38] sm:$0xff] %v1459
        %1476 = vst [vmem:[#allocation2 + $0x40] sm:$0xff] %v1460
        %1477 = vst [vmem:[#allocation2 + $0x48] sm:$0xff] %v1461
        %1478 = vst [vmem:[#allocation2 + $0x50] sm:$0xff] %v1462
        %1479 = vst [vmem:[#allocation2 + $0x58] sm:$0xff] %v1463
        %1480 = vst [vmem:[#allocation2 + $0x60] sm:$0xff] %v1464
        %1481 = vst [vmem:[#allocation2 + $0x68] sm:$0xff] %v1465
        %1482 = vst [vmem:[#allocation2 + $0x70] sm:$0xff] %v1466
        %1483 = vst [vmem:[#allocation2 + $0x78] sm:$0xff] %v1467
        %1484 = vst [vmem:[%s449] sm:$0xff] %v1452
        %1485 = vst [vmem:[%s449 + $0x8] sm:$0xff] %v1453
        %1486 = vst [vmem:[%s449 + $0x10] sm:$0xff] %v1454
        %1487 = vst [vmem:[%s449 + $0x18] sm:$0xff] %v1455
        %1488 = vst [vmem:[%s449 + $0x20] sm:$0xff] %v1456
        %1489 = vst [vmem:[%s449 + $0x28] sm:$0xff] %v1457
        %1490 = vst [vmem:[%s449 + $0x30] sm:$0xff] %v1458
        %1491 = vst [vmem:[%s449 + $0x38] sm:$0xff] %v1459
        %1492 = vst [vmem:[%s449 + $0x40] sm:$0xff] %v1460
        %1493 = vst [vmem:[%s449 + $0x48] sm:$0xff] %v1461
        %1494 = vst [vmem:[%s449 + $0x50] sm:$0xff] %v1462
        %1495 = vst [vmem:[%s449 + $0x58] sm:$0xff] %v1463
        %1496 = vst [vmem:[%s449 + $0x60] sm:$0xff] %v1464
        %1497 = vst [vmem:[%s449 + $0x68] sm:$0xff] %v1465
        %1498 = vst [vmem:[%s449 + $0x70] sm:$0xff] %v1466
        %1499 = vst [vmem:[%s449 + $0x78] sm:$0xff] %v1467
        %v1500 = vld [vmem:[%s9] sm:$0xf]
        %v1501 = vld [vmem:[%s9 + $0x4] sm:$0xf]
        %v1502 = vpack.c.bf16 %v1453, %v1452
        %v1503 = vpack.c.bf16 %v1455, %v1454
        %v1504 = vpack.c.bf16 %v1457, %v1456
        %v1505 = vpack.c.bf16 %v1459, %v1458
        %v1506 = vpack.c.bf16 %v1461, %v1460
        %v1507 = vpack.c.bf16 %v1463, %v1462
        %v1508 = vpack.c.bf16 %v1465, %v1464
        %v1509 = vpack.c.bf16 %v1467, %v1466
        %v1512 = vunpack.c.l.b16 %v1500
        %v1513 = vunpack.c.l.b16 %v1501
        %v1514 = vpack.c.b16 %v1513, %v1512
        %1516 = vmatprep.subr.bf16.mxu0 0
        %1517 = vmatpush1.bf16.msra.mxu0 %v1502
        %1518 = vmatprep.subr.bf16.mxu0 0
        %1519 = vmatpush1.bf16.msra.mxu0 %v1503
        %1520 = vmatprep.subr.bf16.mxu0 0
        %1521 = vmatpush1.bf16.msra.mxu0 %v1504
        %1522 = vmatprep.subr.bf16.mxu0 0
        %1523 = vmatpush1.bf16.msra.mxu0 %v1505
        %1524 = vmatprep.subr.bf16.mxu0 0
        %1525 = vmatpush1.bf16.msra.mxu0 %v1506
        %1526 = vmatprep.subr.bf16.mxu0 0
        %1527 = vmatpush1.bf16.msra.mxu0 %v1507
        %1528 = vmatprep.subr.bf16.mxu0 0
        %1529 = vmatpush1.bf16.msra.mxu0 %v1508
        %1530 = vmatprep.subr.bf16.mxu0 0
        %1531 = vmatpush1.bf16.msra.mxu0 %v1509
        %1532 = vmatprep.subr.bf16.mxu0 0
        %1533 = vmatpush1.bf16.msra.mxu0 0
        %1534 = vmatprep.subr.bf16.mxu0 0
        %1535 = vmatpush1.bf16.msra.mxu0 0
        %1536 = vmatprep.subr.bf16.mxu0 0
        %1537 = vmatpush1.bf16.msra.mxu0 0
        %1538 = vmatprep.subr.bf16.mxu0 0
        %1539 = vmatpush1.bf16.msra.mxu0 0
        %1540 = vmatprep.subr.bf16.mxu0 0
        %1541 = vmatpush1.bf16.msra.mxu0 0
        %1542 = vmatprep.subr.bf16.mxu0 0
        %1543 = vmatpush1.bf16.msra.mxu0 0
        %1544 = vmatprep.subr.bf16.mxu0 0
        %1545 = vmatpush1.bf16.msra.mxu0 0
        %1546 = vmatprep.subr.bf16.mxu0 0
        %1547 = vmatpush1.bf16.msra.mxu0 0
        %1548 = vmatprep.mubr.bf16.mxu0 0
        %1549 = vmatmul.mubr.bf16.gmra.mrb[0].mxu0 %v1514
        %v1550 = vpop.f32.mrb[0].mxu0
        %v1551 = vadd.f32 0.0, %v1550
        %v1552 = vpop.f32.mrb[0].mxu0
        %v1553 = vpop.f32.mrb[0].mxu0
        %v1554 = vadd.f32 0.0, %v1553
        %v1555 = vpop.f32.mrb[0].mxu0
        %1556 = vdwg.mxu0
        %1557 = vst [vmem:[%s455] sm:$0xff] %v1551
        %1558 = vst [vmem:[%s455 + $0x8] sm:$0xff] %v1554
        %s1559 = sand.u32 %s272, 1
        %s1560 = sand.u32 %s272, 1
        %s1561 = smul.addr %s1560, 128
        %s1562 = scalar_lea.vmem [#allocation5], %s1561
        %s1563 = sand.u32 %s298, 1
        %s1564 = sand.u32 %s298, 1
        %s1565 = smul.addr %s1564, 16
        %s1566 = scalar_lea.vmem [#allocation6], %s1565
        // Predicated region
        $region69: #{encoder_forward.1} parent=59 // pred_check
          %p1567 = pneg %p282
        $region70: #{encoder_forward.1} parent=59 // pred_check_branch
          %1569 = sbr.rel (%p1567) target = $region72
        $region71: #{encoder_forward.1} parent=59 // pred_region
          %s1570 = smul.addr %s24, 8
          %s1571 = scalar_lea.vmem %s10, %s1570
          // Predicated region
          $region73: #{encoder_forward.1} parent=71 // pred_check
            _
          $region74: #{encoder_forward.1} parent=71 // pred_check_branch
            %1573 = sbr.rel (0) target = $region76
          $region75: #{encoder_forward.1} parent=71 // pred_region
            // Predicated region
            $region77: #{encoder_forward.1} parent=75 // pred_check
              _
            $region78: #{encoder_forward.1} parent=75 // pred_check_branch
              %1575 = sbr.rel (0) target = $region80
            $region79: #{encoder_forward.1} parent=75 // pred_region
              // Predicated region
              $region92: #{encoder_forward.1} parent=79 // pred_check
                _
              $region93: #{encoder_forward.1} parent=79 // pred_check_branch
                %1620 = sbr.rel (0) target = $region95
              $region94: #{encoder_forward.1} parent=79 // pred_region
                loop: start=0, step=1, limit=1
                $region96: #{encoder_forward.1} parent=94 // loop_pre_header
                  _
                $region97: #{encoder_forward.1} parent=94 // loop_header
                  %s1622 = sphi 0, %s1626
                  %p1623 = scmp.ge.s32.totalorder %s1622, 1
                  %s1627 = sphi %s1562, %s1562
                  %s1628 = sphi %s1571, %s1571
                $region98: #{encoder_forward.1} parent=94 // loop_header_branch
                  %1625 = sbr.rel (%p1623) target = $region102
                $region99: #{encoder_forward.1} parent=94 // loop_body
                  %v1629 = vld [vmem:[%s1627] sm:$0xff]
                  %1630 = vst [vmem:[%s1628] sm:$0xff] %v1629
                  %v1631 = vld [vmem:[%s1627 + $0x8] sm:$0xff]
                  %1632 = vst [vmem:[%s1628 + $0x18] sm:$0xff] %v1631
                  %v1633 = vld [vmem:[%s1627 + $0x10] sm:$0xff]
                  %1634 = vst [vmem:[%s1628 + $0x30] sm:$0xff] %v1633
                  %v1635 = vld [vmem:[%s1627 + $0x18] sm:$0xff]
                  %1636 = vst [vmem:[%s1628 + $0x48] sm:$0xff] %v1635
                  %v1637 = vld [vmem:[%s1627 + $0x20] sm:$0xff]
                  %1638 = vst [vmem:[%s1628 + $0x60] sm:$0xff] %v1637
                  %v1639 = vld [vmem:[%s1627 + $0x28] sm:$0xff]
                  %1640 = vst [vmem:[%s1628 + $0x78] sm:$0xff] %v1639
                  %v1641 = vld [vmem:[%s1627 + $0x30] sm:$0xff]
                  %1642 = vst [vmem:[%s1628 + $0x90] sm:$0xff] %v1641
                  %v1643 = vld [vmem:[%s1627 + $0x38] sm:$0xff]
                  %1644 = vst [vmem:[%s1628 + $0xa8] sm:$0xff] %v1643
                  %v1645 = vld [vmem:[%s1627 + $0x40] sm:$0xff]
                  %1646 = vst [vmem:[%s1628 + $0xc0] sm:$0xff] %v1645
                  %v1647 = vld [vmem:[%s1627 + $0x48] sm:$0xff]
                  %1648 = vst [vmem:[%s1628 + $0xd8] sm:$0xff] %v1647
                  %v1649 = vld [vmem:[%s1627 + $0x50] sm:$0xff]
                  %1650 = vst [vmem:[%s1628 + $0xf0] sm:$0xff] %v1649
                  %v1651 = vld [vmem:[%s1627 + $0x58] sm:$0xff]
                  %1652 = vst [vmem:[%s1628 + $0x108] sm:$0xff] %v1651
                  %v1653 = vld [vmem:[%s1627 + $0x60] sm:$0xff]
                  %1654 = vst [vmem:[%s1628 + $0x120] sm:$0xff] %v1653
                  %v1655 = vld [vmem:[%s1627 + $0x68] sm:$0xff]
                  %1656 = vst [vmem:[%s1628 + $0x138] sm:$0xff] %v1655
                  %v1657 = vld [vmem:[%s1627 + $0x70] sm:$0xff]
                  %1658 = vst [vmem:[%s1628 + $0x150] sm:$0xff] %v1657
                  %v1659 = vld [vmem:[%s1627 + $0x78] sm:$0xff]
                  %1660 = vst [vmem:[%s1628 + $0x168] sm:$0xff] %v1659
                $region100: #{encoder_forward.1} parent=94 // loop_footer
                  %s1626 = sadd.s32 1, %s1622
                $region101: #{encoder_forward.1} parent=94 // loop_footer_branch
                  %1621 = sbr.rel target = $region97
                $region102: #{encoder_forward.1} parent=94 // loop_exit
                  _
              $region95: #{encoder_forward.1} parent=79 // pred_fallthru
                _
              // Predicated region
              $region103: #{encoder_forward.1} parent=79 // pred_check
                _
              $region104: #{encoder_forward.1} parent=79 // pred_check_branch
                %1662 = sbr.rel target = $region106
              $region105: #{encoder_forward.1} parent=79 // pred_region
                _
              $region106: #{encoder_forward.1} parent=79 // pred_fallthru
                _
            $region80: #{encoder_forward.1} parent=75 // pred_fallthru
              _
            // Predicated region
            $region81: #{encoder_forward.1} parent=75 // pred_check
              _
            $region82: #{encoder_forward.1} parent=75 // pred_check_branch
              %1577 = sbr.rel target = $region84
            $region83: #{encoder_forward.1} parent=75 // pred_region
              loop: start=0, step=1, limit=1
              $region85: #{encoder_forward.1} parent=83 // loop_pre_header
                _
              $region86: #{encoder_forward.1} parent=83 // loop_header
                %s1580 = sphi 0, %s1584
                %p1581 = scmp.ge.s32.totalorder %s1580, 1
                %s1585 = sphi %s1562, %s1562
                %s1586 = sphi %s1571, %s1571
              $region87: #{encoder_forward.1} parent=83 // loop_header_branch
                %1583 = sbr.rel (%p1581) target = $region91
              $region88: #{encoder_forward.1} parent=83 // loop_body
                %v1587 = vld [vmem:[%s1585] sm:$0xff]
                %1588 = vst [vmem:[%s1586] sm:$0xff] %v1587
                %v1589 = vld [vmem:[%s1585 + $0x8] sm:$0xff]
                %1590 = vst [vmem:[%s1586 + $0x18] sm:$0xff] %v1589
                %v1591 = vld [vmem:[%s1585 + $0x10] sm:$0xff]
                %1592 = vst [vmem:[%s1586 + $0x30] sm:$0xff] %v1591
                %v1593 = vld [vmem:[%s1585 + $0x18] sm:$0xff]
                %1594 = vst [vmem:[%s1586 + $0x48] sm:$0xff] %v1593
                %v1595 = vld [vmem:[%s1585 + $0x20] sm:$0xff]
                %1596 = vst [vmem:[%s1586 + $0x60] sm:$0xff] %v1595
                %v1597 = vld [vmem:[%s1585 + $0x28] sm:$0xff]
                %1598 = vst [vmem:[%s1586 + $0x78] sm:$0xff] %v1597
                %v1599 = vld [vmem:[%s1585 + $0x30] sm:$0xff]
                %1600 = vst [vmem:[%s1586 + $0x90] sm:$0xff] %v1599
                %v1601 = vld [vmem:[%s1585 + $0x38] sm:$0xff]
                %1602 = vst [vmem:[%s1586 + $0xa8] sm:$0xff] %v1601
                %v1603 = vld [vmem:[%s1585 + $0x40] sm:$0xff]
                %1604 = vst [vmem:[%s1586 + $0xc0] sm:$0xff] %v1603
                %v1605 = vld [vmem:[%s1585 + $0x48] sm:$0xff]
                %1606 = vst [vmem:[%s1586 + $0xd8] sm:$0xff] %v1605
                %v1607 = vld [vmem:[%s1585 + $0x50] sm:$0xff]
                %1608 = vst [vmem:[%s1586 + $0xf0] sm:$0xff] %v1607
                %v1609 = vld [vmem:[%s1585 + $0x58] sm:$0xff]
                %1610 = vst [vmem:[%s1586 + $0x108] sm:$0xff] %v1609
                %v1611 = vld [vmem:[%s1585 + $0x60] sm:$0xff]
                %1612 = vst [vmem:[%s1586 + $0x120] sm:$0xff] %v1611
                %v1613 = vld [vmem:[%s1585 + $0x68] sm:$0xff]
                %1614 = vst [vmem:[%s1586 + $0x138] sm:$0xff] %v1613
                %v1615 = vld [vmem:[%s1585 + $0x70] sm:$0xff]
                %1616 = vst [vmem:[%s1586 + $0x150] sm:$0xff] %v1615
                %v1617 = vld [vmem:[%s1585 + $0x78] sm:$0xff]
                %1618 = vst [vmem:[%s1586 + $0x168] sm:$0xff] %v1617
              $region89: #{encoder_forward.1} parent=83 // loop_footer
                %s1584 = sadd.s32 1, %s1580
              $region90: #{encoder_forward.1} parent=83 // loop_footer_branch
                %1579 = sbr.rel target = $region86
              $region91: #{encoder_forward.1} parent=83 // loop_exit
                _
            $region84: #{encoder_forward.1} parent=75 // pred_fallthru
              _
          $region76: #{encoder_forward.1} parent=71 // pred_fallthru
            _
          %1663 = vnop
        $region72: #{encoder_forward.1} parent=59 // pred_fallthru
          _
        // Predicated region
        $region107: #{encoder_forward.1} parent=59 // pred_check
          %p1664 = pneg %p308
        $region108: #{encoder_forward.1} parent=59 // pred_check_branch
          %1666 = sbr.rel (%p1664) target = $region110
        $region109: #{encoder_forward.1} parent=59 // pred_region
          %s1667 = smul.addr %s24, 8
          %s1668 = scalar_lea.vmem %s11, %s1667
          // Predicated region
          $region111: #{encoder_forward.1} parent=109 // pred_check
            _
          $region112: #{encoder_forward.1} parent=109 // pred_check_branch
            %1670 = sbr.rel (0) target = $region114
          $region113: #{encoder_forward.1} parent=109 // pred_region
            // Predicated region
            $region115: #{encoder_forward.1} parent=113 // pred_check
              _
            $region116: #{encoder_forward.1} parent=113 // pred_check_branch
              %1672 = sbr.rel (0) target = $region118
            $region117: #{encoder_forward.1} parent=113 // pred_region
              // Predicated region
              $region130: #{encoder_forward.1} parent=117 // pred_check
                _
              $region131: #{encoder_forward.1} parent=117 // pred_check_branch
                %1689 = sbr.rel (0) target = $region133
              $region132: #{encoder_forward.1} parent=117 // pred_region
                loop: start=0, step=1, limit=1
                $region134: #{encoder_forward.1} parent=132 // loop_pre_header
                  _
                $region135: #{encoder_forward.1} parent=132 // loop_header
                  %s1691 = sphi 0, %s1695
                  %p1692 = scmp.ge.s32.totalorder %s1691, 1
                  %s1696 = sphi %s1566, %s1566
                  %s1697 = sphi %s1668, %s1668
                $region136: #{encoder_forward.1} parent=132 // loop_header_branch
                  %1694 = sbr.rel (%p1692) target = $region140
                $region137: #{encoder_forward.1} parent=132 // loop_body
                  %v1698 = vld [vmem:[%s1696] sm:$0xff]
                  %1699 = vst [vmem:[%s1697] sm:$0xff] %v1698
                  %v1700 = vld [vmem:[%s1696 + $0x8] sm:$0xff]
                  %1701 = vst [vmem:[%s1697 + $0x18] sm:$0xff] %v1700
                $region138: #{encoder_forward.1} parent=132 // loop_footer
                  %s1695 = sadd.s32 1, %s1691
                $region139: #{encoder_forward.1} parent=132 // loop_footer_branch
                  %1690 = sbr.rel target = $region135
                $region140: #{encoder_forward.1} parent=132 // loop_exit
                  _
              $region133: #{encoder_forward.1} parent=117 // pred_fallthru
                _
              // Predicated region
              $region141: #{encoder_forward.1} parent=117 // pred_check
                _
              $region142: #{encoder_forward.1} parent=117 // pred_check_branch
                %1703 = sbr.rel target = $region144
              $region143: #{encoder_forward.1} parent=117 // pred_region
                _
              $region144: #{encoder_forward.1} parent=117 // pred_fallthru
                _
            $region118: #{encoder_forward.1} parent=113 // pred_fallthru
              _
            // Predicated region
            $region119: #{encoder_forward.1} parent=113 // pred_check
              _
            $region120: #{encoder_forward.1} parent=113 // pred_check_branch
              %1674 = sbr.rel target = $region122
            $region121: #{encoder_forward.1} parent=113 // pred_region
              loop: start=0, step=1, limit=1
              $region123: #{encoder_forward.1} parent=121 // loop_pre_header
                _
              $region124: #{encoder_forward.1} parent=121 // loop_header
                %s1677 = sphi 0, %s1681
                %p1678 = scmp.ge.s32.totalorder %s1677, 1
                %s1682 = sphi %s1566, %s1566
                %s1683 = sphi %s1668, %s1668
              $region125: #{encoder_forward.1} parent=121 // loop_header_branch
                %1680 = sbr.rel (%p1678) target = $region129
              $region126: #{encoder_forward.1} parent=121 // loop_body
                %v1684 = vld [vmem:[%s1682] sm:$0xff]
                %1685 = vst [vmem:[%s1683] sm:$0xff] %v1684
                %v1686 = vld [vmem:[%s1682 + $0x8] sm:$0xff]
                %1687 = vst [vmem:[%s1683 + $0x18] sm:$0xff] %v1686
              $region127: #{encoder_forward.1} parent=121 // loop_footer
                %s1681 = sadd.s32 1, %s1677
              $region128: #{encoder_forward.1} parent=121 // loop_footer_branch
                %1676 = sbr.rel target = $region124
              $region129: #{encoder_forward.1} parent=121 // loop_exit
                _
            $region122: #{encoder_forward.1} parent=113 // pred_fallthru
              _
          $region114: #{encoder_forward.1} parent=109 // pred_fallthru
            _
          %1704 = vnop
        $region110: #{encoder_forward.1} parent=59 // pred_fallthru
          _
      $region60: #{encoder_forward.1} parent=5 // pred_fallthru
        _
      %p1705 = scmp.le.s32.totalorder 2, %s19
      // Predicated region
      $region145: #{encoder_forward.1} parent=5 // pred_check
        %p1706 = pneg %p1705
      $region146: #{encoder_forward.1} parent=5 // pred_check_branch
        %1708 = sbr.rel (%p1706) target = $region148
      $region147: #{encoder_forward.1} parent=5 // pred_region
        %s1709 = ssub.s32 %s19, 2
        // Predicated region
        $region149: #{encoder_forward.1} parent=147 // pred_check
          %p1710 = pneg %p288
        $region150: #{encoder_forward.1} parent=147 // pred_check_branch
          %1712 = sbr.rel (%p1710) target = $region152
        $region151: #{encoder_forward.1} parent=147 // pred_region
          %s1713 = sand.u32 %s273, 1
          %s1714 = sand.u32 %s273, 1
          %s1715 = smul.addr %s1714, 128
          %s1716 = scalar_lea.vmem [#allocation5], %s1715
        $region152: #{encoder_forward.1} parent=147 // pred_fallthru
          _
        // Predicated region
        $region153: #{encoder_forward.1} parent=147 // pred_check
          %p1717 = pneg %p314
        $region154: #{encoder_forward.1} parent=147 // pred_check_branch
          %1719 = sbr.rel (%p1717) target = $region156
        $region155: #{encoder_forward.1} parent=147 // pred_region
          %s1720 = sand.u32 %s299, 1
          %s1721 = sand.u32 %s299, 1
          %s1722 = smul.addr %s1721, 16
          %s1723 = scalar_lea.vmem [#allocation6], %s1722
        $region156: #{encoder_forward.1} parent=147 // pred_fallthru
          _
      $region148: #{encoder_forward.1} parent=5 // pred_fallthru
        _
    $region6: #{encoder_forward.1} parent=1 // loop_footer
      %s23 = sadd.s32 1, %s19
    $region7: #{encoder_forward.1} parent=1 // loop_footer_branch
      %18 = sbr.rel target = $region3
    $region8: #{encoder_forward.1} parent=1 // loop_exit
      _
    %1724 = vsyncpa [#allocation4], 1
    %s1725 = scalar_lea.sflag [#allocation4], 1
    %1726 = vsyncpa %s1725, 1

// kernel: encoder_forward.1
$region0: #{encoder_forward.1}
  #allocation0 [shape = 'u32[]', space=smem, size = 0x4, offset = 0x4, fixed_abs, tag = 'smem constant byte address 0x4 - core index']
  #allocation1 [shape = 'u32[144,128]{1,0:T(1,128)}', space=vmem, size = 0x12000, scoped, tag = 'internal scratch']
  #allocation2 [shape = 'f32[128,128]{1,0:T(8,128)}', space=vmem, size = 0x10000, scoped, tag = 'scratch operand']
  %s0 = inlined_call_operand.vmem [shape: bf16[128,128], index: 0, kind: input, shape index: {}]
  %s1 = inlined_call_operand.vmem [shape: f32[128,128], index: 1, kind: input, shape index: {}]
  %s2 = inlined_call_operand.vmem [shape: f32[3], index: 2, kind: input, shape index: {}]
  %s3 = inlined_call_operand.vmem [shape: f32[3,128,128], index: 3, kind: input, shape index: {}]
  %s4 = inlined_call_operand.vmem [shape: f32[3,1,128], index: 4, kind: input, shape index: {}]
  %s5 = inlined_call_operand.vmem [shape: f32[3,1,128], index: 5, kind: input, shape index: {}]
  %s6 = inlined_call_operand.vmem [shape: f32[3,128,128], index: 6, kind: input, shape index: {}]
  %s7 = inlined_call_operand.vmem [shape: f32[3,1,128], index: 7, kind: input, shape index: {}]
  %s8 = inlined_call_operand.vmem [shape: f32[3,1,128], index: 8, kind: input, shape index: {}]
  %s9 = inlined_call_operand.vmem [shape: bf16[16,128], index: 9, kind: input, shape index: {}]
  %s10 = inlined_call_operand.vmem [shape: f32[128,384], index: 10, kind: output, shape index: {0}]
  %s11 = inlined_call_operand.vmem [shape: f32[16,384], index: 11, kind: output, shape index: {1}]
  %12 = xla_tuple %s10, %s11
  %s13 = sld [smem:[#allocation0]]
  $region157: #{encoder_forward.1} parent=0
    _
  %s15 = ssub.s32 1, %s13
  %s16 = scalar_select 0, %s15, %s13
  $region1: #{encoder_forward.1} parent=0
    #allocation3 [shape = 'u8[512]{0}', space=smem, size = 0x200, scoped, tag = 'input window, operand 2, single buffered']
    #allocation4 [shape = 's32[2]{0}', space=sflag, size = 0x8, scoped, tag = 'scoped memory for encoder_forward.1']
    #allocation5 [shape = 'u8[131072]{0}', space=vmem, size = 0x20000, scoped, tag = 'output window, operand 0']
    #allocation6 [shape = 'u8[16384]{0}', space=vmem, size = 0x4000, scoped, tag = 'output window, operand 1']
    %17 = vsyncpa [#allocation4], 0
    loop: start=0, step=1, limit=5
    $region2: #{encoder_forward.1} parent=1 // loop_pre_header
      _
    $region3: #{encoder_forward.1} parent=1 // loop_header
      %s19 = sphi 0, %s23
      %p20 = scmp.ge.s32.totalorder %s19, 5
      %s27 = sphi 0, %s27
      %s29 = sphi 0, %s27
      %s30 = sphi 0, %s29
      %s44 = sphi 0, %s30
      %s48 = sphi 0, %s48
      %s50 = sphi 0, %s48
      %s51 = sphi 0, %s50
      %s65 = sphi 0, %s51
      %s69 = sphi 0, %s69
      %s71 = sphi 0, %s69
      %s72 = sphi 0, %s71
      %s86 = sphi 0, %s72
      %s92 = sphi 0, %s94
      %s95 = sphi 0, %s92
      %s96 = sphi 0, %s95
      %s112 = sphi 0, %s96
      %s118 = sphi 0, %s120
      %s121 = sphi 0, %s118
      %s122 = sphi 0, %s121
      %s138 = sphi 0, %s122
      %s144 = sphi 0, %s146
      %s147 = sphi 0, %s144
      %s148 = sphi 0, %s147
      %s164 = sphi 0, %s148
      %s170 = sphi 0, %s172
      %s173 = sphi 0, %s170
      %s174 = sphi 0, %s173
      %s190 = sphi 0, %s174
      %s196 = sphi 0, %s198
      %s199 = sphi 0, %s196
      %s200 = sphi 0, %s199
      %s216 = sphi 0, %s200
      %s222 = sphi 0, %s224
      %s225 = sphi 0, %s222
      %s226 = sphi 0, %s225
      %s242 = sphi 0, %s226
      %s246 = sphi 0, %s246
      %s248 = sphi 0, %s246
      %s249 = sphi 0, %s248
      %s263 = sphi 0, %s249
      %s269 = sphi 0, %s271
      %s272 = sphi 0, %s269
      %s273 = sphi 0, %s272
      %s289 = sphi 0, %s273
      %s295 = sphi 0, %s297
      %s298 = sphi 0, %s295
      %s299 = sphi 0, %s298
      %s315 = sphi 0, %s299
    $region4: #{encoder_forward.1} parent=1 // loop_header_branch
      %22 = sbr.rel (%p20) target = $region8
    $region5: #{encoder_forward.1} parent=1 // loop_body
      %s24 = ssub.s32 %s19, 1
      %s25 = ssub.s32 %s19, 2
      %s26 = sadd.s32 %s19, 1
      %s28 = sadd.s32 %s27, 1
      %p31 = scmp.eq.s32.totalorder %s19, 2
      %p32 = scmp.ne.s32.totalorder %s27, %s29
      %p33 = scmp.eq.s32.totalorder %s19, 0
      %p34 = por %p32, %p33
      %p35 = scmp.ne.s32.totalorder %s27, %s29
      %p36 = scmp.eq.s32.totalorder %s24, 2
      %p37 = por %p35, %p36
      %p38 = scmp.ne.s32.totalorder %s29, %s30
      %p39 = scmp.eq.s32.totalorder %s24, 0
      %p40 = por %p38, %p39
      %p41 = scmp.ne.s32.totalorder %s29, %s30
      %p42 = scmp.eq.s32.totalorder %s25, 2
      %p43 = por %p41, %p42
      %p45 = scmp.ne.s32.totalorder %s30, %s44
      %p46 = scmp.eq.s32.totalorder %s25, 0
      %p47 = por %p45, %p46
      %s49 = sadd.s32 %s48, 1
      %p52 = scmp.eq.s32.totalorder %s19, 2
      %p53 = scmp.ne.s32.totalorder %s48, %s50
      %p54 = scmp.eq.s32.totalorder %s19, 0
      %p55 = por %p53, %p54
      %p56 = scmp.ne.s32.totalorder %s48, %s50
      %p57 = scmp.eq.s32.totalorder %s24, 2
      %p58 = por %p56, %p57
      %p59 = scmp.ne.s32.totalorder %s50, %s51
      %p60 = scmp.eq.s32.totalorder %s24, 0
      %p61 = por %p59, %p60
      %p62 = scmp.ne.s32.totalorder %s50, %s51
      %p63 = scmp.eq.s32.totalorder %s25, 2
      %p64 = por %p62, %p63
      %p66 = scmp.ne.s32.totalorder %s51, %s65
      %p67 = scmp.eq.s32.totalorder %s25, 0
      %p68 = por %p66, %p67
      %s70 = sadd.s32 %s69, 1
      %p73 = scmp.eq.s32.totalorder %s19, 2
      %p74 = scmp.ne.s32.totalorder %s69, %s71
      %p75 = scmp.eq.s32.totalorder %s19, 0
      %p76 = por %p74, %p75
      %p77 = scmp.ne.s32.totalorder %s69, %s71
      %p78 = scmp.eq.s32.totalorder %s24, 2
      %p79 = por %p77, %p78
      %p80 = scmp.ne.s32.totalorder %s71, %s72
      %p81 = scmp.eq.s32.totalorder %s24, 0
      %p82 = por %p80, %p81
      %p83 = scmp.ne.s32.totalorder %s71, %s72
      %p84 = scmp.eq.s32.totalorder %s25, 2
      %p85 = por %p83, %p84
      %p87 = scmp.ne.s32.totalorder %s72, %s86
      %p88 = scmp.eq.s32.totalorder %s25, 0
      %p89 = por %p87, %p88
      %s90 = ssub.s32 %s19, %s26
      %p91 = scmp.eq.s32.totalorder %s90, 0
      %s93 = sadd.s32 %s92, 1
      %s94 = scalar_select %p91, %s92, %s93
      %p97 = pneg %p91
      %p98 = scmp.eq.s32.totalorder %s19, 2
      %p99 = por %p97, %p98
      %p100 = scmp.ne.s32.totalorder %s92, %s95
      %p101 = scmp.eq.s32.totalorder %s19, 0
      %p102 = por %p100, %p101
      %p103 = scmp.ne.s32.totalorder %s92, %s95
      %p104 = scmp.eq.s32.totalorder %s24, 2
      %p105 = por %p103, %p104
      %p106 = scmp.ne.s32.totalorder %s95, %s96
      %p107 = scmp.eq.s32.totalorder %s24, 0
      %p108 = por %p106, %p107
      %p109 = scmp.ne.s32.totalorder %s95, %s96
      %p110 = scmp.eq.s32.totalorder %s25, 2
      %p111 = por %p109, %p110
      %p113 = scmp.ne.s32.totalorder %s96, %s112
      %p114 = scmp.eq.s32.totalorder %s25, 0
      %p115 = por %p113, %p114
      %s116 = ssub.s32 %s19, %s26
      %p117 = scmp.eq.s32.totalorder %s116, 0
      %s119 = sadd.s32 %s118, 1
      %s120 = scalar_select %p117, %s118, %s119
      %p123 = pneg %p117
      %p124 = scmp.eq.s32.totalorder %s19, 2
      %p125 = por %p123, %p124
      %p126 = scmp.ne.s32.totalorder %s118, %s121
      %p127 = scmp.eq.s32.totalorder %s19, 0
      %p128 = por %p126, %p127
      %p129 = scmp.ne.s32.totalorder %s118, %s121
      %p130 = scmp.eq.s32.totalorder %s24, 2
      %p131 = por %p129, %p130
      %p132 = scmp.ne.s32.totalorder %s121, %s122
      %p133 = scmp.eq.s32.totalorder %s24, 0
      %p134 = por %p132, %p133
      %p135 = scmp.ne.s32.totalorder %s121, %s122
      %p136 = scmp.eq.s32.totalorder %s25, 2
      %p137 = por %p135, %p136
      %p139 = scmp.ne.s32.totalorder %s122, %s138
      %p140 = scmp.eq.s32.totalorder %s25, 0
      %p141 = por %p139, %p140
      %s142 = ssub.s32 %s19, %s26
      %p143 = scmp.eq.s32.totalorder %s142, 0
      %s145 = sadd.s32 %s144, 1
      %s146 = scalar_select %p143, %s144, %s145
      %p149 = pneg %p143
      %p150 = scmp.eq.s32.totalorder %s19, 2
      %p151 = por %p149, %p150
      %p152 = scmp.ne.s32.totalorder %s144, %s147
      %p153 = scmp.eq.s32.totalorder %s19, 0
      %p154 = por %p152, %p153
      %p155 = scmp.ne.s32.totalorder %s144, %s147
      %p156 = scmp.eq.s32.totalorder %s24, 2
      %p157 = por %p155, %p156
      %p158 = scmp.ne.s32.totalorder %s147, %s148
      %p159 = scmp.eq.s32.totalorder %s24, 0
      %p160 = por %p158, %p159
      %p161 = scmp.ne.s32.totalorder %s147, %s148
      %p162 = scmp.eq.s32.totalorder %s25, 2
      %p163 = por %p161, %p162
      %p165 = scmp.ne.s32.totalorder %s148, %s164
      %p166 = scmp.eq.s32.totalorder %s25, 0
      %p167 = por %p165, %p166
      %s168 = ssub.s32 %s19, %s26
      %p169 = scmp.eq.s32.totalorder %s168, 0
      %s171 = sadd.s32 %s170, 1
      %s172 = scalar_select %p169, %s170, %s171
      %p175 = pneg %p169
      %p176 = scmp.eq.s32.totalorder %s19, 2
      %p177 = por %p175, %p176
      %p178 = scmp.ne.s32.totalorder %s170, %s173
      %p179 = scmp.eq.s32.totalorder %s19, 0
      %p180 = por %p178, %p179
      %p181 = scmp.ne.s32.totalorder %s170, %s173
      %p182 = scmp.eq.s32.totalorder %s24, 2
      %p183 = por %p181, %p182
      %p184 = scmp.ne.s32.totalorder %s173, %s174
      %p185 = scmp.eq.s32.totalorder %s24, 0
      %p186 = por %p184, %p185
      %p187 = scmp.ne.s32.totalorder %s173, %s174
      %p188 = scmp.eq.s32.totalorder %s25, 2
      %p189 = por %p187, %p188
      %p191 = scmp.ne.s32.totalorder %s174, %s190
      %p192 = scmp.eq.s32.totalorder %s25, 0
      %p193 = por %p191, %p192
      %s194 = ssub.s32 %s19, %s26
      %p195 = scmp.eq.s32.totalorder %s194, 0
      %s197 = sadd.s32 %s196, 1
      %s198 = scalar_select %p195, %s196, %s197
      %p201 = pneg %p195
      %p202 = scmp.eq.s32.totalorder %s19, 2
      %p203 = por %p201, %p202
      %p204 = scmp.ne.s32.totalorder %s196, %s199
      %p205 = scmp.eq.s32.totalorder %s19, 0
      %p206 = por %p204, %p205
      %p207 = scmp.ne.s32.totalorder %s196, %s199
      %p208 = scmp.eq.s32.totalorder %s24, 2
      %p209 = por %p207, %p208
      %p210 = scmp.ne.s32.totalorder %s199, %s200
      %p211 = scmp.eq.s32.totalorder %s24, 0
      %p212 = por %p210, %p211
      %p213 = scmp.ne.s32.totalorder %s199, %s200
      %p214 = scmp.eq.s32.totalorder %s25, 2
      %p215 = por %p213, %p214
      %p217 = scmp.ne.s32.totalorder %s200, %s216
      %p218 = scmp.eq.s32.totalorder %s25, 0
      %p219 = por %p217, %p218
      %s220 = ssub.s32 %s19, %s26
      %p221 = scmp.eq.s32.totalorder %s220, 0
      %s223 = sadd.s32 %s222, 1
      %s224 = scalar_select %p221, %s222, %s223
      %p227 = pneg %p221
      %p228 = scmp.eq.s32.totalorder %s19, 2
      %p229 = por %p227, %p228
      %p230 = scmp.ne.s32.totalorder %s222, %s225
      %p231 = scmp.eq.s32.totalorder %s19, 0
      %p232 = por %p230, %p231
      %p233 = scmp.ne.s32.totalorder %s222, %s225
      %p234 = scmp.eq.s32.totalorder %s24, 2
      %p235 = por %p233, %p234
      %p236 = scmp.ne.s32.totalorder %s225, %s226
      %p237 = scmp.eq.s32.totalorder %s24, 0
      %p238 = por %p236, %p237
      %p239 = scmp.ne.s32.totalorder %s225, %s226
      %p240 = scmp.eq.s32.totalorder %s25, 2
      %p241 = por %p239, %p240
      %p243 = scmp.ne.s32.totalorder %s226, %s242
      %p244 = scmp.eq.s32.totalorder %s25, 0
      %p245 = por %p243, %p244
      %s247 = sadd.s32 %s246, 1
      %p250 = scmp.eq.s32.totalorder %s19, 2
      %p251 = scmp.ne.s32.totalorder %s246, %s248
      %p252 = scmp.eq.s32.totalorder %s19, 0
      %p253 = por %p251, %p252
      %p254 = scmp.ne.s32.totalorder %s246, %s248
      %p255 = scmp.eq.s32.totalorder %s24, 2
      %p256 = por %p254, %p255
      %p257 = scmp.ne.s32.totalorder %s248, %s249
      %p258 = scmp.eq.s32.totalorder %s24, 0
      %p259 = por %p257, %p258
      %p260 = scmp.ne.s32.totalorder %s248, %s249
      %p261 = scmp.eq.s32.totalorder %s25, 2
      %p262 = por %p260, %p261
      %p264 = scmp.ne.s32.totalorder %s249, %s263
      %p265 = scmp.eq.s32.totalorder %s25, 0
      %p266 = por %p264, %p265
      %s267 = ssub.s32 %s19, %s26
      %p268 = scmp.eq.s32.totalorder %s267, 0
      %s270 = sadd.s32 %s269, 1
      %s271 = scalar_select %p268, %s269, %s270
      %p274 = pneg %p268
      %p275 = scmp.eq.s32.totalorder %s19, 2
      %p276 = por %p274, %p275
      %p277 = scmp.ne.s32.totalorder %s269, %s272
      %p278 = scmp.eq.s32.totalorder %s19, 0
      %p279 = por %p277, %p278
      %p280 = scmp.ne.s32.totalorder %s269, %s272
      %p281 = scmp.eq.s32.totalorder %s24, 2
      %p282 = por %p280, %p281
      %p283 = scmp.ne.s32.totalorder %s272, %s273
      %p284 = scmp.eq.s32.totalorder %s24, 0
      %p285 = por %p283, %p284
      %p286 = scmp.ne.s32.totalorder %s272, %s273
      %p287 = scmp.eq.s32.totalorder %s25, 2
      %p288 = por %p286, %p287
      %p290 = scmp.ne.s32.totalorder %s273, %s289
      %p291 = scmp.eq.s32.totalorder %s25, 0
      %p292 = por %p290, %p291
      %s293 = ssub.s32 %s19, %s26
      %p294 = scmp.eq.s32.totalorder %s293, 0
      %s296 = sadd.s32 %s295, 1
      %s297 = scalar_select %p294, %s295, %s296
      %p300 = pneg %p294
      %p301 = scmp.eq.s32.totalorder %s19, 2
      %p302 = por %p300, %p301
      %p303 = scmp.ne.s32.totalorder %s295, %s298
      %p304 = scmp.eq.s32.totalorder %s19, 0
      %p305 = por %p303, %p304
      %p306 = scmp.ne.s32.totalorder %s295, %s298
      %p307 = scmp.eq.s32.totalorder %s24, 2
      %p308 = por %p306, %p307
      %p309 = scmp.ne.s32.totalorder %s298, %s299
      %p310 = scmp.eq.s32.totalorder %s24, 0
      %p311 = por %p309, %p310
      %p312 = scmp.ne.s32.totalorder %s298, %s299
      %p313 = scmp.eq.s32.totalorder %s25, 2
      %p314 = por %p312, %p313
      %p316 = scmp.ne.s32.totalorder %s299, %s315
      %p317 = scmp.eq.s32.totalorder %s25, 0
      %p318 = por %p316, %p317
      %p319 = scmp.le.s32.totalorder 1, %s19
      %p320 = scmp.lt.s32.totalorder %s19, 4
      %p321 = pnand %p319, %p320
      %p322 = pneg %p321
      // Predicated region
      $region9: #{encoder_forward.1} parent=5 // pred_check
        _
      $region10: #{encoder_forward.1} parent=5 // pred_check_branch
        %324 = sbr.rel (%p321) target = $region12
      $region11: #{encoder_forward.1} parent=5 // pred_region
        %s325 = ssub.s32 %s19, 1
        // Predicated region
        $region13: #{encoder_forward.1} parent=11 // pred_check
          %p326 = pneg %p40
        $region14: #{encoder_forward.1} parent=11 // pred_check_branch
          %328 = sbr.rel (%p326) target = $region16
        $region15: #{encoder_forward.1} parent=11 // pred_region
          _
        $region16: #{encoder_forward.1} parent=11 // pred_fallthru
          _
        // Predicated region
        $region17: #{encoder_forward.1} parent=11 // pred_check
          %p329 = pneg %p61
        $region18: #{encoder_forward.1} parent=11 // pred_check_branch
          %331 = sbr.rel (%p329) target = $region20
        $region19: #{encoder_forward.1} parent=11 // pred_region
          _
        $region20: #{encoder_forward.1} parent=11 // pred_fallthru
          _
        // Predicated region
        $region21: #{encoder_forward.1} parent=11 // pred_check
          %p332 = pneg %p82
        $region22: #{encoder_forward.1} parent=11 // pred_check_branch
          %334 = sbr.rel (%p332) target = $region24
        $region23: #{encoder_forward.1} parent=11 // pred_region
          %s336 = ssub.s32 16, 16
          %337 = vsyncadd [#allocation4], %s336
          %s339 = sshll.u32 %s2, 4
          %s340 = int_to_ptr.vmem [resolvable:$true] %s339
          %342 = dma.vmem_to_smem %s340, 16, [#allocation3], [#allocation4]
        $region24: #{encoder_forward.1} parent=11 // pred_fallthru
          _
        // Predicated region
        $region25: #{encoder_forward.1} parent=11 // pred_check
          %p343 = pneg %p259
        $region26: #{encoder_forward.1} parent=11 // pred_check_branch
          %345 = sbr.rel (%p343) target = $region28
        $region27: #{encoder_forward.1} parent=11 // pred_region
          _
        $region28: #{encoder_forward.1} parent=11 // pred_fallthru
          _
      $region12: #{encoder_forward.1} parent=5 // pred_fallthru
        _
      %p346 = scmp.lt.s32.totalorder %s19, 3
      // Predicated region
      $region29: #{encoder_forward.1} parent=5 // pred_check
        %p347 = pneg %p346
      $region30: #{encoder_forward.1} parent=5 // pred_check_branch
        %349 = sbr.rel (%p347) target = $region32
      $region31: #{encoder_forward.1} parent=5 // pred_region
        // Predicated region
        $region33: #{encoder_forward.1} parent=31 // pred_check
          %p350 = pneg %p102
        $region34: #{encoder_forward.1} parent=31 // pred_check_branch
          %352 = sbr.rel (%p350) target = $region36
        $region35: #{encoder_forward.1} parent=31 // pred_region
          %p353 = scmp.lt.s32.totalorder %s19, 2
          %s354 = scalar_select %p353, %s19, 2
          %s355 = smul.addr %s354, 16
          %s356 = smul.addr %s355, 8
          %s357 = scalar_lea.vmem %s3, %s356
        $region36: #{encoder_forward.1} parent=31 // pred_fallthru
          _
        // Predicated region
        $region37: #{encoder_forward.1} parent=31 // pred_check
          %p358 = pneg %p128
        $region38: #{encoder_forward.1} parent=31 // pred_check_branch
          %360 = sbr.rel (%p358) target = $region40
        $region39: #{encoder_forward.1} parent=31 // pred_region
          %p361 = scmp.lt.s32.totalorder %s19, 2
          %s362 = scalar_select %p361, %s19, 2
          %s363 = scalar_lea.vmem %s4, %s362
        $region40: #{encoder_forward.1} parent=31 // pred_fallthru
          _
        // Predicated region
        $region41: #{encoder_forward.1} parent=31 // pred_check
          %p364 = pneg %p154
        $region42: #{encoder_forward.1} parent=31 // pred_check_branch
          %366 = sbr.rel (%p364) target = $region44
        $region43: #{encoder_forward.1} parent=31 // pred_region
          %p367 = scmp.lt.s32.totalorder %s19, 2
          %s368 = scalar_select %p367, %s19, 2
          %s369 = scalar_lea.vmem %s5, %s368
        $region44: #{encoder_forward.1} parent=31 // pred_fallthru
          _
        // Predicated region
        $region45: #{encoder_forward.1} parent=31 // pred_check
          %p370 = pneg %p180
        $region46: #{encoder_forward.1} parent=31 // pred_check_branch
          %372 = sbr.rel (%p370) target = $region48
        $region47: #{encoder_forward.1} parent=31 // pred_region
          %p373 = scmp.lt.s32.totalorder %s19, 2
          %s374 = scalar_select %p373, %s19, 2
          %s375 = smul.addr %s374, 16
          %s376 = smul.addr %s375, 8
          %s377 = scalar_lea.vmem %s6, %s376
        $region48: #{encoder_forward.1} parent=31 // pred_fallthru
          _
        // Predicated region
        $region49: #{encoder_forward.1} parent=31 // pred_check
          %p378 = pneg %p206
        $region50: #{encoder_forward.1} parent=31 // pred_check_branch
          %380 = sbr.rel (%p378) target = $region52
        $region51: #{encoder_forward.1} parent=31 // pred_region
          %p381 = scmp.lt.s32.totalorder %s19, 2
          %s382 = scalar_select %p381, %s19, 2
          %s383 = scalar_lea.vmem %s7, %s382
        $region52: #{encoder_forward.1} parent=31 // pred_fallthru
          _
        // Predicated region
        $region53: #{encoder_forward.1} parent=31 // pred_check
          %p384 = pneg %p232
        $region54: #{encoder_forward.1} parent=31 // pred_check_branch
          %386 = sbr.rel (%p384) target = $region56
        $region55: #{encoder_forward.1} parent=31 // pred_region
          %p387 = scmp.lt.s32.totalorder %s19, 2
          %s388 = scalar_select %p387, %s19, 2
          %s389 = scalar_lea.vmem %s8, %s388
        $region56: #{encoder_forward.1} parent=31 // pred_fallthru
          _
      $region32: #{encoder_forward.1} parent=5 // pred_fallthru
        _
      %p390 = scmp.le.s32.totalorder 1, %s19
      %p391 = scmp.lt.s32.totalorder %s19, 4
      %p392 = pnand %p390, %p391
      %p393 = pneg %p392
      // Predicated region
      $region57: #{encoder_forward.1} parent=5 // pred_check
        _
      $region58: #{encoder_forward.1} parent=5 // pred_check_branch
        %395 = sbr.rel (%p392) target = $region60
      $region59: #{encoder_forward.1} parent=5 // pred_region
        %s396 = ssub.s32 %s19, 1
        // Predicated region
        $region61: #{encoder_forward.1} parent=59 // pred_check
          %p397 = pneg %p82
        $region62: #{encoder_forward.1} parent=59 // pred_check_branch
          %399 = sbr.rel (%p397) target = $region64
        $region63: #{encoder_forward.1} parent=59 // pred_region
          %400 = dma.done [#allocation4], 16
        $region64: #{encoder_forward.1} parent=59 // pred_fallthru
          _
        %401 = sfence
        %p402 = pneg %p40
        %p403 = pneg %p37
        %p404 = pneg %p61
        %p405 = pneg %p58
        %p406 = pneg %p82
        %p407 = pneg %p79
        %p408 = scmp.lt.s32.totalorder %s24, 2
        %s409 = scalar_select %p408, %s24, 2
        %s410 = smul.addr %s409, 16
        %s411 = smul.addr %s410, 8
        %s412 = scalar_lea.vmem %s3, %s411
        %p413 = pneg %p108
        %p414 = pneg %p105
        %p415 = scmp.lt.s32.totalorder %s24, 2
        %s416 = scalar_select %p415, %s24, 2
        %s417 = scalar_lea.vmem %s4, %s416
        %p418 = pneg %p134
        %p419 = pneg %p131
        %p420 = scmp.lt.s32.totalorder %s24, 2
        %s421 = scalar_select %p420, %s24, 2
        %s422 = scalar_lea.vmem %s5, %s421
        %p423 = pneg %p160
        %p424 = pneg %p157
        %p425 = scmp.lt.s32.totalorder %s24, 2
        %s426 = scalar_select %p425, %s24, 2
        %s427 = smul.addr %s426, 16
        %s428 = smul.addr %s427, 8
        %s429 = scalar_lea.vmem %s6, %s428
        %p430 = pneg %p186
        %p431 = pneg %p183
        %p432 = scmp.lt.s32.totalorder %s24, 2
        %s433 = scalar_select %p432, %s24, 2
        %s434 = scalar_lea.vmem %s7, %s433
        %p435 = pneg %p212
        %p436 = pneg %p209
        %p437 = scmp.lt.s32.totalorder %s24, 2
        %s438 = scalar_select %p437, %s24, 2
        %s439 = scalar_lea.vmem %s8, %s438
        %p440 = pneg %p238
        %p441 = pneg %p235
        %p442 = pneg %p259
        %p443 = pneg %p256
        %p444 = pneg %p285
        %p445 = pneg %p282
        %s446 = sand.u32 %s272, 1
        %s447 = sand.u32 %s272, 1
        %s448 = smul.addr %s447, 128
        %s449 = scalar_lea.vmem [#allocation5], %s448
        %p450 = pneg %p311
        %p451 = pneg %p308
        %s452 = sand.u32 %s298, 1
        %s453 = sand.u32 %s298, 1
        %s454 = smul.addr %s453, 16
        %s455 = scalar_lea.vmem [#allocation6], %s454
        %p456 = scmp.lt.s32.totalorder %s24, 2
        %s457 = scalar_select %p456, %s24, 2
        %s458 = smul.addr %s457, 16
        %s459 = smul.addr %s458, 8
        %s460 = scalar_lea.vmem %s3, %s459
        %p461 = scmp.lt.s32.totalorder %s24, 2
        %s462 = scalar_select %p461, %s24, 2
        %s463 = scalar_lea.vmem %s4, %s462
        %p464 = scmp.lt.s32.totalorder %s24, 2
        %s465 = scalar_select %p464, %s24, 2
        %s466 = scalar_lea.vmem %s5, %s465
        %p467 = scmp.lt.s32.totalorder %s24, 2
        %s468 = scalar_select %p467, %s24, 2
        %s469 = smul.addr %s468, 16
        %s470 = smul.addr %s469, 8
        %s471 = scalar_lea.vmem %s6, %s470
        %p472 = scmp.lt.s32.totalorder %s24, 2
        %s473 = scalar_select %p472, %s24, 2
        %s474 = scalar_lea.vmem %s7, %s473
        %p475 = scmp.lt.s32.totalorder %s24, 2
        %s476 = scalar_select %p475, %s24, 2
        %s477 = scalar_lea.vmem %s8, %s476
        %p479 = scmp.eq.s32.totalorder %s24, 0
        // Predicated region
        $region65: #{encoder_forward.1} parent=59 // pred_check
          %p480 = pneg %p479
        $region66: #{encoder_forward.1} parent=59 // pred_check_branch
          %482 = sbr.rel (%p480) target = $region68
        $region67: #{encoder_forward.1} parent=59 // pred_region
          %v483 = vld [vmem:[%s1] sm:$0xff]
          %v484 = vld [vmem:[%s1 + $0x8] sm:$0xff]
          %v485 = vld [vmem:[%s1 + $0x10] sm:$0xff]
          %v486 = vld [vmem:[%s1 + $0x18] sm:$0xff]
          %v487 = vld [vmem:[%s1 + $0x20] sm:$0xff]
          %v488 = vld [vmem:[%s1 + $0x28] sm:$0xff]
          %v489 = vld [vmem:[%s1 + $0x30] sm:$0xff]
          %v490 = vld [vmem:[%s1 + $0x38] sm:$0xff]
          %v491 = vld [vmem:[%s1 + $0x40] sm:$0xff]
          %v492 = vld [vmem:[%s1 + $0x48] sm:$0xff]
          %v493 = vld [vmem:[%s1 + $0x50] sm:$0xff]
          %v494 = vld [vmem:[%s1 + $0x58] sm:$0xff]
          %v495 = vld [vmem:[%s1 + $0x60] sm:$0xff]
          %v496 = vld [vmem:[%s1 + $0x68] sm:$0xff]
          %v497 = vld [vmem:[%s1 + $0x70] sm:$0xff]
          %v498 = vld [vmem:[%s1 + $0x78] sm:$0xff]
          %499 = vst [vmem:[#allocation2] sm:$0xff] %v483
          %500 = vst [vmem:[#allocation2 + $0x8] sm:$0xff] %v484
          %501 = vst [vmem:[#allocation2 + $0x10] sm:$0xff] %v485
          %502 = vst [vmem:[#allocation2 + $0x18] sm:$0xff] %v486
          %503 = vst [vmem:[#allocation2 + $0x20] sm:$0xff] %v487
          %504 = vst [vmem:[#allocation2 + $0x28] sm:$0xff] %v488
          %505 = vst [vmem:[#allocation2 + $0x30] sm:$0xff] %v489
          %506 = vst [vmem:[#allocation2 + $0x38] sm:$0xff] %v490
          %507 = vst [vmem:[#allocation2 + $0x40] sm:$0xff] %v491
          %508 = vst [vmem:[#allocation2 + $0x48] sm:$0xff] %v492
          %509 = vst [vmem:[#allocation2 + $0x50] sm:$0xff] %v493
          %510 = vst [vmem:[#allocation2 + $0x58] sm:$0xff] %v494
          %511 = vst [vmem:[#allocation2 + $0x60] sm:$0xff] %v495
          %512 = vst [vmem:[#allocation2 + $0x68] sm:$0xff] %v496
          %513 = vst [vmem:[#allocation2 + $0x70] sm:$0xff] %v497
          %514 = vst [vmem:[#allocation2 + $0x78] sm:$0xff] %v498
        $region68: #{encoder_forward.1} parent=59 // pred_fallthru
          _
        %v515 = vld [vmem:[#allocation2] sm:$0xff]
        %v516 = vld [vmem:[#allocation2 + $0x8] sm:$0xff]
        %v517 = vld [vmem:[#allocation2 + $0x10] sm:$0xff]
        %v518 = vld [vmem:[#allocation2 + $0x18] sm:$0xff]
        %v519 = vld [vmem:[#allocation2 + $0x20] sm:$0xff]
        %v520 = vld [vmem:[#allocation2 + $0x28] sm:$0xff]
        %v521 = vld [vmem:[#allocation2 + $0x30] sm:$0xff]
        %v522 = vld [vmem:[#allocation2 + $0x38] sm:$0xff]
        %v523 = vld [vmem:[#allocation2 + $0x40] sm:$0xff]
        %v524 = vld [vmem:[#allocation2 + $0x48] sm:$0xff]
        %v525 = vld [vmem:[#allocation2 + $0x50] sm:$0xff]
        %v526 = vld [vmem:[#allocation2 + $0x58] sm:$0xff]
        %v527 = vld [vmem:[#allocation2 + $0x60] sm:$0xff]
        %v528 = vld [vmem:[#allocation2 + $0x68] sm:$0xff]
        %v529 = vld [vmem:[#allocation2 + $0x70] sm:$0xff]
        %v530 = vld [vmem:[#allocation2 + $0x78] sm:$0xff]
        %v531 = vlaneseq
        %v532 = vshrl.u32 %v531, 7
        %v533 = vadd.s32 %v532, 8
        %v534 = vadd.s32 %v532, 16
        %v535 = vadd.s32 %v532, 24
        %v536 = vadd.s32 %v532, 32
        %v537 = vadd.s32 %v532, 40
        %v538 = vadd.s32 %v532, 48
        %v539 = vadd.s32 %v532, 56
        %v540 = vadd.s32 %v532, 64
        %v541 = vadd.s32 %v532, 72
        %v542 = vadd.s32 %v532, 80
        %v543 = vadd.s32 %v532, 88
        %v544 = vadd.s32 %v532, 96
        %v545 = vadd.s32 %v532, 104
        %v546 = vadd.s32 %v532, 112
        %v547 = vadd.s32 %v532, 120
        %vm548 = vcmp.lt.s32.totalorder %v532, 16
        %vm549 = vcmp.lt.s32.totalorder %v533, 16
        %vm550 = vcmp.lt.s32.totalorder %v534, 16
        %vm551 = vcmp.lt.s32.totalorder %v535, 16
        %vm552 = vcmp.lt.s32.totalorder %v536, 16
        %vm553 = vcmp.lt.s32.totalorder %v537, 16
        %vm554 = vcmp.lt.s32.totalorder %v538, 16
        %vm555 = vcmp.lt.s32.totalorder %v539, 16
        %vm556 = vcmp.lt.s32.totalorder %v540, 16
        %vm557 = vcmp.lt.s32.totalorder %v541, 16
        %vm558 = vcmp.lt.s32.totalorder %v542, 16
        %vm559 = vcmp.lt.s32.totalorder %v543, 16
        %vm560 = vcmp.lt.s32.totalorder %v544, 16
        %vm561 = vcmp.lt.s32.totalorder %v545, 16
        %vm562 = vcmp.lt.s32.totalorder %v546, 16
        %vm563 = vcmp.lt.s32.totalorder %v547, 16
        %v564 = vsel %vm548, 1, 0
        %v565 = vsel %vm549, 1, 0
        %v566 = vsel %vm550, 1, 0
        %v567 = vsel %vm551, 1, 0
        %v568 = vsel %vm552, 1, 0
        %v569 = vsel %vm553, 1, 0
        %v570 = vsel %vm554, 1, 0
        %v571 = vsel %vm555, 1, 0
        %v572 = vsel %vm556, 1, 0
        %v573 = vsel %vm557, 1, 0
        %v574 = vsel %vm558, 1, 0
        %v575 = vsel %vm559, 1, 0
        %v576 = vsel %vm560, 1, 0
        %v577 = vsel %vm561, 1, 0
        %v578 = vsel %vm562, 1, 0
        %v579 = vsel %vm563, 1, 0
        %v580 = vcvt.s32.f32 %v564
        %v581 = vcvt.s32.f32 %v565
        %v582 = vcvt.s32.f32 %v566
        %v583 = vcvt.s32.f32 %v567
        %v584 = vcvt.s32.f32 %v568
        %v585 = vcvt.s32.f32 %v569
        %v586 = vcvt.s32.f32 %v570
        %v587 = vcvt.s32.f32 %v571
        %v588 = vcvt.s32.f32 %v572
        %v589 = vcvt.s32.f32 %v573
        %v590 = vcvt.s32.f32 %v574
        %v591 = vcvt.s32.f32 %v575
        %v592 = vcvt.s32.f32 %v576
        %v593 = vcvt.s32.f32 %v577
        %v594 = vcvt.s32.f32 %v578
        %v595 = vcvt.s32.f32 %v579
        %s596 = sld [smem:[#allocation3 + %s24]]
        %s597 = sadd.f32 %s596, 1.0
        %v598 = vstv %s597
        %v599 = vmul.f32 %v598, %v515
        %v600 = vmul.f32 %v598, %v516
        %v601 = vmul.f32 %v598, %v517
        %v602 = vmul.f32 %v598, %v518
        %v603 = vmul.f32 %v598, %v519
        %v604 = vmul.f32 %v598, %v520
        %v605 = vmul.f32 %v598, %v521
        %v606 = vmul.f32 %v598, %v522
        %v607 = vmul.f32 %v598, %v523
        %v608 = vmul.f32 %v598, %v524
        %v609 = vmul.f32 %v598, %v525
        %v610 = vmul.f32 %v598, %v526
        %v611 = vmul.f32 %v598, %v527
        %v612 = vmul.f32 %v598, %v528
        %v613 = vmul.f32 %v598, %v529
        %v614 = vmul.f32 %v598, %v530
        %v615 = vld [vmem:[%s0] sm:$0xf]
        %v616 = vld [vmem:[%s0 + $0x4] sm:$0xf]
        %v617 = vld [vmem:[%s0 + $0x8] sm:$0xf]
        %v618 = vld [vmem:[%s0 + $0xc] sm:$0xf]
        %v619 = vld [vmem:[%s0 + $0x10] sm:$0xf]
        %v620 = vld [vmem:[%s0 + $0x14] sm:$0xf]
        %v621 = vld [vmem:[%s0 + $0x18] sm:$0xf]
        %v622 = vld [vmem:[%s0 + $0x1c] sm:$0xf]
        %v623 = vld [vmem:[%s0 + $0x20] sm:$0xf]
        %v624 = vld [vmem:[%s0 + $0x24] sm:$0xf]
        %v625 = vld [vmem:[%s0 + $0x28] sm:$0xf]
        %v626 = vld [vmem:[%s0 + $0x2c] sm:$0xf]
        %v627 = vld [vmem:[%s0 + $0x30] sm:$0xf]
        %v628 = vld [vmem:[%s0 + $0x34] sm:$0xf]
        %v629 = vld [vmem:[%s0 + $0x38] sm:$0xf]
        %v630 = vld [vmem:[%s0 + $0x3c] sm:$0xf]
        %v631 = vpack.c.bf16 %v516, %v515
        %v632 = vpack.c.bf16 %v518, %v517
        %v633 = vpack.c.bf16 %v520, %v519
        %v634 = vpack.c.bf16 %v522, %v521
        %v635 = vpack.c.bf16 %v524, %v523
        %v636 = vpack.c.bf16 %v526, %v525
        %v637 = vpack.c.bf16 %v528, %v527
        %v638 = vpack.c.bf16 %v530, %v529
        %v655 = vunpack.c.l.b16 %v615
        %v656 = vunpack.c.l.b16 %v616
        %v657 = vunpack.c.l.b16 %v617
        %v658 = vunpack.c.l.b16 %v618
        %v659 = vunpack.c.l.b16 %v619
        %v660 = vunpack.c.l.b16 %v620
        %v661 = vunpack.c.l.b16 %v621
        %v662 = vunpack.c.l.b16 %v622
        %v663 = vunpack.c.l.b16 %v623
        %v664 = vunpack.c.l.b16 %v624
        %v665 = vunpack.c.l.b16 %v625
        %v666 = vunpack.c.l.b16 %v626
        %v667 = vunpack.c.l.b16 %v627
        %v668 = vunpack.c.l.b16 %v628
        %v669 = vunpack.c.l.b16 %v629
        %v670 = vunpack.c.l.b16 %v630
        %v671 = vpack.c.b16 %v656, %v655
        %v672 = vpack.c.b16 %v658, %v657
        %v673 = vpack.c.b16 %v660, %v659
        %v674 = vpack.c.b16 %v662, %v661
        %v675 = vpack.c.b16 %v664, %v663
        %v676 = vpack.c.b16 %v666, %v665
        %v677 = vpack.c.b16 %v668, %v667
        %v678 = vpack.c.b16 %v670, %v669
        %687 = vmatprep.subr.bf16.mxu0 0
        %688 = vmatpush1.bf16.msra.mxu0 %v631
        %689 = vmatprep.subr.bf16.mxu0 0
        %690 = vmatpush1.bf16.msra.mxu0 %v632
        %691 = vmatprep.subr.bf16.mxu0 0
        %692 = vmatpush1.bf16.msra.mxu0 %v633
        %693 = vmatprep.subr.bf16.mxu0 0
        %694 = vmatpush1.bf16.msra.mxu0 %v634
        %695 = vmatprep.subr.bf16.mxu0 0
        %696 = vmatpush1.bf16.msra.mxu0 %v635
        %697 = vmatprep.subr.bf16.mxu0 0
        %698 = vmatpush1.bf16.msra.mxu0 %v636
        %699 = vmatprep.subr.bf16.mxu0 0
        %700 = vmatpush1.bf16.msra.mxu0 %v637
        %701 = vmatprep.subr.bf16.mxu0 0
        %702 = vmatpush1.bf16.msra.mxu0 %v638
        %703 = vmatprep.subr.bf16.mxu0 0
        %704 = vmatpush1.bf16.msra.mxu0 0
        %705 = vmatprep.subr.bf16.mxu0 0
        %706 = vmatpush1.bf16.msra.mxu0 0
        %707 = vmatprep.subr.bf16.mxu0 0
        %708 = vmatpush1.bf16.msra.mxu0 0
        %709 = vmatprep.subr.bf16.mxu0 0
        %710 = vmatpush1.bf16.msra.mxu0 0
        %711 = vmatprep.subr.bf16.mxu0 0
        %712 = vmatpush1.bf16.msra.mxu0 0
        %713 = vmatprep.subr.bf16.mxu0 0
        %714 = vmatpush1.bf16.msra.mxu0 0
        %715 = vmatprep.subr.bf16.mxu0 0
        %716 = vmatpush1.bf16.msra.mxu0 0
        %717 = vmatprep.subr.bf16.mxu0 0
        %718 = vmatpush1.bf16.msra.mxu0 0
        %719 = vmatprep.mubr.bf16.mxu0 0
        %720 = vmatmul.mubr.bf16.gmra.mrb[0].mxu0 %v671
        %v721 = vpop.f32.mrb[0].mxu0
        %v722 = vadd.f32 0.0, %v721
        %v723 = vpop.f32.mrb[0].mxu0
        %v724 = vpop.f32.mrb[0].mxu0
        %v725 = vadd.f32 0.0, %v724
        %v726 = vpop.f32.mrb[0].mxu0
        %727 = vmatprep.mubr.bf16.mxu0 0
        %728 = vmatmul.mubr.bf16.gmra.mrb[0].mxu0 %v672
        %v729 = vpop.f32.mrb[0].mxu0
        %v730 = vadd.f32 0.0, %v729
        %v731 = vpop.f32.mrb[0].mxu0
        %v732 = vpop.f32.mrb[0].mxu0
        %v733 = vadd.f32 0.0, %v732
        %v734 = vpop.f32.mrb[0].mxu0
        %735 = vmatprep.mubr.bf16.mxu0 0
        %736 = vmatmul.mubr.bf16.gmra.mrb[0].mxu0 %v673
        %v737 = vpop.f32.mrb[0].mxu0
        %v738 = vadd.f32 0.0, %v737
        %v739 = vpop.f32.mrb[0].mxu0
        %v740 = vpop.f32.mrb[0].mxu0
        %v741 = vadd.f32 0.0, %v740
        %v742 = vpop.f32.mrb[0].mxu0
        %743 = vmatprep.mubr.bf16.mxu0 0
        %744 = vmatmul.mubr.bf16.gmra.mrb[0].mxu0 %v674
        %v745 = vpop.f32.mrb[0].mxu0
        %v746 = vadd.f32 0.0, %v745
        %v747 = vpop.f32.mrb[0].mxu0
        %v748 = vpop.f32.mrb[0].mxu0
        %v749 = vadd.f32 0.0, %v748
        %v750 = vpop.f32.mrb[0].mxu0
        %751 = vmatprep.mubr.bf16.mxu0 0
        %752 = vmatmul.mubr.bf16.gmra.mrb[0].mxu0 %v675
        %v753 = vpop.f32.mrb[0].mxu0
        %v754 = vadd.f32 0.0, %v753
        %v755 = vpop.f32.mrb[0].mxu0
        %v756 = vpop.f32.mrb[0].mxu0
        %v757 = vadd.f32 0.0, %v756
        %v758 = vpop.f32.mrb[0].mxu0
        %759 = vmatprep.mubr.bf16.mxu0 0
        %760 = vmatmul.mubr.bf16.gmra.mrb[0].mxu0 %v676
        %v761 = vpop.f32.mrb[0].mxu0
        %v762 = vadd.f32 0.0, %v761
        %v763 = vpop.f32.mrb[0].mxu0
        %v764 = vpop.f32.mrb[0].mxu0
        %v765 = vadd.f32 0.0, %v764
        %v766 = vpop.f32.mrb[0].mxu0
        %767 = vmatprep.mubr.bf16.mxu0 0
        %768 = vmatmul.mubr.bf16.gmra.mrb[0].mxu0 %v677
        %v769 = vpop.f32.mrb[0].mxu0
        %v770 = vadd.f32 0.0, %v769
        %v771 = vpop.f32.mrb[0].mxu0
        %v772 = vpop.f32.mrb[0].mxu0
        %v773 = vadd.f32 0.0, %v772
        %v774 = vpop.f32.mrb[0].mxu0
        %775 = vmatprep.mubr.bf16.mxu0 0
        %776 = vmatmul.mubr.bf16.gmra.mrb[0].mxu0 %v678
        %v777 = vpop.f32.mrb[0].mxu0
        %v778 = vadd.f32 0.0, %v777
        %v779 = vpop.f32.mrb[0].mxu0
        %v780 = vpop.f32.mrb[0].mxu0
        %v781 = vadd.f32 0.0, %v780
        %v782 = vpop.f32.mrb[0].mxu0
        %783 = vdwg.mxu0
        %v784 = vadd.f32 %v599, %v722
        %v785 = vadd.f32 %v600, %v725
        %v786 = vadd.f32 %v601, %v730
        %v787 = vadd.f32 %v602, %v733
        %v788 = vadd.f32 %v603, %v738
        %v789 = vadd.f32 %v604, %v741
        %v790 = vadd.f32 %v605, %v746
        %v791 = vadd.f32 %v606, %v749
        %v792 = vadd.f32 %v607, %v754
        %v793 = vadd.f32 %v608, %v757
        %v794 = vadd.f32 %v609, %v762
        %v795 = vadd.f32 %v610, %v765
        %v796 = vadd.f32 %v611, %v770
        %v797 = vadd.f32 %v612, %v773
        %v798 = vadd.f32 %v613, %v778
        %v799 = vadd.f32 %v614, %v781
        %v800 = vld [vmem:[%s460] sm:$0xff]
        %v801 = vld [vmem:[%s460 + $0x8] sm:$0xff]
        %v802 = vld [vmem:[%s460 + $0x10] sm:$0xff]
        %v803 = vld [vmem:[%s460 + $0x18] sm:$0xff]
        %v804 = vld [vmem:[%s460 + $0x20] sm:$0xff]
        %v805 = vld [vmem:[%s460 + $0x28] sm:$0xff]
        %v806 = vld [vmem:[%s460 + $0x30] sm:$0xff]
        %v807 = vld [vmem:[%s460 + $0x38] sm:$0xff]
        %v808 = vld [vmem:[%s460 + $0x40] sm:$0xff]
        %v809 = vld [vmem:[%s460 + $0x48] sm:$0xff]
        %v810 = vld [vmem:[%s460 + $0x50] sm:$0xff]
        %v811 = vld [vmem:[%s460 + $0x58] sm:$0xff]
        %v812 = vld [vmem:[%s460 + $0x60] sm:$0xff]
        %v813 = vld [vmem:[%s460 + $0x68] sm:$0xff]
        %v814 = vld [vmem:[%s460 + $0x70] sm:$0xff]
        %v815 = vld [vmem:[%s460 + $0x78] sm:$0xff]
        %816 = vmatprep.subr.mxu0 0.0
        %817 = vmatpush1.msra.mxu0 %v800
        %818 = vmatprep.subr.mxu0 0.0
        %819 = vmatpush1.msra.mxu0 %v801
        %820 = vmatprep.subr.mxu0 0.0
        %821 = vmatpush1.msra.mxu0 %v802
        %822 = vmatprep.subr.mxu0 0.0
        %823 = vmatpush1.msra.mxu0 %v803
        %824 = vmatprep.subr.mxu0 0.0
        %825 = vmatpush1.msra.mxu0 %v804
        %826 = vmatprep.subr.mxu0 0.0
        %827 = vmatpush1.msra.mxu0 %v805
        %828 = vmatprep.subr.mxu0 0.0
        %829 = vmatpush1.msra.mxu0 %v806
        %830 = vmatprep.subr.mxu0 0.0
        %831 = vmatpush1.msra.mxu0 %v807
        %832 = vmatprep.subr.mxu0 0.0
        %833 = vmatpush1.msra.mxu0 %v808
        %834 = vmatprep.subr.mxu0 0.0
        %835 = vmatpush1.msra.mxu0 %v809
        %836 = vmatprep.subr.mxu0 0.0
        %837 = vmatpush1.msra.mxu0 %v810
        %838 = vmatprep.subr.mxu0 0.0
        %839 = vmatpush1.msra.mxu0 %v811
        %840 = vmatprep.subr.mxu0 0.0
        %841 = vmatpush1.msra.mxu0 %v812
        %842 = vmatprep.subr.mxu0 0.0
        %843 = vmatpush1.msra.mxu0 %v813
        %844 = vmatprep.subr.mxu0 0.0
        %845 = vmatpush1.msra.mxu0 %v814
        %846 = vmatprep.subr.mxu0 0.0
        %847 = vmatpush1.msra.mxu0 %v815
        %848 = vmatprep.subr.mxu0 0.0
        %849 = vmatpush1.msra.mxu0 0.0
        %850 = vmatprep.subr.mxu0 0.0
        %851 = vmatpush1.msra.mxu0 0.0
        %852 = vmatprep.subr.mxu0 0.0
        %853 = vmatpush1.msra.mxu0 0.0
        %854 = vmatprep.subr.mxu0 0.0
        %855 = vmatpush1.msra.mxu0 0.0
        %856 = vmatprep.subr.mxu0 0.0
        %857 = vmatpush1.msra.mxu0 0.0
        %858 = vmatprep.subr.mxu0 0.0
        %859 = vmatpush1.msra.mxu0 0.0
        %860 = vmatprep.subr.mxu0 0.0
        %861 = vmatpush1.msra.mxu0 0.0
        %862 = vmatprep.subr.mxu0 0.0
        %863 = vmatpush1.msra.mxu0 0.0
        %864 = vmatprep.subr.mxu0 0.0
        %865 = vmatpush1.msra.mxu0 0.0
        %866 = vmatprep.subr.mxu0 0.0
        %867 = vmatpush1.msra.mxu0 0.0
        %868 = vmatprep.subr.mxu0 0.0
        %869 = vmatpush1.msra.mxu0 0.0
        %870 = vmatprep.subr.mxu0 0.0
        %871 = vmatpush1.msra.mxu0 0.0
        %872 = vmatprep.subr.mxu0 0.0
        %873 = vmatpush1.msra.mxu0 0.0
        %874 = vmatprep.subr.mxu0 0.0
        %875 = vmatpush1.msra.mxu0 0.0
        %876 = vmatprep.subr.mxu0 0.0
        %877 = vmatpush1.msra.mxu0 0.0
        %878 = vmatprep.subr.mxu0 0.0
        %879 = vmatpush1.msra.mxu0 0.0
        %880 = vmatprep.mubr.f32.mxu0 0.0
        %881 = vmatmul.mubr.f32.gmra.mrb[0].mxu0 %v784
        %v882 = vpop.f32.mrb[0].mxu0
        %v883 = vadd.f32 0.0, %v882
        %v884 = vpop.f32.mrb[0].mxu0
        %885 = vmatprep.mubr.f32.mxu0 0.0
        %886 = vmatmul.mubr.f32.gmra.mrb[0].mxu0 %v785
        %v887 = vpop.f32.mrb[0].mxu0
        %v888 = vadd.f32 0.0, %v887
        %v889 = vpop.f32.mrb[0].mxu0
        %890 = vmatprep.mubr.f32.mxu0 0.0
        %891 = vmatmul.mubr.f32.gmra.mrb[0].mxu0 %v786
        %v892 = vpop.f32.mrb[0].mxu0
        %v893 = vadd.f32 0.0, %v892
        %v894 = vpop.f32.mrb[0].mxu0
        %895 = vmatprep.mubr.f32.mxu0 0.0
        %896 = vmatmul.mubr.f32.gmra.mrb[0].mxu0 %v787
        %v897 = vpop.f32.mrb[0].mxu0
        %v898 = vadd.f32 0.0, %v897
        %v899 = vpop.f32.mrb[0].mxu0
        %900 = vmatprep.mubr.f32.mxu0 0.0
        %901 = vmatmul.mubr.f32.gmra.mrb[0].mxu0 %v788
        %v902 = vpop.f32.mrb[0].mxu0
        %v903 = vadd.f32 0.0, %v902
        %v904 = vpop.f32.mrb[0].mxu0
        %905 = vmatprep.mubr.f32.mxu0 0.0
        %906 = vmatmul.mubr.f32.gmra.mrb[0].mxu0 %v789
        %v907 = vpop.f32.mrb[0].mxu0
        %v908 = vadd.f32 0.0, %v907
        %v909 = vpop.f32.mrb[0].mxu0
        %910 = vmatprep.mubr.f32.mxu0 0.0
        %911 = vmatmul.mubr.f32.gmra.mrb[0].mxu0 %v790
        %v912 = vpop.f32.mrb[0].mxu0
        %v913 = vadd.f32 0.0, %v912
        %v914 = vpop.f32.mrb[0].mxu0
        %915 = vmatprep.mubr.f32.mxu0 0.0
        %916 = vmatmul.mubr.f32.gmra.mrb[0].mxu0 %v791
        %v917 = vpop.f32.mrb[0].mxu0
        %v918 = vadd.f32 0.0, %v917
        %v919 = vpop.f32.mrb[0].mxu0
        %920 = vmatprep.mubr.f32.mxu0 0.0
        %921 = vmatmul.mubr.f32.gmra.mrb[0].mxu0 %v792
        %v922 = vpop.f32.mrb[0].mxu0
        %v923 = vadd.f32 0.0, %v922
        %v924 = vpop.f32.mrb[0].mxu0
        %925 = vmatprep.mubr.f32.mxu0 0.0
        %926 = vmatmul.mubr.f32.gmra.mrb[0].mxu0 %v793
        %v927 = vpop.f32.mrb[0].mxu0
        %v928 = vadd.f32 0.0, %v927
        %v929 = vpop.f32.mrb[0].mxu0
        %930 = vmatprep.mubr.f32.mxu0 0.0
        %931 = vmatmul.mubr.f32.gmra.mrb[0].mxu0 %v794
        %v932 = vpop.f32.mrb[0].mxu0
        %v933 = vadd.f32 0.0, %v932
        %v934 = vpop.f32.mrb[0].mxu0
        %935 = vmatprep.mubr.f32.mxu0 0.0
        %936 = vmatmul.mubr.f32.gmra.mrb[0].mxu0 %v795
        %v937 = vpop.f32.mrb[0].mxu0
        %v938 = vadd.f32 0.0, %v937
        %v939 = vpop.f32.mrb[0].mxu0
        %940 = vmatprep.mubr.f32.mxu0 0.0
        %941 = vmatmul.mubr.f32.gmra.mrb[0].mxu0 %v796
        %v942 = vpop.f32.mrb[0].mxu0
        %v943 = vadd.f32 0.0, %v942
        %v944 = vpop.f32.mrb[0].mxu0
        %945 = vmatprep.mubr.f32.mxu0 0.0
        %946 = vmatmul.mubr.f32.gmra.mrb[0].mxu0 %v797
        %v947 = vpop.f32.mrb[0].mxu0
        %v948 = vadd.f32 0.0, %v947
        %v949 = vpop.f32.mrb[0].mxu0
        %950 = vmatprep.mubr.f32.mxu0 0.0
        %951 = vmatmul.mubr.f32.gmra.mrb[0].mxu0 %v798
        %v952 = vpop.f32.mrb[0].mxu0
        %v953 = vadd.f32 0.0, %v952
        %v954 = vpop.f32.mrb[0].mxu0
        %955 = vmatprep.mubr.f32.mxu0 0.0
        %956 = vmatmul.mubr.f32.gmra.mrb[0].mxu0 %v799
        %v957 = vpop.f32.mrb[0].mxu0
        %v958 = vadd.f32 0.0, %v957
        %v959 = vpop.f32.mrb[0].mxu0
        %960 = vdwg.mxu0
        %v961 = vld [vmem:[%s463] sm:$0x1]
        %v962 = vld [vmem:[%s466] sm:$0x1]
        %v963 = vmul.f32 %v883, %v580
        %v964 = vmul.f32 %v888, %v581
        %v965 = vmul.f32 %v893, %v582
        %v966 = vmul.f32 %v898, %v583
        %v967 = vmul.f32 %v903, %v584
        %v968 = vmul.f32 %v908, %v585
        %v969 = vmul.f32 %v913, %v586
        %v970 = vmul.f32 %v918, %v587
        %v971 = vmul.f32 %v923, %v588
        %v972 = vmul.f32 %v928, %v589
        %v973 = vmul.f32 %v933, %v590
        %v974 = vmul.f32 %v938, %v591
        %v975 = vmul.f32 %v943, %v592
        %v976 = vmul.f32 %v948, %v593
        %v977 = vmul.f32 %v953, %v594
        %v978 = vmul.f32 %v958, %v595
        %v979 = vadd.f32 %v963, %v964
        %v980 = vadd.f32 %v979, %v965
        %v981 = vadd.f32 %v980, %v966
        %v982 = vadd.f32 %v981, %v967
        %v983 = vadd.f32 %v982, %v968
        %v984 = vadd.f32 %v983, %v969
        %v985 = vadd.f32 %v984, %v970
        %v986 = vadd.f32 %v985, %v971
        %v987 = vadd.f32 %v986, %v972
        %v988 = vadd.f32 %v987, %v973
        %v989 = vadd.f32 %v988, %v974
        %v990 = vadd.f32 %v989, %v975
        %v991 = vadd.f32 %v990, %v976
        %v992 = vadd.f32 %v991, %v977
        %v993 = vadd.f32 %v992, %v978
        %v994 = vrot.slane %v993, 4
        %v995 = vadd.f32 %v993, %v994
        %v996 = vrot.slane %v995, 2
        %v997 = vadd.f32 %v995, %v996
        %v998 = vrot.slane %v997, 1
        %v999 = vadd.f32 %v997, %v998
        %v1000 = vmul.f32 %v999, 0.0625
        %v1001 = vsub.f32 %v883, %v1000
        %v1002 = vsub.f32 %v888, %v1000
        %v1003 = vsub.f32 %v893, %v1000
        %v1004 = vsub.f32 %v898, %v1000
        %v1005 = vsub.f32 %v903, %v1000
        %v1006 = vsub.f32 %v908, %v1000
        %v1007 = vsub.f32 %v913, %v1000
        %v1008 = vsub.f32 %v918, %v1000
        %v1009 = vsub.f32 %v923, %v1000
        %v1010 = vsub.f32 %v928, %v1000
        %v1011 = vsub.f32 %v933, %v1000
        %v1012 = vsub.f32 %v938, %v1000
        %v1013 = vsub.f32 %v943, %v1000
        %v1014 = vsub.f32 %v948, %v1000
        %v1015 = vsub.f32 %v953, %v1000
        %v1016 = vsub.f32 %v958, %v1000
        %v1017 = vmul.f32 %v1001, %v1001
        %v1018 = vmul.f32 %v1002, %v1002
        %v1019 = vmul.f32 %v1003, %v1003
        %v1020 = vmul.f32 %v1004, %v1004
        %v1021 = vmul.f32 %v1005, %v1005
        %v1022 = vmul.f32 %v1006, %v1006
        %v1023 = vmul.f32 %v1007, %v1007
        %v1024 = vmul.f32 %v1008, %v1008
        %v1025 = vmul.f32 %v1009, %v1009
        %v1026 = vmul.f32 %v1010, %v1010
        %v1027 = vmul.f32 %v1011, %v1011
        %v1028 = vmul.f32 %v1012, %v1012
        %v1029 = vmul.f32 %v1013, %v1013
        %v1030 = vmul.f32 %v1014, %v1014
        %v1031 = vmul.f32 %v1015, %v1015
        %v1032 = vmul.f32 %v1016, %v1016
        %v1033 = vmul.f32 %v1017, %v580
        %v1034 = vmul.f32 %v1018, %v581
        %v1035 = vmul.f32 %v1019, %v582
        %v1036 = vmul.f32 %v1020, %v583
        %v1037 = vmul.f32 %v1021, %v584
        %v1038 = vmul.f32 %v1022, %v585
        %v1039 = vmul.f32 %v1023, %v586
        %v1040 = vmul.f32 %v1024, %v587
        %v1041 = vmul.f32 %v1025, %v588
        %v1042 = vmul.f32 %v1026, %v589
        %v1043 = vmul.f32 %v1027, %v590
        %v1044 = vmul.f32 %v1028, %v591
        %v1045 = vmul.f32 %v1029, %v592
        %v1046 = vmul.f32 %v1030, %v593
        %v1047 = vmul.f32 %v1031, %v594
        %v1048 = vmul.f32 %v1032, %v595
        %v1049 = vadd.f32 %v1033, %v1034
        %v1050 = vadd.f32 %v1049, %v1035
        %v1051 = vadd.f32 %v1050, %v1036
        %v1052 = vadd.f32 %v1051, %v1037
        %v1053 = vadd.f32 %v1052, %v1038
        %v1054 = vadd.f32 %v1053, %v1039
        %v1055 = vadd.f32 %v1054, %v1040
        %v1056 = vadd.f32 %v1055, %v1041
        %v1057 = vadd.f32 %v1056, %v1042
        %v1058 = vadd.f32 %v1057, %v1043
        %v1059 = vadd.f32 %v1058, %v1044
        %v1060 = vadd.f32 %v1059, %v1045
        %v1061 = vadd.f32 %v1060, %v1046
        %v1062 = vadd.f32 %v1061, %v1047
        %v1063 = vadd.f32 %v1062, %v1048
        %v1064 = vrot.slane %v1063, 4
        %v1065 = vadd.f32 %v1063, %v1064
        %v1066 = vrot.slane %v1065, 2
        %v1067 = vadd.f32 %v1065, %v1066
        %v1068 = vrot.slane %v1067, 1
        %v1069 = vadd.f32 %v1067, %v1068
        %v1070 = vmul.f32 %v1069, 0.0625
        %v1071 = vadd.f32 %v1070, 1e-05
        %v1072 = vrsqrt.pop %v1071
        %v1073 = vmul.f32 %v961, %v1072
        %v1075 = vlaneseq
        %v1076 = vshrl.u32 %v1075, 7
        %v1077 = vsub.s32 0, %v1076
        %v1078 = vrot.slane %v1073, %v1077
        %v1080 = vmul.f32 %v1001, %v1078
        %v1081 = vmul.f32 %v1002, %v1078
        %v1082 = vmul.f32 %v1003, %v1078
        %v1083 = vmul.f32 %v1004, %v1078
        %v1084 = vmul.f32 %v1005, %v1078
        %v1085 = vmul.f32 %v1006, %v1078
        %v1086 = vmul.f32 %v1007, %v1078
        %v1087 = vmul.f32 %v1008, %v1078
        %v1088 = vmul.f32 %v1009, %v1078
        %v1089 = vmul.f32 %v1010, %v1078
        %v1090 = vmul.f32 %v1011, %v1078
        %v1091 = vmul.f32 %v1012, %v1078
        %v1092 = vmul.f32 %v1013, %v1078
        %v1093 = vmul.f32 %v1014, %v1078
        %v1094 = vmul.f32 %v1015, %v1078
        %v1095 = vmul.f32 %v1016, %v1078
        %v1097 = vlaneseq
        %v1098 = vshrl.u32 %v1097, 7
        %v1099 = vsub.s32 0, %v1098
        %v1100 = vrot.slane %v962, %v1099
        %v1102 = vadd.f32 %v1080, %v1100
        %v1103 = vadd.f32 %v1081, %v1100
        %v1104 = vadd.f32 %v1082, %v1100
        %v1105 = vadd.f32 %v1083, %v1100
        %v1106 = vadd.f32 %v1084, %v1100
        %v1107 = vadd.f32 %v1085, %v1100
        %v1108 = vadd.f32 %v1086, %v1100
        %v1109 = vadd.f32 %v1087, %v1100
        %v1110 = vadd.f32 %v1088, %v1100
        %v1111 = vadd.f32 %v1089, %v1100
        %v1112 = vadd.f32 %v1090, %v1100
        %v1113 = vadd.f32 %v1091, %v1100
        %v1114 = vadd.f32 %v1092, %v1100
        %v1115 = vadd.f32 %v1093, %v1100
        %v1116 = vadd.f32 %v1094, %v1100
        %v1117 = vadd.f32 %v1095, %v1100
        %v1118 = vmax.f32 %v1102, 0.0
        %v1119 = vmax.f32 %v1103, 0.0
        %v1120 = vmax.f32 %v1104, 0.0
        %v1121 = vmax.f32 %v1105, 0.0
        %v1122 = vmax.f32 %v1106, 0.0
        %v1123 = vmax.f32 %v1107, 0.0
        %v1124 = vmax.f32 %v1108, 0.0
        %v1125 = vmax.f32 %v1109, 0.0
        %v1126 = vmax.f32 %v1110, 0.0
        %v1127 = vmax.f32 %v1111, 0.0
        %v1128 = vmax.f32 %v1112, 0.0
        %v1129 = vmax.f32 %v1113, 0.0
        %v1130 = vmax.f32 %v1114, 0.0
        %v1131 = vmax.f32 %v1115, 0.0
        %v1132 = vmax.f32 %v1116, 0.0
        %v1133 = vmax.f32 %v1117, 0.0
        %v1134 = vld [vmem:[%s471] sm:$0xff]
        %v1135 = vld [vmem:[%s471 + $0x8] sm:$0xff]
        %v1136 = vld [vmem:[%s471 + $0x10] sm:$0xff]
        %v1137 = vld [vmem:[%s471 + $0x18] sm:$0xff]
        %v1138 = vld [vmem:[%s471 + $0x20] sm:$0xff]
        %v1139 = vld [vmem:[%s471 + $0x28] sm:$0xff]
        %v1140 = vld [vmem:[%s471 + $0x30] sm:$0xff]
        %v1141 = vld [vmem:[%s471 + $0x38] sm:$0xff]
        %v1142 = vld [vmem:[%s471 + $0x40] sm:$0xff]
        %v1143 = vld [vmem:[%s471 + $0x48] sm:$0xff]
        %v1144 = vld [vmem:[%s471 + $0x50] sm:$0xff]
        %v1145 = vld [vmem:[%s471 + $0x58] sm:$0xff]
        %v1146 = vld [vmem:[%s471 + $0x60] sm:$0xff]
        %v1147 = vld [vmem:[%s471 + $0x68] sm:$0xff]
        %v1148 = vld [vmem:[%s471 + $0x70] sm:$0xff]
        %v1149 = vld [vmem:[%s471 + $0x78] sm:$0xff]
        %1150 = vmatprep.subr.mxu0 0.0
        %1151 = vmatpush1.msra.mxu0 %v1134
        %1152 = vmatprep.subr.mxu0 0.0
        %1153 = vmatpush1.msra.mxu0 %v1135
        %1154 = vmatprep.subr.mxu0 0.0
        %1155 = vmatpush1.msra.mxu0 %v1136
        %1156 = vmatprep.subr.mxu0 0.0
        %1157 = vmatpush1.msra.mxu0 %v1137
        %1158 = vmatprep.subr.mxu0 0.0
        %1159 = vmatpush1.msra.mxu0 %v1138
        %1160 = vmatprep.subr.mxu0 0.0
        %1161 = vmatpush1.msra.mxu0 %v1139
        %1162 = vmatprep.subr.mxu0 0.0
        %1163 = vmatpush1.msra.mxu0 %v1140
        %1164 = vmatprep.subr.mxu0 0.0
        %1165 = vmatpush1.msra.mxu0 %v1141
        %1166 = vmatprep.subr.mxu0 0.0
        %1167 = vmatpush1.msra.mxu0 %v1142
        %1168 = vmatprep.subr.mxu0 0.0
        %1169 = vmatpush1.msra.mxu0 %v1143
        %1170 = vmatprep.subr.mxu0 0.0
        %1171 = vmatpush1.msra.mxu0 %v1144
        %1172 = vmatprep.subr.mxu0 0.0
        %1173 = vmatpush1.msra.mxu0 %v1145
        %1174 = vmatprep.subr.mxu0 0.0
        %1175 = vmatpush1.msra.mxu0 %v1146
        %1176 = vmatprep.subr.mxu0 0.0
        %1177 = vmatpush1.msra.mxu0 %v1147
        %1178 = vmatprep.subr.mxu0 0.0
        %1179 = vmatpush1.msra.mxu0 %v1148
        %1180 = vmatprep.subr.mxu0 0.0
        %1181 = vmatpush1.msra.mxu0 %v1149
        %1182 = vmatprep.subr.mxu0 0.0
        %1183 = vmatpush1.msra.mxu0 0.0
        %1184 = vmatprep.subr.mxu0 0.0
        %1185 = vmatpush1.msra.mxu0 0.0
        %1186 = vmatprep.subr.mxu0 0.0
        %1187 = vmatpush1.msra.mxu0 0.0
        %1188 = vmatprep.subr.mxu0 0.0
        %1189 = vmatpush1.msra.mxu0 0.0
        %1190 = vmatprep.subr.mxu0 0.0
        %1191 = vmatpush1.msra.mxu0 0.0
        %1192 = vmatprep.subr.mxu0 0.0
        %1193 = vmatpush1.msra.mxu0 0.0
        %1194 = vmatprep.subr.mxu0 0.0
        %1195 = vmatpush1.msra.mxu0 0.0
        %1196 = vmatprep.subr.mxu0 0.0
        %1197 = vmatpush1.msra.mxu0 0.0
        %1198 = vmatprep.subr.mxu0 0.0
        %1199 = vmatpush1.msra.mxu0 0.0
        %1200 = vmatprep.subr.mxu0 0.0
        %1201 = vmatpush1.msra.mxu0 0.0
        %1202 = vmatprep.subr.mxu0 0.0
        %1203 = vmatpush1.msra.mxu0 0.0
        %1204 = vmatprep.subr.mxu0 0.0
        %1205 = vmatpush1.msra.mxu0 0.0
        %1206 = vmatprep.subr.mxu0 0.0
        %1207 = vmatpush1.msra.mxu0 0.0
        %1208 = vmatprep.subr.mxu0 0.0
        %1209 = vmatpush1.msra.mxu0 0.0
        %1210 = vmatprep.subr.mxu0 0.0
        %1211 = vmatpush1.msra.mxu0 0.0
        %1212 = vmatprep.subr.mxu0 0.0
        %1213 = vmatpush1.msra.mxu0 0.0
        %1214 = vmatprep.mubr.f32.mxu0 0.0
        %1215 = vmatmul.mubr.f32.gmra.mrb[0].mxu0 %v1118
        %v1216 = vpop.f32.mrb[0].mxu0
        %v1217 = vadd.f32 0.0, %v1216
        %v1218 = vpop.f32.mrb[0].mxu0
        %1219 = vmatprep.mubr.f32.mxu0 0.0
        %1220 = vmatmul.mubr.f32.gmra.mrb[0].mxu0 %v1119
        %v1221 = vpop.f32.mrb[0].mxu0
        %v1222 = vadd.f32 0.0, %v1221
        %v1223 = vpop.f32.mrb[0].mxu0
        %1224 = vmatprep.mubr.f32.mxu0 0.0
        %1225 = vmatmul.mubr.f32.gmra.mrb[0].mxu0 %v1120
        %v1226 = vpop.f32.mrb[0].mxu0
        %v1227 = vadd.f32 0.0, %v1226
        %v1228 = vpop.f32.mrb[0].mxu0
        %1229 = vmatprep.mubr.f32.mxu0 0.0
        %1230 = vmatmul.mubr.f32.gmra.mrb[0].mxu0 %v1121
        %v1231 = vpop.f32.mrb[0].mxu0
        %v1232 = vadd.f32 0.0, %v1231
        %v1233 = vpop.f32.mrb[0].mxu0
        %1234 = vmatprep.mubr.f32.mxu0 0.0
        %1235 = vmatmul.mubr.f32.gmra.mrb[0].mxu0 %v1122
        %v1236 = vpop.f32.mrb[0].mxu0
        %v1237 = vadd.f32 0.0, %v1236
        %v1238 = vpop.f32.mrb[0].mxu0
        %1239 = vmatprep.mubr.f32.mxu0 0.0
        %1240 = vmatmul.mubr.f32.gmra.mrb[0].mxu0 %v1123
        %v1241 = vpop.f32.mrb[0].mxu0
        %v1242 = vadd.f32 0.0, %v1241
        %v1243 = vpop.f32.mrb[0].mxu0
        %1244 = vmatprep.mubr.f32.mxu0 0.0
        %1245 = vmatmul.mubr.f32.gmra.mrb[0].mxu0 %v1124
        %v1246 = vpop.f32.mrb[0].mxu0
        %v1247 = vadd.f32 0.0, %v1246
        %v1248 = vpop.f32.mrb[0].mxu0
        %1249 = vmatprep.mubr.f32.mxu0 0.0
        %1250 = vmatmul.mubr.f32.gmra.mrb[0].mxu0 %v1125
        %v1251 = vpop.f32.mrb[0].mxu0
        %v1252 = vadd.f32 0.0, %v1251
        %v1253 = vpop.f32.mrb[0].mxu0
        %1254 = vmatprep.mubr.f32.mxu0 0.0
        %1255 = vmatmul.mubr.f32.gmra.mrb[0].mxu0 %v1126
        %v1256 = vpop.f32.mrb[0].mxu0
        %v1257 = vadd.f32 0.0, %v1256
        %v1258 = vpop.f32.mrb[0].mxu0
        %1259 = vmatprep.mubr.f32.mxu0 0.0
        %1260 = vmatmul.mubr.f32.gmra.mrb[0].mxu0 %v1127
        %v1261 = vpop.f32.mrb[0].mxu0
        %v1262 = vadd.f32 0.0, %v1261
        %v1263 = vpop.f32.mrb[0].mxu0
        %1264 = vmatprep.mubr.f32.mxu0 0.0
        %1265 = vmatmul.mubr.f32.gmra.mrb[0].mxu0 %v1128
        %v1266 = vpop.f32.mrb[0].mxu0
        %v1267 = vadd.f32 0.0, %v1266
        %v1268 = vpop.f32.mrb[0].mxu0
        %1269 = vmatprep.mubr.f32.mxu0 0.0
        %1270 = vmatmul.mubr.f32.gmra.mrb[0].mxu0 %v1129
        %v1271 = vpop.f32.mrb[0].mxu0
        %v1272 = vadd.f32 0.0, %v1271
        %v1273 = vpop.f32.mrb[0].mxu0
        %1274 = vmatprep.mubr.f32.mxu0 0.0
        %1275 = vmatmul.mubr.f32.gmra.mrb[0].mxu0 %v1130
        %v1276 = vpop.f32.mrb[0].mxu0
        %v1277 = vadd.f32 0.0, %v1276
        %v1278 = vpop.f32.mrb[0].mxu0
        %1279 = vmatprep.mubr.f32.mxu0 0.0
        %1280 = vmatmul.mubr.f32.gmra.mrb[0].mxu0 %v1131
        %v1281 = vpop.f32.mrb[0].mxu0
        %v1282 = vadd.f32 0.0, %v1281
        %v1283 = vpop.f32.mrb[0].mxu0
        %1284 = vmatprep.mubr.f32.mxu0 0.0
        %1285 = vmatmul.mubr.f32.gmra.mrb[0].mxu0 %v1132
        %v1286 = vpop.f32.mrb[0].mxu0
        %v1287 = vadd.f32 0.0, %v1286
        %v1288 = vpop.f32.mrb[0].mxu0
        %1289 = vmatprep.mubr.f32.mxu0 0.0
        %1290 = vmatmul.mubr.f32.gmra.mrb[0].mxu0 %v1133
        %v1291 = vpop.f32.mrb[0].mxu0
        %v1292 = vadd.f32 0.0, %v1291
        %v1293 = vpop.f32.mrb[0].mxu0
        %1294 = vdwg.mxu0
        %v1295 = vld [vmem:[%s474] sm:$0x1]
        %v1296 = vld [vmem:[%s477] sm:$0x1]
        %v1297 = vmul.f32 %v1217, %v580
        %v1298 = vmul.f32 %v1222, %v581
        %v1299 = vmul.f32 %v1227, %v582
        %v1300 = vmul.f32 %v1232, %v583
        %v1301 = vmul.f32 %v1237, %v584
        %v1302 = vmul.f32 %v1242, %v585
        %v1303 = vmul.f32 %v1247, %v586
        %v1304 = vmul.f32 %v1252, %v587
        %v1305 = vmul.f32 %v1257, %v588
        %v1306 = vmul.f32 %v1262, %v589
        %v1307 = vmul.f32 %v1267, %v590
        %v1308 = vmul.f32 %v1272, %v591
        %v1309 = vmul.f32 %v1277, %v592
        %v1310 = vmul.f32 %v1282, %v593
        %v1311 = vmul.f32 %v1287, %v594
        %v1312 = vmul.f32 %v1292, %v595
        %v1313 = vadd.f32 %v1297, %v1298
        %v1314 = vadd.f32 %v1313, %v1299
        %v1315 = vadd.f32 %v1314, %v1300
        %v1316 = vadd.f32 %v1315, %v1301
        %v1317 = vadd.f32 %v1316, %v1302
        %v1318 = vadd.f32 %v1317, %v1303
        %v1319 = vadd.f32 %v1318, %v1304
        %v1320 = vadd.f32 %v1319, %v1305
        %v1321 = vadd.f32 %v1320, %v1306
        %v1322 = vadd.f32 %v1321, %v1307
        %v1323 = vadd.f32 %v1322, %v1308
        %v1324 = vadd.f32 %v1323, %v1309
        %v1325 = vadd.f32 %v1324, %v1310
        %v1326 = vadd.f32 %v1325, %v1311
        %v1327 = vadd.f32 %v1326, %v1312
        %v1328 = vrot.slane %v1327, 4
        %v1329 = vadd.f32 %v1327, %v1328
        %v1330 = vrot.slane %v1329, 2
        %v1331 = vadd.f32 %v1329, %v1330
        %v1332 = vrot.slane %v1331, 1
        %v1333 = vadd.f32 %v1331, %v1332
        %v1334 = vmul.f32 %v1333, 0.0625
        %v1335 = vsub.f32 %v1217, %v1334
        %v1336 = vsub.f32 %v1222, %v1334
        %v1337 = vsub.f32 %v1227, %v1334
        %v1338 = vsub.f32 %v1232, %v1334
        %v1339 = vsub.f32 %v1237, %v1334
        %v1340 = vsub.f32 %v1242, %v1334
        %v1341 = vsub.f32 %v1247, %v1334
        %v1342 = vsub.f32 %v1252, %v1334
        %v1343 = vsub.f32 %v1257, %v1334
        %v1344 = vsub.f32 %v1262, %v1334
        %v1345 = vsub.f32 %v1267, %v1334
        %v1346 = vsub.f32 %v1272, %v1334
        %v1347 = vsub.f32 %v1277, %v1334
        %v1348 = vsub.f32 %v1282, %v1334
        %v1349 = vsub.f32 %v1287, %v1334
        %v1350 = vsub.f32 %v1292, %v1334
        %v1351 = vmul.f32 %v1335, %v1335
        %v1352 = vmul.f32 %v1336, %v1336
        %v1353 = vmul.f32 %v1337, %v1337
        %v1354 = vmul.f32 %v1338, %v1338
        %v1355 = vmul.f32 %v1339, %v1339
        %v1356 = vmul.f32 %v1340, %v1340
        %v1357 = vmul.f32 %v1341, %v1341
        %v1358 = vmul.f32 %v1342, %v1342
        %v1359 = vmul.f32 %v1343, %v1343
        %v1360 = vmul.f32 %v1344, %v1344
        %v1361 = vmul.f32 %v1345, %v1345
        %v1362 = vmul.f32 %v1346, %v1346
        %v1363 = vmul.f32 %v1347, %v1347
        %v1364 = vmul.f32 %v1348, %v1348
        %v1365 = vmul.f32 %v1349, %v1349
        %v1366 = vmul.f32 %v1350, %v1350
        %v1367 = vmul.f32 %v1351, %v580
        %v1368 = vmul.f32 %v1352, %v581
        %v1369 = vmul.f32 %v1353, %v582
        %v1370 = vmul.f32 %v1354, %v583
        %v1371 = vmul.f32 %v1355, %v584
        %v1372 = vmul.f32 %v1356, %v585
        %v1373 = vmul.f32 %v1357, %v586
        %v1374 = vmul.f32 %v1358, %v587
        %v1375 = vmul.f32 %v1359, %v588
        %v1376 = vmul.f32 %v1360, %v589
        %v1377 = vmul.f32 %v1361, %v590
        %v1378 = vmul.f32 %v1362, %v591
        %v1379 = vmul.f32 %v1363, %v592
        %v1380 = vmul.f32 %v1364, %v593
        %v1381 = vmul.f32 %v1365, %v594
        %v1382 = vmul.f32 %v1366, %v595
        %v1383 = vadd.f32 %v1367, %v1368
        %v1384 = vadd.f32 %v1383, %v1369
        %v1385 = vadd.f32 %v1384, %v1370
        %v1386 = vadd.f32 %v1385, %v1371
        %v1387 = vadd.f32 %v1386, %v1372
        %v1388 = vadd.f32 %v1387, %v1373
        %v1389 = vadd.f32 %v1388, %v1374
        %v1390 = vadd.f32 %v1389, %v1375
        %v1391 = vadd.f32 %v1390, %v1376
        %v1392 = vadd.f32 %v1391, %v1377
        %v1393 = vadd.f32 %v1392, %v1378
        %v1394 = vadd.f32 %v1393, %v1379
        %v1395 = vadd.f32 %v1394, %v1380
        %v1396 = vadd.f32 %v1395, %v1381
        %v1397 = vadd.f32 %v1396, %v1382
        %v1398 = vrot.slane %v1397, 4
        %v1399 = vadd.f32 %v1397, %v1398
        %v1400 = vrot.slane %v1399, 2
        %v1401 = vadd.f32 %v1399, %v1400
        %v1402 = vrot.slane %v1401, 1
        %v1403 = vadd.f32 %v1401, %v1402
        %v1404 = vmul.f32 %v1403, 0.0625
        %v1405 = vadd.f32 %v1404, 1e-05
        %v1406 = vrsqrt.pop %v1405
        %v1407 = vmul.f32 %v1295, %v1406
        %v1409 = vlaneseq
        %v1410 = vshrl.u32 %v1409, 7
        %v1411 = vsub.s32 0, %v1410
        %v1412 = vrot.slane %v1407, %v1411
        %v1414 = vmul.f32 %v1335, %v1412
        %v1415 = vmul.f32 %v1336, %v1412
        %v1416 = vmul.f32 %v1337, %v1412
        %v1417 = vmul.f32 %v1338, %v1412
        %v1418 = vmul.f32 %v1339, %v1412
        %v1419 = vmul.f32 %v1340, %v1412
        %v1420 = vmul.f32 %v1341, %v1412
        %v1421 = vmul.f32 %v1342, %v1412
        %v1422 = vmul.f32 %v1343, %v1412
        %v1423 = vmul.f32 %v1344, %v1412
        %v1424 = vmul.f32 %v1345, %v1412
        %v1425 = vmul.f32 %v1346, %v1412
        %v1426 = vmul.f32 %v1347, %v1412
        %v1427 = vmul.f32 %v1348, %v1412
        %v1428 = vmul.f32 %v1349, %v1412
        %v1429 = vmul.f32 %v1350, %v1412
        %v1431 = vlaneseq
        %v1432 = vshrl.u32 %v1431, 7
        %v1433 = vsub.s32 0, %v1432
        %v1434 = vrot.slane %v1296, %v1433
        %v1436 = vadd.f32 %v1414, %v1434
        %v1437 = vadd.f32 %v1415, %v1434
        %v1438 = vadd.f32 %v1416, %v1434
        %v1439 = vadd.f32 %v1417, %v1434
        %v1440 = vadd.f32 %v1418, %v1434
        %v1441 = vadd.f32 %v1419, %v1434
        %v1442 = vadd.f32 %v1420, %v1434
        %v1443 = vadd.f32 %v1421, %v1434
        %v1444 = vadd.f32 %v1422, %v1434
        %v1445 = vadd.f32 %v1423, %v1434
        %v1446 = vadd.f32 %v1424, %v1434
        %v1447 = vadd.f32 %v1425, %v1434
        %v1448 = vadd.f32 %v1426, %v1434
        %v1449 = vadd.f32 %v1427, %v1434
        %v1450 = vadd.f32 %v1428, %v1434
        %v1451 = vadd.f32 %v1429, %v1434
        %v1452 = vmax.f32 %v1436, 0.0
        %v1453 = vmax.f32 %v1437, 0.0
        %v1454 = vmax.f32 %v1438, 0.0
        %v1455 = vmax.f32 %v1439, 0.0
        %v1456 = vmax.f32 %v1440, 0.0
        %v1457 = vmax.f32 %v1441, 0.0
        %v1458 = vmax.f32 %v1442, 0.0
        %v1459 = vmax.f32 %v1443, 0.0
        %v1460 = vmax.f32 %v1444, 0.0
        %v1461 = vmax.f32 %v1445, 0.0
        %v1462 = vmax.f32 %v1446, 0.0
        %v1463 = vmax.f32 %v1447, 0.0
        %v1464 = vmax.f32 %v1448, 0.0
        %v1465 = vmax.f32 %v1449, 0.0
        %v1466 = vmax.f32 %v1450, 0.0
        %v1467 = vmax.f32 %v1451, 0.0
        %1468 = vst [vmem:[#allocation2] sm:$0xff] %v1452
        %1469 = vst [vmem:[#allocation2 + $0x8] sm:$0xff] %v1453
        %1470 = vst [vmem:[#allocation2 + $0x10] sm:$0xff] %v1454
        %1471 = vst [vmem:[#allocation2 + $0x18] sm:$0xff] %v1455
        %1472 = vst [vmem:[#allocation2 + $0x20] sm:$0xff] %v1456
        %1473 = vst [vmem:[#allocation2 + $0x28] sm:$0xff] %v1457
        %1474 = vst [vmem:[#allocation2 + $0x30] sm:$0xff] %v1458
        %1475 = vst [vmem:[#allocation2 + $0x38] sm:$0xff] %v1459
        %1476 = vst [vmem:[#allocation2 + $0x40] sm:$0xff] %v1460
        %1477 = vst [vmem:[#allocation2 + $0x48] sm:$0xff] %v1461
        %1478 = vst [vmem:[#allocation2 + $0x50] sm:$0xff] %v1462
        %1479 = vst [vmem:[#allocation2 + $0x58] sm:$0xff] %v1463
        %1480 = vst [vmem:[#allocation2 + $0x60] sm:$0xff] %v1464
        %1481 = vst [vmem:[#allocation2 + $0x68] sm:$0xff] %v1465
        %1482 = vst [vmem:[#allocation2 + $0x70] sm:$0xff] %v1466
        %1483 = vst [vmem:[#allocation2 + $0x78] sm:$0xff] %v1467
        %1484 = vst [vmem:[%s449] sm:$0xff] %v1452
        %1485 = vst [vmem:[%s449 + $0x8] sm:$0xff] %v1453
        %1486 = vst [vmem:[%s449 + $0x10] sm:$0xff] %v1454
        %1487 = vst [vmem:[%s449 + $0x18] sm:$0xff] %v1455
        %1488 = vst [vmem:[%s449 + $0x20] sm:$0xff] %v1456
        %1489 = vst [vmem:[%s449 + $0x28] sm:$0xff] %v1457
        %1490 = vst [vmem:[%s449 + $0x30] sm:$0xff] %v1458
        %1491 = vst [vmem:[%s449 + $0x38] sm:$0xff] %v1459
        %1492 = vst [vmem:[%s449 + $0x40] sm:$0xff] %v1460
        %1493 = vst [vmem:[%s449 + $0x48] sm:$0xff] %v1461
        %1494 = vst [vmem:[%s449 + $0x50] sm:$0xff] %v1462
        %1495 = vst [vmem:[%s449 + $0x58] sm:$0xff] %v1463
        %1496 = vst [vmem:[%s449 + $0x60] sm:$0xff] %v1464
        %1497 = vst [vmem:[%s449 + $0x68] sm:$0xff] %v1465
        %1498 = vst [vmem:[%s449 + $0x70] sm:$0xff] %v1466
        %1499 = vst [vmem:[%s449 + $0x78] sm:$0xff] %v1467
        %v1500 = vld [vmem:[%s9] sm:$0xf]
        %v1501 = vld [vmem:[%s9 + $0x4] sm:$0xf]
        %v1502 = vpack.c.bf16 %v1453, %v1452
        %v1503 = vpack.c.bf16 %v1455, %v1454
        %v1504 = vpack.c.bf16 %v1457, %v1456
        %v1505 = vpack.c.bf16 %v1459, %v1458
        %v1506 = vpack.c.bf16 %v1461, %v1460
        %v1507 = vpack.c.bf16 %v1463, %v1462
        %v1508 = vpack.c.bf16 %v1465, %v1464
        %v1509 = vpack.c.bf16 %v1467, %v1466
        %v1512 = vunpack.c.l.b16 %v1500
        %v1513 = vunpack.c.l.b16 %v1501
        %v1514 = vpack.c.b16 %v1513, %v1512
        %1516 = vmatprep.subr.bf16.mxu0 0
        %1517 = vmatpush1.bf16.msra.mxu0 %v1502
        %1518 = vmatprep.subr.bf16.mxu0 0
        %1519 = vmatpush1.bf16.msra.mxu0 %v1503
        %1520 = vmatprep.subr.bf16.mxu0 0
        %1521 = vmatpush1.bf16.msra.mxu0 %v1504
        %1522 = vmatprep.subr.bf16.mxu0 0
        %1523 = vmatpush1.bf16.msra.mxu0 %v1505
        %1524 = vmatprep.subr.bf16.mxu0 0
        %1525 = vmatpush1.bf16.msra.mxu0 %v1506
        %1526 = vmatprep.subr.bf16.mxu0 0
        %1527 = vmatpush1.bf16.msra.mxu0 %v1507
        %1528 = vmatprep.subr.bf16.mxu0 0
        %1529 = vmatpush1.bf16.msra.mxu0 %v1508
        %1530 = vmatprep.subr.bf16.mxu0 0
        %1531 = vmatpush1.bf16.msra.mxu0 %v1509
        %1532 = vmatprep.subr.bf16.mxu0 0
        %1533 = vmatpush1.bf16.msra.mxu0 0
        %1534 = vmatprep.subr.bf16.mxu0 0
        %1535 = vmatpush1.bf16.msra.mxu0 0
        %1536 = vmatprep.subr.bf16.mxu0 0
        %1537 = vmatpush1.bf16.msra.mxu0 0
        %1538 = vmatprep.subr.bf16.mxu0 0
        %1539 = vmatpush1.bf16.msra.mxu0 0
        %1540 = vmatprep.subr.bf16.mxu0 0
        %1541 = vmatpush1.bf16.msra.mxu0 0
        %1542 = vmatprep.subr.bf16.mxu0 0
        %1543 = vmatpush1.bf16.msra.mxu0 0
        %1544 = vmatprep.subr.bf16.mxu0 0
        %1545 = vmatpush1.bf16.msra.mxu0 0
        %1546 = vmatprep.subr.bf16.mxu0 0
        %1547 = vmatpush1.bf16.msra.mxu0 0
        %1548 = vmatprep.mubr.bf16.mxu0 0
        %1549 = vmatmul.mubr.bf16.gmra.mrb[0].mxu0 %v1514
        %v1550 = vpop.f32.mrb[0].mxu0
        %v1551 = vadd.f32 0.0, %v1550
        %v1552 = vpop.f32.mrb[0].mxu0
        %v1553 = vpop.f32.mrb[0].mxu0
        %v1554 = vadd.f32 0.0, %v1553
        %v1555 = vpop.f32.mrb[0].mxu0
        %1556 = vdwg.mxu0
        %1557 = vst [vmem:[%s455] sm:$0xff] %v1551
        %1558 = vst [vmem:[%s455 + $0x8] sm:$0xff] %v1554
        %s1559 = sand.u32 %s272, 1
        %s1560 = sand.u32 %s272, 1
        %s1561 = smul.addr %s1560, 128
        %s1562 = scalar_lea.vmem [#allocation5], %s1561
        %s1563 = sand.u32 %s298, 1
        %s1564 = sand.u32 %s298, 1
        %s1565 = smul.addr %s1564, 16
        %s1566 = scalar_lea.vmem [#allocation6], %s1565
        // Predicated region
        $region69: #{encoder_forward.1} parent=59 // pred_check
          %p1567 = pneg %p282
        $region70: #{encoder_forward.1} parent=59 // pred_check_branch
          %1569 = sbr.rel (%p1567) target = $region72
        $region71: #{encoder_forward.1} parent=59 // pred_region
          %s1570 = smul.addr %s24, 8
          %s1571 = scalar_lea.vmem %s10, %s1570
          // Predicated region
          $region73: #{encoder_forward.1} parent=71 // pred_check
            _
          $region74: #{encoder_forward.1} parent=71 // pred_check_branch
            %1573 = sbr.rel (0) target = $region76
          $region75: #{encoder_forward.1} parent=71 // pred_region
            // Predicated region
            $region77: #{encoder_forward.1} parent=75 // pred_check
              _
            $region78: #{encoder_forward.1} parent=75 // pred_check_branch
              %1575 = sbr.rel (0) target = $region80
            $region79: #{encoder_forward.1} parent=75 // pred_region
              // Predicated region
              $region92: #{encoder_forward.1} parent=79 // pred_check
                _
              $region93: #{encoder_forward.1} parent=79 // pred_check_branch
                %1620 = sbr.rel (0) target = $region95
              $region94: #{encoder_forward.1} parent=79 // pred_region
                loop: start=0, step=1, limit=1
                $region96: #{encoder_forward.1} parent=94 // loop_pre_header
                  _
                $region97: #{encoder_forward.1} parent=94 // loop_header
                  %s1622 = sphi 0, %s1626
                  %p1623 = scmp.ge.s32.totalorder %s1622, 1
                  %s1627 = sphi %s1562, %s1562
                  %s1628 = sphi %s1571, %s1571
                $region98: #{encoder_forward.1} parent=94 // loop_header_branch
                  %1625 = sbr.rel (%p1623) target = $region102
                $region99: #{encoder_forward.1} parent=94 // loop_body
                  %v1629 = vld [vmem:[%s1627] sm:$0xff]
                  %1630 = vst [vmem:[%s1628] sm:$0xff] %v1629
                  %v1631 = vld [vmem:[%s1627 + $0x8] sm:$0xff]
                  %1632 = vst [vmem:[%s1628 + $0x18] sm:$0xff] %v1631
                  %v1633 = vld [vmem:[%s1627 + $0x10] sm:$0xff]
                  %1634 = vst [vmem:[%s1628 + $0x30] sm:$0xff] %v1633
                  %v1635 = vld [vmem:[%s1627 + $0x18] sm:$0xff]
                  %1636 = vst [vmem:[%s1628 + $0x48] sm:$0xff] %v1635
                  %v1637 = vld [vmem:[%s1627 + $0x20] sm:$0xff]
                  %1638 = vst [vmem:[%s1628 + $0x60] sm:$0xff] %v1637
                  %v1639 = vld [vmem:[%s1627 + $0x28] sm:$0xff]
                  %1640 = vst [vmem:[%s1628 + $0x78] sm:$0xff] %v1639
                  %v1641 = vld [vmem:[%s1627 + $0x30] sm:$0xff]
                  %1642 = vst [vmem:[%s1628 + $0x90] sm:$0xff] %v1641
                  %v1643 = vld [vmem:[%s1627 + $0x38] sm:$0xff]
                  %1644 = vst [vmem:[%s1628 + $0xa8] sm:$0xff] %v1643
                  %v1645 = vld [vmem:[%s1627 + $0x40] sm:$0xff]
                  %1646 = vst [vmem:[%s1628 + $0xc0] sm:$0xff] %v1645
                  %v1647 = vld [vmem:[%s1627 + $0x48] sm:$0xff]
                  %1648 = vst [vmem:[%s1628 + $0xd8] sm:$0xff] %v1647
                  %v1649 = vld [vmem:[%s1627 + $0x50] sm:$0xff]
                  %1650 = vst [vmem:[%s1628 + $0xf0] sm:$0xff] %v1649
                  %v1651 = vld [vmem:[%s1627 + $0x58] sm:$0xff]
                  %1652 = vst [vmem:[%s1628 + $0x108] sm:$0xff] %v1651
                  %v1653 = vld [vmem:[%s1627 + $0x60] sm:$0xff]
                  %1654 = vst [vmem:[%s1628 + $0x120] sm:$0xff] %v1653
                  %v1655 = vld [vmem:[%s1627 + $0x68] sm:$0xff]
                  %1656 = vst [vmem:[%s1628 + $0x138] sm:$0xff] %v1655
                  %v1657 = vld [vmem:[%s1627 + $0x70] sm:$0xff]
                  %1658 = vst [vmem:[%s1628 + $0x150] sm:$0xff] %v1657
                  %v1659 = vld [vmem:[%s1627 + $0x78] sm:$0xff]
                  %1660 = vst [vmem:[%s1628 + $0x168] sm:$0xff] %v1659
                $region100: #{encoder_forward.1} parent=94 // loop_footer
                  %s1626 = sadd.s32 1, %s1622
                $region101: #{encoder_forward.1} parent=94 // loop_footer_branch
                  %1621 = sbr.rel target = $region97
                $region102: #{encoder_forward.1} parent=94 // loop_exit
                  _
              $region95: #{encoder_forward.1} parent=79 // pred_fallthru
                _
              // Predicated region
              $region103: #{encoder_forward.1} parent=79 // pred_check
                _
              $region104: #{encoder_forward.1} parent=79 // pred_check_branch
                %1662 = sbr.rel target = $region106
              $region105: #{encoder_forward.1} parent=79 // pred_region
                _
              $region106: #{encoder_forward.1} parent=79 // pred_fallthru
                _
            $region80: #{encoder_forward.1} parent=75 // pred_fallthru
              _
            // Predicated region
            $region81: #{encoder_forward.1} parent=75 // pred_check
              _
            $region82: #{encoder_forward.1} parent=75 // pred_check_branch
              %1577 = sbr.rel target = $region84
            $region83: #{encoder_forward.1} parent=75 // pred_region
              loop: start=0, step=1, limit=1
              $region85: #{encoder_forward.1} parent=83 // loop_pre_header
                _
              $region86: #{encoder_forward.1} parent=83 // loop_header
                %s1580 = sphi 0, %s1584
                %p1581 = scmp.ge.s32.totalorder %s1580, 1
                %s1585 = sphi %s1562, %s1562
                %s1586 = sphi %s1571, %s1571
              $region87: #{encoder_forward.1} parent=83 // loop_header_branch
                %1583 = sbr.rel (%p1581) target = $region91
              $region88: #{encoder_forward.1} parent=83 // loop_body
                %v1587 = vld [vmem:[%s1585] sm:$0xff]
                %1588 = vst [vmem:[%s1586] sm:$0xff] %v1587
                %v1589 = vld [vmem:[%s1585 + $0x8] sm:$0xff]
                %1590 = vst [vmem:[%s1586 + $0x18] sm:$0xff] %v1589
                %v1591 = vld [vmem:[%s1585 + $0x10] sm:$0xff]
                %1592 = vst [vmem:[%s1586 + $0x30] sm:$0xff] %v1591
                %v1593 = vld [vmem:[%s1585 + $0x18] sm:$0xff]
                %1594 = vst [vmem:[%s1586 + $0x48] sm:$0xff] %v1593
                %v1595 = vld [vmem:[%s1585 + $0x20] sm:$0xff]
                %1596 = vst [vmem:[%s1586 + $0x60] sm:$0xff] %v1595
                %v1597 = vld [vmem:[%s1585 + $0x28] sm:$0xff]
                %1598 = vst [vmem:[%s1586 + $0x78] sm:$0xff] %v1597
                %v1599 = vld [vmem:[%s1585 + $0x30] sm:$0xff]
                %1600 = vst [vmem:[%s1586 + $0x90] sm:$0xff] %v1599
                %v1601 = vld [vmem:[%s1585 + $0x38] sm:$0xff]
                %1602 = vst [vmem:[%s1586 + $0xa8] sm:$0xff] %v1601
                %v1603 = vld [vmem:[%s1585 + $0x40] sm:$0xff]
                %1604 = vst [vmem:[%s1586 + $0xc0] sm:$0xff] %v1603
                %v1605 = vld [vmem:[%s1585 + $0x48] sm:$0xff]
                %1606 = vst [vmem:[%s1586 + $0xd8] sm:$0xff] %v1605
                %v1607 = vld [vmem:[%s1585 + $0x50] sm:$0xff]
                %1608 = vst [vmem:[%s1586 + $0xf0] sm:$0xff] %v1607
                %v1609 = vld [vmem:[%s1585 + $0x58] sm:$0xff]
                %1610 = vst [vmem:[%s1586 + $0x108] sm:$0xff] %v1609
                %v1611 = vld [vmem:[%s1585 + $0x60] sm:$0xff]
                %1612 = vst [vmem:[%s1586 + $0x120] sm:$0xff] %v1611
                %v1613 = vld [vmem:[%s1585 + $0x68] sm:$0xff]
                %1614 = vst [vmem:[%s1586 + $0x138] sm:$0xff] %v1613
                %v1615 = vld [vmem:[%s1585 + $0x70] sm:$0xff]
                %1616 = vst [vmem:[%s1586 + $0x150] sm:$0xff] %v1615
                %v1617 = vld [vmem:[%s1585 + $0x78] sm:$0xff]
                %1618 = vst [vmem:[%s1586 + $0x168] sm:$0xff] %v1617
              $region89: #{encoder_forward.1} parent=83 // loop_footer
                %s1584 = sadd.s32 1, %s1580
              $region90: #{encoder_forward.1} parent=83 // loop_footer_branch
                %1579 = sbr.rel target = $region86
              $region91: #{encoder_forward.1} parent=83 // loop_exit
                _
            $region84: #{encoder_forward.1} parent=75 // pred_fallthru
              _
          $region76: #{encoder_forward.1} parent=71 // pred_fallthru
            _
          %1663 = vnop
        $region72: #{encoder_forward.1} parent=59 // pred_fallthru
          _
        // Predicated region
        $region107: #{encoder_forward.1} parent=59 // pred_check
          %p1664 = pneg %p308
        $region108: #{encoder_forward.1} parent=59 // pred_check_branch
          %1666 = sbr.rel (%p1664) target = $region110
        $region109: #{encoder_forward.1} parent=59 // pred_region
          %s1667 = smul.addr %s24, 8
          %s1668 = scalar_lea.vmem %s11, %s1667
          // Predicated region
          $region111: #{encoder_forward.1} parent=109 // pred_check
            _
          $region112: #{encoder_forward.1} parent=109 // pred_check_branch
            %1670 = sbr.rel (0) target = $region114
          $region113: #{encoder_forward.1} parent=109 // pred_region
            // Predicated region
            $region115: #{encoder_forward.1} parent=113 // pred_check
              _
            $region116: #{encoder_forward.1} parent=113 // pred_check_branch
              %1672 = sbr.rel (0) target = $region118
            $region117: #{encoder_forward.1} parent=113 // pred_region
              // Predicated region
              $region130: #{encoder_forward.1} parent=117 // pred_check
                _
              $region131: #{encoder_forward.1} parent=117 // pred_check_branch
                %1689 = sbr.rel (0) target = $region133
              $region132: #{encoder_forward.1} parent=117 // pred_region
                loop: start=0, step=1, limit=1
                $region134: #{encoder_forward.1} parent=132 // loop_pre_header
                  _
                $region135: #{encoder_forward.1} parent=132 // loop_header
                  %s1691 = sphi 0, %s1695
                  %p1692 = scmp.ge.s32.totalorder %s1691, 1
                  %s1696 = sphi %s1566, %s1566
                  %s1697 = sphi %s1668, %s1668
                $region136: #{encoder_forward.1} parent=132 // loop_header_branch
                  %1694 = sbr.rel (%p1692) target = $region140
                $region137: #{encoder_forward.1} parent=132 // loop_body
                  %v1698 = vld [vmem:[%s1696] sm:$0xff]
                  %1699 = vst [vmem:[%s1697] sm:$0xff] %v1698
                  %v1700 = vld [vmem:[%s1696 + $0x8] sm:$0xff]
                  %1701 = vst [vmem:[%s1697 + $0x18] sm:$0xff] %v1700
                $region138: #{encoder_forward.1} parent=132 // loop_footer
                  %s1695 = sadd.s32 1, %s1691
                $region139: #{encoder_forward.1} parent=132 // loop_footer_branch
                  %1690 = sbr.rel target = $region135
                $region140: #{encoder_forward.1} parent=132 // loop_exit
                  _
              $region133: #{encoder_forward.1} parent=117 // pred_fallthru
                _
              // Predicated region
              $region141: #{encoder_forward.1} parent=117 // pred_check
                _
              $region142: #{encoder_forward.1} parent=117 // pred_check_branch
                %1703 = sbr.rel target = $region144
              $region143: #{encoder_forward.1} parent=117 // pred_region
                _
              $region144: #{encoder_forward.1} parent=117 // pred_fallthru
                _
            $region118: #{encoder_forward.1} parent=113 // pred_fallthru
              _
            // Predicated region
            $region119: #{encoder_forward.1} parent=113 // pred_check
              _
            $region120: #{encoder_forward.1} parent=113 // pred_check_branch
              %1674 = sbr.rel target = $region122
            $region121: #{encoder_forward.1} parent=113 // pred_region
              loop: start=0, step=1, limit=1
              $region123: #{encoder_forward.1} parent=121 // loop_pre_header
                _
              $region124: #{encoder_forward.1} parent=121 // loop_header
                %s1677 = sphi 0, %s1681
                %p1678 = scmp.ge.s32.totalorder %s1677, 1
                %s1682 = sphi %s1566, %s1566
                %s1683 = sphi %s1668, %s1668
              $region125: #{encoder_forward.1} parent=121 // loop_header_branch
                %1680 = sbr.rel (%p1678) target = $region129
              $region126: #{encoder_forward.1} parent=121 // loop_body
                %v1684 = vld [vmem:[%s1682] sm:$0xff]
                %1685 = vst [vmem:[%s1683] sm:$0xff] %v1684
                %v1686 = vld [vmem:[%s1682 + $0x8] sm:$0xff]
                %1687 = vst [vmem:[%s1683 + $0x18] sm:$0xff] %v1686
              $region127: #{encoder_forward.1} parent=121 // loop_footer
                %s1681 = sadd.s32 1, %s1677
              $region128: #{encoder_forward.1} parent=121 // loop_footer_branch
                %1676 = sbr.rel target = $region124
              $region129: #{encoder_forward.1} parent=121 // loop_exit
                _
            $region122: #{encoder_forward.1} parent=113 // pred_fallthru
              _
          $region114: #{encoder_forward.1} parent=109 // pred_fallthru
            _
          %1704 = vnop
        $region110: #{encoder_forward.1} parent=59 // pred_fallthru
          _
      $region60: #{encoder_forward.1} parent=5 // pred_fallthru
        _
      %p1705 = scmp.le.s32.totalorder 2, %s19
      // Predicated region
      $region145: #{encoder_forward.1} parent=5 // pred_check
        %p1706 = pneg %p1705
      $region146: #{encoder_forward.1} parent=5 // pred_check_branch
        %1708 = sbr.rel (%p1706) target = $region148
      $region147: #{encoder_forward.1} parent=5 // pred_region
        %s1709 = ssub.s32 %s19, 2
        // Predicated region
        $region149: #{encoder_forward.1} parent=147 // pred_check
          %p1710 = pneg %p288
        $region150: #{encoder_forward.1} parent=147 // pred_check_branch
          %1712 = sbr.rel (%p1710) target = $region152
        $region151: #{encoder_forward.1} parent=147 // pred_region
          %s1713 = sand.u32 %s273, 1
          %s1714 = sand.u32 %s273, 1
          %s1715 = smul.addr %s1714, 128
          %s1716 = scalar_lea.vmem [#allocation5], %s1715
        $region152: #{encoder_forward.1} parent=147 // pred_fallthru
          _
        // Predicated region
        $region153: #{encoder_forward.1} parent=147 // pred_check
          %p1717 = pneg %p314
        $region154: #{encoder_forward.1} parent=147 // pred_check_branch
          %1719 = sbr.rel (%p1717) target = $region156
        $region155: #{encoder_forward.1} parent=147 // pred_region
          %s1720 = sand.u32 %s299, 1
          %s1721 = sand.u32 %s299, 1
          %s1722 = smul.addr %s1721, 16
          %s1723 = scalar_lea.vmem [#allocation6], %s1722
        $region156: #{encoder_forward.1} parent=147 // pred_fallthru
          _
      $region148: #{encoder_forward.1} parent=5 // pred_fallthru
        _
    $region6: #{encoder_forward.1} parent=1 // loop_footer
      %s23 = sadd.s32 1, %s19
    $region7: #{encoder_forward.1} parent=1 // loop_footer_branch
      %18 = sbr.rel target = $region3
    $region8: #{encoder_forward.1} parent=1 // loop_exit
      _
    %1724 = vsyncpa [#allocation4], 1
    %s1725 = scalar_lea.sflag [#allocation4], 1
    %1726 = vsyncpa %s1725, 1

</llo_original>
